<compile_context>
chip_gen: v7x
topology: tpu7x:2x2x1
jax: 0.10.0
libtpu: 0.0.40
codegen_flags: <defaults>
</compile_context>

<pallas_src>
import jax
import jax.numpy as jnp
from jax.experimental import pallas as pl
from jax.experimental.pallas import tpu as pltpu

_HP = 128   # padded hidden size per gate (one aligned lane group)
_VP = 128   # padded vocab size (lane-dense output)


def _char_decoder_kernel(ids_ref, table_ref, whh_ref, wout_ref, bout_ref,
                         h0_ref, c0_ref,
                         scores_ref, hT_ref, cT_ref,
                         xg_buf, h_all):
    """Fully fused char decoder forward.

    ids_ref:    (L, B)   int32, SMEM      input character ids
    table_ref:  (V, 1, 4*Hp) f32, VMEM    emb[v] @ W_ih^T + b  (gate pre-acts)
    whh_ref:    (Hp, 4*Hp)   bf16, VMEM   W_hh^T, per-gate lane groups, 0-padded
    wout_ref:   (Hp, Vp)     bf16, VMEM   W_out^T, 0-padded
    bout_ref:   (1, Vp)      f32,  VMEM   b_out, 0-padded
    h0/c0_ref:  (B, Hp)      f32,  VMEM   initial state, 0-padded lanes
    scores_ref: (L*B, Vp)    f32          output scores (timestep-major)
    hT/cT_ref:  (B, Hp)      f32          final state
    xg_buf:     (L*B, 4*Hp)  f32 scratch  gathered gate pre-activations
    h_all:      (L*B, Hp)    f32 scratch  all hidden states
    """
    L, B = ids_ref.shape
    Hp = h0_ref.shape[-1]

    # ---- Fused embedding lookup (gather off the serial chain) -------------
    # table rows already contain emb[id] @ W_ih^T + (b_ih + b_hh); padded gate
    # lanes are zero so the lane invariant (h == 0 in lanes H..Hp) is kept.
    for t in range(L):
        for b in range(B):
            cid = ids_ref[t, b]
            xg_buf[pl.ds(t * B + b, 1), :] = table_ref[cid]

    # ---- Recurrence: only h @ W_hh^T sits on the serial chain --------------
    h = h0_ref[...]
    c = c0_ref[...]
    for t in range(L):   # L is a small compile-time constant -> static unroll
        gates = xg_buf[pl.ds(t * B, B), :] + jnp.dot(
            h.astype(jnp.bfloat16), whh_ref[...],
            preferred_element_type=jnp.float32)            # (B, 4*Hp) f32
        # PyTorch gate order [i, f, g, o]; i and f share one EUP dispatch.
        if_act = jax.nn.sigmoid(gates[:, 0:2 * Hp])
        i_g = if_act[:, 0:Hp]
        f_g = if_act[:, Hp:2 * Hp]
        g_g = jnp.tanh(gates[:, 2 * Hp:3 * Hp])
        o_g = jax.nn.sigmoid(gates[:, 3 * Hp:4 * Hp])
        c = f_g * c + i_g * g_g
        h = o_g * jnp.tanh(c)
        h_all[pl.ds(t * B, B), :] = h                      # static, aligned

    hT_ref[...] = h
    cT_ref[...] = c

    # ---- One batched vocab projection + single lane-dense store ------------
    scores_ref[...] = (
        jnp.dot(h_all[...].astype(jnp.bfloat16), wout_ref[...],
                preferred_element_type=jnp.float32)
        + bout_ref[...])


def prepare_params(raw):
    """Convert PyTorch-layout weights into padded, kernel-ready parameters."""
    w_ih = raw["w_ih"]               # (4H, E)
    w_hh = raw["w_hh"]               # (4H, H)
    b_sum = raw["b_ih"] + raw["b_hh"]
    w_out = raw["w_out"]             # (V, H)
    b_out = raw["b_out"]             # (V,)
    emb = raw["embedding"]           # (V, E)

    H = w_hh.shape[1]
    E = w_ih.shape[1]
    V = w_out.shape[0]
    Hp, Vp = _HP, _VP

    wih_p = jnp.zeros((E, 4 * Hp), jnp.float32)
    whh_p = jnp.zeros((Hp, 4 * Hp), jnp.float32)
    b_p = jnp.zeros((4 * Hp,), jnp.float32)
    for g in range(4):               # PyTorch gate order [i, f, g, o]
        wih_p = wih_p.at[:, g * Hp:g * Hp + H].set(w_ih[g * H:(g + 1) * H, :].T)
        whh_p = whh_p.at[:H, g * Hp:g * Hp + H].set(w_hh[g * H:(g + 1) * H, :].T)
        b_p = b_p.at[g * Hp:g * Hp + H].set(b_sum[g * H:(g + 1) * H])

    # Fold embedding + input projection + bias into one table.  For the
    # <pad> character (zero embedding row) the row is exactly b, matching
    # nn.Embedding(padding_idx) -> LSTM semantics.  Padded gate lanes stay 0.
    table = (jnp.dot(emb, wih_p, precision=jax.lax.Precision.HIGHEST)
             + b_p[None, :])                               # (V, 4*Hp) f32
    table = table.reshape(V, 1, 4 * Hp)   # own-tile rows -> cheap dynamic loads

    wout_p = jnp.zeros((Hp, Vp), jnp.float32).at[:H, :V].set(w_out.T)
    bout_p = jnp.zeros((1, Vp), jnp.float32).at[0, :V].set(b_out)

    return {
        "table": table,                       # (V, 1, 4*Hp) f32
        "whh": whh_p.astype(jnp.bfloat16),    # (Hp, 4*Hp)   bf16
        "wout": wout_p.astype(jnp.bfloat16),  # (Hp, Vp)     bf16
        "bout": bout_p,                       # (1, Vp)      f32
        "E": E, "H": H, "V": V,
    }


def char_decoder_forward(input_ids, kp, dec_hidden=None):
    """input_ids: int32 (L, B). Returns (scores (L,B,V), (h (1,B,H), c (1,B,H)))."""
    L, B = input_ids.shape
    H, V = kp["H"], kp["V"]
    Hp = kp["whh"].shape[0]
    Vp = kp["wout"].shape[1]

    h0 = jnp.zeros((B, Hp), jnp.float32)
    c0 = jnp.zeros((B, Hp), jnp.float32)
    if dec_hidden is not None:
        h0 = h0.at[:, :H].set(dec_hidden[0].reshape(B, H))
        c0 = c0.at[:, :H].set(dec_hidden[1].reshape(B, H))

    scores2d, hT, cT = pl.pallas_call(
        _char_decoder_kernel,
        out_shape=(
            jax.ShapeDtypeStruct((L * B, Vp), jnp.float32),
            jax.ShapeDtypeStruct((B, Hp), jnp.float32),
            jax.ShapeDtypeStruct((B, Hp), jnp.float32),
        ),
        in_specs=[
            pl.BlockSpec(memory_space=pltpu.MemorySpace.SMEM),   # input ids
            pl.BlockSpec(memory_space=pltpu.MemorySpace.VMEM),   # fused table
            pl.BlockSpec(memory_space=pltpu.MemorySpace.VMEM),   # W_hh^T
            pl.BlockSpec(memory_space=pltpu.MemorySpace.VMEM),   # W_out^T
            pl.BlockSpec(memory_space=pltpu.MemorySpace.VMEM),   # b_out
            pl.BlockSpec(memory_space=pltpu.MemorySpace.VMEM),   # h0
            pl.BlockSpec(memory_space=pltpu.MemorySpace.VMEM),   # c0
        ],
        out_specs=(
            pl.BlockSpec(memory_space=pltpu.MemorySpace.VMEM),
            pl.BlockSpec(memory_space=pltpu.MemorySpace.VMEM),
            pl.BlockSpec(memory_space=pltpu.MemorySpace.VMEM),
        ),
        scratch_shapes=[
            pltpu.VMEM((L * B, 4 * Hp), jnp.float32),   # gathered gate pre-acts
            pltpu.VMEM((L * B, Hp), jnp.float32),       # all hidden states
        ],
    )(input_ids.astype(jnp.int32), kp["table"], kp["whh"], kp["wout"],
      kp["bout"], h0, c0)

    scores = scores2d.reshape(L, B, Vp)[:, :, :V]
    return scores, (hT[:, :H][None], cT[:, :H][None])


def _reference_forward(input_ids, raw, dec_hidden=None):
    """Pure-JAX f32 reference mirroring PyTorch semantics (unpadded layout)."""
    hp = jax.lax.Precision.HIGHEST
    X = jnp.take(raw["embedding"], input_ids, axis=0)
    L, B, _ = X.shape
    H = raw["w_hh"].shape[1]
    w_ih_t = raw["w_ih"].T
    w_hh_t = raw["w_hh"].T
    b = (raw["b_ih"] + raw["b_hh"])[None, :]
    w_out_t = raw["w_out"].T
    b_out = raw["b_out"][None, :]
    if dec_hidden is None:
        h = jnp.zeros((B, H), jnp.float32)
        c = jnp.zeros((B, H), jnp.float32)
    else:
        h = dec_hidden[0].reshape(B, H)
        c = dec_hidden[1].reshape(B, H)
    outs = []
    for t in range(L):
        gates = (jnp.dot(X[t], w_ih_t, precision=hp)
                 + jnp.dot(h, w_hh_t, precision=hp) + b)
        i = jax.nn.sigmoid(gates[:, 0 * H:1 * H])
        f = jax.nn.sigmoid(gates[:, 1 * H:2 * H])
        g = jnp.tanh(gates[:, 2 * H:3 * H])
        o = jax.nn.sigmoid(gates[:, 3 * H:4 * H])
        c = f * c + i * g
        h = o * jnp.tanh(c)
        outs.append(jnp.dot(h, w_out_t, precision=hp) + b_out)
    return jnp.stack(outs, axis=0), (h[None], c[None])


def _init_raw_params(key, vocab_size, char_emb_size, hidden_size, pad_idx):
    ks = jax.random.split(key, 6)
    scale = 0.1
    emb = scale * jax.random.normal(ks[0], (vocab_size, char_emb_size), jnp.float32)
    emb = emb.at[pad_idx].set(0.0)   # padding_idx behaviour of nn.Embedding
    return {
        "embedding": emb,
        "w_ih": scale * jax.random.normal(ks[1], (4 * hidden_size, char_emb_size), jnp.float32),
        "w_hh": scale * jax.random.normal(ks[2], (4 * hidden_size, hidden_size), jnp.float32),
        "b_ih": scale * jax.random.normal(ks[3], (4 * hidden_size,), jnp.float32),
        "b_hh": scale * jax.random.normal(ks[4], (4 * hidden_size,), jnp.float32),
        "w_out": scale * jax.random.normal(ks[5], (vocab_size, hidden_size), jnp.float32),
        "b_out": jnp.zeros((vocab_size,), jnp.float32),
    }


if __name__ == "__main__":
    # Small shapes consistent with the module: length=8, batch=4,
    # char_embedding_size=50, hidden_size=32, vocab=30, pad_idx=0.
    L, B, E, H, V, PAD = 8, 4, 50, 32, 30, 0

    key = jax.random.PRNGKey(0)
    k_par, k_inp, k_h, k_c = jax.random.split(key, 4)

    raw = _init_raw_params(k_par, V, E, H, PAD)
    kparams = prepare_params(raw)
    input_ids = jax.random.randint(k_inp, (L, B), 0, V, dtype=jnp.int32)
    dec_hidden = (0.1 * jax.random.normal(k_h, (1, B, H), jnp.float32),
                  0.1 * jax.random.normal(k_c, (1, B, H), jnp.float32))

    scores, (h_out, c_out) = char_decoder_forward(input_ids, kparams, dec_hidden)
    jax.block_until_ready(scores)
    jax.block_until_ready(h_out)
    jax.block_until_ready(c_out)

    # Validate against the pure-f32 JAX reference of the PyTorch semantics.
    # Tolerance relaxed to 5e-3 because the kernel uses bf16 weights (W_hh,
    # W_out) with f32 accumulation; observed deviation is ~1e-3 at this scale.
    TOL = dict(rtol=5e-3, atol=5e-3)
    ref_scores, (ref_h, ref_c) = _reference_forward(input_ids, raw, dec_hidden)
    assert scores.shape == (L, B, V)
    assert h_out.shape == (1, B, H) and c_out.shape == (1, B, H)
    assert jnp.allclose(scores, ref_scores, **TOL)
    assert jnp.allclose(h_out, ref_h, **TOL)
    assert jnp.allclose(c_out, ref_c, **TOL)

    # Also exercise the dec_hidden=None path (zero initial state).
    s2, (h2, c2) = char_decoder_forward(input_ids, kparams, None)
    r2, (rh2, rc2) = _reference_forward(input_ids, raw, None)
    jax.block_until_ready(s2)
    assert jnp.allclose(s2, r2, **TOL)
    assert jnp.allclose(h2, rh2, **TOL)
    assert jnp.allclose(c2, rc2, **TOL)

    print("KERNEL_OK")
</pallas_src>

<mosaic_0001>
module attributes {stable_mosaic.version = 11 : i64} {
  func.func @_char_decoder_kernel(%arg0: memref<8x4xi32, #tpu.memory_space<smem>>, %arg1: memref<30x1x512xf32, #tpu.memory_space<vmem>>, %arg2: memref<128x512xbf16, #tpu.memory_space<vmem>>, %arg3: memref<128x128xbf16, #tpu.memory_space<vmem>>, %arg4: memref<1x128xf32, #tpu.memory_space<vmem>>, %arg5: memref<4x128xf32, #tpu.memory_space<vmem>>, %arg6: memref<4x128xf32, #tpu.memory_space<vmem>>, %arg7: memref<32x128xf32, #tpu.memory_space<vmem>>, %arg8: memref<4x128xf32, #tpu.memory_space<vmem>>, %arg9: memref<4x128xf32, #tpu.memory_space<vmem>>, %arg10: memref<32x512xf32, #tpu.memory_space<vmem>>, %arg11: memref<32x128xf32, #tpu.memory_space<vmem>>) attributes {dimension_semantics = [], scalar_prefetch = 0 : i64, scratch_operands = 2 : i64, tpu.core_type = #tpu.core_type<tc>} {
    %c0 = arith.constant 0 : index
    %c0_0 = arith.constant 0 : index
    %0 = memref.load %arg0[%c0, %c0_0] : memref<8x4xi32, #tpu.memory_space<smem>>
    %1 = arith.index_cast %0 : i32 to index
    %c0_1 = arith.constant 0 : index
    %c0_2 = arith.constant 0 : index
    %2 = vector.load %arg1[%1, %c0_1, %c0_2] : memref<30x1x512xf32, #tpu.memory_space<vmem>>, vector<1x1x512xf32>
    %3 = vector.shape_cast %2 : vector<1x1x512xf32> to vector<1x512xf32>
    %c0_3 = arith.constant 0 : index
    %c0_4 = arith.constant 0 : index
    %4 = vector.load %arg10[%c0_3, %c0_4] : memref<32x512xf32, #tpu.memory_space<vmem>>, vector<1x512xf32>
    tpu.vector_store %arg10[%c0_3, %c0_4], %3 {strides = array<i32>} : memref<32x512xf32, #tpu.memory_space<vmem>>, vector<1x512xf32>,
    %c0_5 = arith.constant 0 : index
    %c1 = arith.constant 1 : index
    %5 = memref.load %arg0[%c0_5, %c1] : memref<8x4xi32, #tpu.memory_space<smem>>
    %6 = arith.index_cast %5 : i32 to index
    %c0_6 = arith.constant 0 : index
    %c0_7 = arith.constant 0 : index
    %7 = vector.load %arg1[%6, %c0_6, %c0_7] : memref<30x1x512xf32, #tpu.memory_space<vmem>>, vector<1x1x512xf32>
    %8 = vector.shape_cast %7 : vector<1x1x512xf32> to vector<1x512xf32>
    %c1_8 = arith.constant 1 : index
    %c0_9 = arith.constant 0 : index
    %9 = vector.load %arg10[%c1_8, %c0_9] : memref<32x512xf32, #tpu.memory_space<vmem>>, vector<1x512xf32>
    tpu.vector_store %arg10[%c1_8, %c0_9], %8 {strides = array<i32>} : memref<32x512xf32, #tpu.memory_space<vmem>>, vector<1x512xf32>,
    %c0_10 = arith.constant 0 : index
    %c2 = arith.constant 2 : index
    %10 = memref.load %arg0[%c0_10, %c2] : memref<8x4xi32, #tpu.memory_space<smem>>
    %11 = arith.index_cast %10 : i32 to index
    %c0_11 = arith.constant 0 : index
    %c0_12 = arith.constant 0 : index
    %12 = vector.load %arg1[%11, %c0_11, %c0_12] : memref<30x1x512xf32, #tpu.memory_space<vmem>>, vector<1x1x512xf32>
    %13 = vector.shape_cast %12 : vector<1x1x512xf32> to vector<1x512xf32>
    %c2_13 = arith.constant 2 : index
    %c0_14 = arith.constant 0 : index
    %14 = vector.load %arg10[%c2_13, %c0_14] : memref<32x512xf32, #tpu.memory_space<vmem>>, vector<1x512xf32>
    tpu.vector_store %arg10[%c2_13, %c0_14], %13 {strides = array<i32>} : memref<32x512xf32, #tpu.memory_space<vmem>>, vector<1x512xf32>,
    %c0_15 = arith.constant 0 : index
    %c3 = arith.constant 3 : index
    %15 = memref.load %arg0[%c0_15, %c3] : memref<8x4xi32, #tpu.memory_space<smem>>
    %16 = arith.index_cast %15 : i32 to index
    %c0_16 = arith.constant 0 : index
    %c0_17 = arith.constant 0 : index
    %17 = vector.load %arg1[%16, %c0_16, %c0_17] : memref<30x1x512xf32, #tpu.memory_space<vmem>>, vector<1x1x512xf32>
    %18 = vector.shape_cast %17 : vector<1x1x512xf32> to vector<1x512xf32>
    %c3_18 = arith.constant 3 : index
    %c0_19 = arith.constant 0 : index
    %19 = vector.load %arg10[%c3_18, %c0_19] : memref<32x512xf32, #tpu.memory_space<vmem>>, vector<1x512xf32>
    tpu.vector_store %arg10[%c3_18, %c0_19], %18 {strides = array<i32>} : memref<32x512xf32, #tpu.memory_space<vmem>>, vector<1x512xf32>,
    %c1_20 = arith.constant 1 : index
    %c0_21 = arith.constant 0 : index
    %20 = memref.load %arg0[%c1_20, %c0_21] : memref<8x4xi32, #tpu.memory_space<smem>>
    %21 = arith.index_cast %20 : i32 to index
    %c0_22 = arith.constant 0 : index
    %c0_23 = arith.constant 0 : index
    %22 = vector.load %arg1[%21, %c0_22, %c0_23] : memref<30x1x512xf32, #tpu.memory_space<vmem>>, vector<1x1x512xf32>
    %23 = vector.shape_cast %22 : vector<1x1x512xf32> to vector<1x512xf32>
    %c4 = arith.constant 4 : index
    %c0_24 = arith.constant 0 : index
    %24 = vector.load %arg10[%c4, %c0_24] : memref<32x512xf32, #tpu.memory_space<vmem>>, vector<1x512xf32>
    tpu.vector_store %arg10[%c4, %c0_24], %23 {strides = array<i32>} : memref<32x512xf32, #tpu.memory_space<vmem>>, vector<1x512xf32>,
    %c1_25 = arith.constant 1 : index
    %c1_26 = arith.constant 1 : index
    %25 = memref.load %arg0[%c1_25, %c1_26] : memref<8x4xi32, #tpu.memory_space<smem>>
    %26 = arith.index_cast %25 : i32 to index
    %c0_27 = arith.constant 0 : index
    %c0_28 = arith.constant 0 : index
    %27 = vector.load %arg1[%26, %c0_27, %c0_28] : memref<30x1x512xf32, #tpu.memory_space<vmem>>, vector<1x1x512xf32>
    %28 = vector.shape_cast %27 : vector<1x1x512xf32> to vector<1x512xf32>
    %c5 = arith.constant 5 : index
    %c0_29 = arith.constant 0 : index
    %29 = vector.load %arg10[%c5, %c0_29] : memref<32x512xf32, #tpu.memory_space<vmem>>, vector<1x512xf32>
    tpu.vector_store %arg10[%c5, %c0_29], %28 {strides = array<i32>} : memref<32x512xf32, #tpu.memory_space<vmem>>, vector<1x512xf32>,
    %c1_30 = arith.constant 1 : index
    %c2_31 = arith.constant 2 : index
    %30 = memref.load %arg0[%c1_30, %c2_31] : memref<8x4xi32, #tpu.memory_space<smem>>
    %31 = arith.index_cast %30 : i32 to index
    %c0_32 = arith.constant 0 : index
    %c0_33 = arith.constant 0 : index
    %32 = vector.load %arg1[%31, %c0_32, %c0_33] : memref<30x1x512xf32, #tpu.memory_space<vmem>>, vector<1x1x512xf32>
    %33 = vector.shape_cast %32 : vector<1x1x512xf32> to vector<1x512xf32>
    %c6 = arith.constant 6 : index
    %c0_34 = arith.constant 0 : index
    %34 = vector.load %arg10[%c6, %c0_34] : memref<32x512xf32, #tpu.memory_space<vmem>>, vector<1x512xf32>
    tpu.vector_store %arg10[%c6, %c0_34], %33 {strides = array<i32>} : memref<32x512xf32, #tpu.memory_space<vmem>>, vector<1x512xf32>,
    %c1_35 = arith.constant 1 : index
    %c3_36 = arith.constant 3 : index
    %35 = memref.load %arg0[%c1_35, %c3_36] : memref<8x4xi32, #tpu.memory_space<smem>>
    %36 = arith.index_cast %35 : i32 to index
    %c0_37 = arith.constant 0 : index
    %c0_38 = arith.constant 0 : index
    %37 = vector.load %arg1[%36, %c0_37, %c0_38] : memref<30x1x512xf32, #tpu.memory_space<vmem>>, vector<1x1x512xf32>
    %38 = vector.shape_cast %37 : vector<1x1x512xf32> to vector<1x512xf32>
    %c7 = arith.constant 7 : index
    %c0_39 = arith.constant 0 : index
    %39 = vector.load %arg10[%c7, %c0_39] : memref<32x512xf32, #tpu.memory_space<vmem>>, vector<1x512xf32>
    tpu.vector_store %arg10[%c7, %c0_39], %38 {strides = array<i32>} : memref<32x512xf32, #tpu.memory_space<vmem>>, vector<1x512xf32>,
    %c2_40 = arith.constant 2 : index
    %c0_41 = arith.constant 0 : index
    %40 = memref.load %arg0[%c2_40, %c0_41] : memref<8x4xi32, #tpu.memory_space<smem>>
    %41 = arith.index_cast %40 : i32 to index
    %c0_42 = arith.constant 0 : index
    %c0_43 = arith.constant 0 : index
    %42 = vector.load %arg1[%41, %c0_42, %c0_43] : memref<30x1x512xf32, #tpu.memory_space<vmem>>, vector<1x1x512xf32>
    %43 = vector.shape_cast %42 : vector<1x1x512xf32> to vector<1x512xf32>
    %c8 = arith.constant 8 : index
    %c0_44 = arith.constant 0 : index
    %44 = vector.load %arg10[%c8, %c0_44] : memref<32x512xf32, #tpu.memory_space<vmem>>, vector<1x512xf32>
    tpu.vector_store %arg10[%c8, %c0_44], %43 {strides = array<i32>} : memref<32x512xf32, #tpu.memory_space<vmem>>, vector<1x512xf32>,
    %c2_45 = arith.constant 2 : index
    %c1_46 = arith.constant 1 : index
    %45 = memref.load %arg0[%c2_45, %c1_46] : memref<8x4xi32, #tpu.memory_space<smem>>
    %46 = arith.index_cast %45 : i32 to index
    %c0_47 = arith.constant 0 : index
    %c0_48 = arith.constant 0 : index
    %47 = vector.load %arg1[%46, %c0_47, %c0_48] : memref<30x1x512xf32, #tpu.memory_space<vmem>>, vector<1x1x512xf32>
    %48 = vector.shape_cast %47 : vector<1x1x512xf32> to vector<1x512xf32>
    %c9 = arith.constant 9 : index
    %c0_49 = arith.constant 0 : index
    %49 = vector.load %arg10[%c9, %c0_49] : memref<32x512xf32, #tpu.memory_space<vmem>>, vector<1x512xf32>
    tpu.vector_store %arg10[%c9, %c0_49], %48 {strides = array<i32>} : memref<32x512xf32, #tpu.memory_space<vmem>>, vector<1x512xf32>,
    %c2_50 = arith.constant 2 : index
    %c2_51 = arith.constant 2 : index
    %50 = memref.load %arg0[%c2_50, %c2_51] : memref<8x4xi32, #tpu.memory_space<smem>>
    %51 = arith.index_cast %50 : i32 to index
    %c0_52 = arith.constant 0 : index
    %c0_53 = arith.constant 0 : index
    %52 = vector.load %arg1[%51, %c0_52, %c0_53] : memref<30x1x512xf32, #tpu.memory_space<vmem>>, vector<1x1x512xf32>
    %53 = vector.shape_cast %52 : vector<1x1x512xf32> to vector<1x512xf32>
    %c10 = arith.constant 10 : index
    %c0_54 = arith.constant 0 : index
    %54 = vector.load %arg10[%c10, %c0_54] : memref<32x512xf32, #tpu.memory_space<vmem>>, vector<1x512xf32>
    tpu.vector_store %arg10[%c10, %c0_54], %53 {strides = array<i32>} : memref<32x512xf32, #tpu.memory_space<vmem>>, vector<1x512xf32>,
    %c2_55 = arith.constant 2 : index
    %c3_56 = arith.constant 3 : index
    %55 = memref.load %arg0[%c2_55, %c3_56] : memref<8x4xi32, #tpu.memory_space<smem>>
    %56 = arith.index_cast %55 : i32 to index
    %c0_57 = arith.constant 0 : index
    %c0_58 = arith.constant 0 : index
    %57 = vector.load %arg1[%56, %c0_57, %c0_58] : memref<30x1x512xf32, #tpu.memory_space<vmem>>, vector<1x1x512xf32>
    %58 = vector.shape_cast %57 : vector<1x1x512xf32> to vector<1x512xf32>
    %c11 = arith.constant 11 : index
    %c0_59 = arith.constant 0 : index
    %59 = vector.load %arg10[%c11, %c0_59] : memref<32x512xf32, #tpu.memory_space<vmem>>, vector<1x512xf32>
    tpu.vector_store %arg10[%c11, %c0_59], %58 {strides = array<i32>} : memref<32x512xf32, #tpu.memory_space<vmem>>, vector<1x512xf32>,
    %c3_60 = arith.constant 3 : index
    %c0_61 = arith.constant 0 : index
    %60 = memref.load %arg0[%c3_60, %c0_61] : memref<8x4xi32, #tpu.memory_space<smem>>
    %61 = arith.index_cast %60 : i32 to index
    %c0_62 = arith.constant 0 : index
    %c0_63 = arith.constant 0 : index
    %62 = vector.load %arg1[%61, %c0_62, %c0_63] : memref<30x1x512xf32, #tpu.memory_space<vmem>>, vector<1x1x512xf32>
    %63 = vector.shape_cast %62 : vector<1x1x512xf32> to vector<1x512xf32>
    %c12 = arith.constant 12 : index
    %c0_64 = arith.constant 0 : index
    %64 = vector.load %arg10[%c12, %c0_64] : memref<32x512xf32, #tpu.memory_space<vmem>>, vector<1x512xf32>
    tpu.vector_store %arg10[%c12, %c0_64], %63 {strides = array<i32>} : memref<32x512xf32, #tpu.memory_space<vmem>>, vector<1x512xf32>,
    %c3_65 = arith.constant 3 : index
    %c1_66 = arith.constant 1 : index
    %65 = memref.load %arg0[%c3_65, %c1_66] : memref<8x4xi32, #tpu.memory_space<smem>>
    %66 = arith.index_cast %65 : i32 to index
    %c0_67 = arith.constant 0 : index
    %c0_68 = arith.constant 0 : index
    %67 = vector.load %arg1[%66, %c0_67, %c0_68] : memref<30x1x512xf32, #tpu.memory_space<vmem>>, vector<1x1x512xf32>
    %68 = vector.shape_cast %67 : vector<1x1x512xf32> to vector<1x512xf32>
    %c13 = arith.constant 13 : index
    %c0_69 = arith.constant 0 : index
    %69 = vector.load %arg10[%c13, %c0_69] : memref<32x512xf32, #tpu.memory_space<vmem>>, vector<1x512xf32>
    tpu.vector_store %arg10[%c13, %c0_69], %68 {strides = array<i32>} : memref<32x512xf32, #tpu.memory_space<vmem>>, vector<1x512xf32>,
    %c3_70 = arith.constant 3 : index
    %c2_71 = arith.constant 2 : index
    %70 = memref.load %arg0[%c3_70, %c2_71] : memref<8x4xi32, #tpu.memory_space<smem>>
    %71 = arith.index_cast %70 : i32 to index
    %c0_72 = arith.constant 0 : index
    %c0_73 = arith.constant 0 : index
    %72 = vector.load %arg1[%71, %c0_72, %c0_73] : memref<30x1x512xf32, #tpu.memory_space<vmem>>, vector<1x1x512xf32>
    %73 = vector.shape_cast %72 : vector<1x1x512xf32> to vector<1x512xf32>
    %c14 = arith.constant 14 : index
    %c0_74 = arith.constant 0 : index
    %74 = vector.load %arg10[%c14, %c0_74] : memref<32x512xf32, #tpu.memory_space<vmem>>, vector<1x512xf32>
    tpu.vector_store %arg10[%c14, %c0_74], %73 {strides = array<i32>} : memref<32x512xf32, #tpu.memory_space<vmem>>, vector<1x512xf32>,
    %c3_75 = arith.constant 3 : index
    %c3_76 = arith.constant 3 : index
    %75 = memref.load %arg0[%c3_75, %c3_76] : memref<8x4xi32, #tpu.memory_space<smem>>
    %76 = arith.index_cast %75 : i32 to index
    %c0_77 = arith.constant 0 : index
    %c0_78 = arith.constant 0 : index
    %77 = vector.load %arg1[%76, %c0_77, %c0_78] : memref<30x1x512xf32, #tpu.memory_space<vmem>>, vector<1x1x512xf32>
    %78 = vector.shape_cast %77 : vector<1x1x512xf32> to vector<1x512xf32>
    %c15 = arith.constant 15 : index
    %c0_79 = arith.constant 0 : index
    %79 = vector.load %arg10[%c15, %c0_79] : memref<32x512xf32, #tpu.memory_space<vmem>>, vector<1x512xf32>
    tpu.vector_store %arg10[%c15, %c0_79], %78 {strides = array<i32>} : memref<32x512xf32, #tpu.memory_space<vmem>>, vector<1x512xf32>,
    %c4_80 = arith.constant 4 : index
    %c0_81 = arith.constant 0 : index
    %80 = memref.load %arg0[%c4_80, %c0_81] : memref<8x4xi32, #tpu.memory_space<smem>>
    %81 = arith.index_cast %80 : i32 to index
    %c0_82 = arith.constant 0 : index
    %c0_83 = arith.constant 0 : index
    %82 = vector.load %arg1[%81, %c0_82, %c0_83] : memref<30x1x512xf32, #tpu.memory_space<vmem>>, vector<1x1x512xf32>
    %83 = vector.shape_cast %82 : vector<1x1x512xf32> to vector<1x512xf32>
    %c16 = arith.constant 16 : index
    %c0_84 = arith.constant 0 : index
    %84 = vector.load %arg10[%c16, %c0_84] : memref<32x512xf32, #tpu.memory_space<vmem>>, vector<1x512xf32>
    tpu.vector_store %arg10[%c16, %c0_84], %83 {strides = array<i32>} : memref<32x512xf32, #tpu.memory_space<vmem>>, vector<1x512xf32>,
    %c4_85 = arith.constant 4 : index
    %c1_86 = arith.constant 1 : index
    %85 = memref.load %arg0[%c4_85, %c1_86] : memref<8x4xi32, #tpu.memory_space<smem>>
    %86 = arith.index_cast %85 : i32 to index
    %c0_87 = arith.constant 0 : index
    %c0_88 = arith.constant 0 : index
    %87 = vector.load %arg1[%86, %c0_87, %c0_88] : memref<30x1x512xf32, #tpu.memory_space<vmem>>, vector<1x1x512xf32>
    %88 = vector.shape_cast %87 : vector<1x1x512xf32> to vector<1x512xf32>
    %c17 = arith.constant 17 : index
    %c0_89 = arith.constant 0 : index
    %89 = vector.load %arg10[%c17, %c0_89] : memref<32x512xf32, #tpu.memory_space<vmem>>, vector<1x512xf32>
    tpu.vector_store %arg10[%c17, %c0_89], %88 {strides = array<i32>} : memref<32x512xf32, #tpu.memory_space<vmem>>, vector<1x512xf32>,
    %c4_90 = arith.constant 4 : index
    %c2_91 = arith.constant 2 : index
    %90 = memref.load %arg0[%c4_90, %c2_91] : memref<8x4xi32, #tpu.memory_space<smem>>
    %91 = arith.index_cast %90 : i32 to index
    %c0_92 = arith.constant 0 : index
    %c0_93 = arith.constant 0 : index
    %92 = vector.load %arg1[%91, %c0_92, %c0_93] : memref<30x1x512xf32, #tpu.memory_space<vmem>>, vector<1x1x512xf32>
    %93 = vector.shape_cast %92 : vector<1x1x512xf32> to vector<1x512xf32>
    %c18 = arith.constant 18 : index
    %c0_94 = arith.constant 0 : index
    %94 = vector.load %arg10[%c18, %c0_94] : memref<32x512xf32, #tpu.memory_space<vmem>>, vector<1x512xf32>
    tpu.vector_store %arg10[%c18, %c0_94], %93 {strides = array<i32>} : memref<32x512xf32, #tpu.memory_space<vmem>>, vector<1x512xf32>,
    %c4_95 = arith.constant 4 : index
    %c3_96 = arith.constant 3 : index
    %95 = memref.load %arg0[%c4_95, %c3_96] : memref<8x4xi32, #tpu.memory_space<smem>>
    %96 = arith.index_cast %95 : i32 to index
    %c0_97 = arith.constant 0 : index
    %c0_98 = arith.constant 0 : index
    %97 = vector.load %arg1[%96, %c0_97, %c0_98] : memref<30x1x512xf32, #tpu.memory_space<vmem>>, vector<1x1x512xf32>
    %98 = vector.shape_cast %97 : vector<1x1x512xf32> to vector<1x512xf32>
    %c19 = arith.constant 19 : index
    %c0_99 = arith.constant 0 : index
    %99 = vector.load %arg10[%c19, %c0_99] : memref<32x512xf32, #tpu.memory_space<vmem>>, vector<1x512xf32>
    tpu.vector_store %arg10[%c19, %c0_99], %98 {strides = array<i32>} : memref<32x512xf32, #tpu.memory_space<vmem>>, vector<1x512xf32>,
    %c5_100 = arith.constant 5 : index
    %c0_101 = arith.constant 0 : index
    %100 = memref.load %arg0[%c5_100, %c0_101] : memref<8x4xi32, #tpu.memory_space<smem>>
    %101 = arith.index_cast %100 : i32 to index
    %c0_102 = arith.constant 0 : index
    %c0_103 = arith.constant 0 : index
    %102 = vector.load %arg1[%101, %c0_102, %c0_103] : memref<30x1x512xf32, #tpu.memory_space<vmem>>, vector<1x1x512xf32>
    %103 = vector.shape_cast %102 : vector<1x1x512xf32> to vector<1x512xf32>
    %c20 = arith.constant 20 : index
    %c0_104 = arith.constant 0 : index
    %104 = vector.load %arg10[%c20, %c0_104] : memref<32x512xf32, #tpu.memory_space<vmem>>, vector<1x512xf32>
    tpu.vector_store %arg10[%c20, %c0_104], %103 {strides = array<i32>} : memref<32x512xf32, #tpu.memory_space<vmem>>, vector<1x512xf32>,
    %c5_105 = arith.constant 5 : index
    %c1_106 = arith.constant 1 : index
    %105 = memref.load %arg0[%c5_105, %c1_106] : memref<8x4xi32, #tpu.memory_space<smem>>
    %106 = arith.index_cast %105 : i32 to index
    %c0_107 = arith.constant 0 : index
    %c0_108 = arith.constant 0 : index
    %107 = vector.load %arg1[%106, %c0_107, %c0_108] : memref<30x1x512xf32, #tpu.memory_space<vmem>>, vector<1x1x512xf32>
    %108 = vector.shape_cast %107 : vector<1x1x512xf32> to vector<1x512xf32>
    %c21 = arith.constant 21 : index
    %c0_109 = arith.constant 0 : index
    %109 = vector.load %arg10[%c21, %c0_109] : memref<32x512xf32, #tpu.memory_space<vmem>>, vector<1x512xf32>
    tpu.vector_store %arg10[%c21, %c0_109], %108 {strides = array<i32>} : memref<32x512xf32, #tpu.memory_space<vmem>>, vector<1x512xf32>,
    %c5_110 = arith.constant 5 : index
    %c2_111 = arith.constant 2 : index
    %110 = memref.load %arg0[%c5_110, %c2_111] : memref<8x4xi32, #tpu.memory_space<smem>>
    %111 = arith.index_cast %110 : i32 to index
    %c0_112 = arith.constant 0 : index
    %c0_113 = arith.constant 0 : index
    %112 = vector.load %arg1[%111, %c0_112, %c0_113] : memref<30x1x512xf32, #tpu.memory_space<vmem>>, vector<1x1x512xf32>
    %113 = vector.shape_cast %112 : vector<1x1x512xf32> to vector<1x512xf32>
    %c22 = arith.constant 22 : index
    %c0_114 = arith.constant 0 : index
    %114 = vector.load %arg10[%c22, %c0_114] : memref<32x512xf32, #tpu.memory_space<vmem>>, vector<1x512xf32>
    tpu.vector_store %arg10[%c22, %c0_114], %113 {strides = array<i32>} : memref<32x512xf32, #tpu.memory_space<vmem>>, vector<1x512xf32>,
    %c5_115 = arith.constant 5 : index
    %c3_116 = arith.constant 3 : index
    %115 = memref.load %arg0[%c5_115, %c3_116] : memref<8x4xi32, #tpu.memory_space<smem>>
    %116 = arith.index_cast %115 : i32 to index
    %c0_117 = arith.constant 0 : index
    %c0_118 = arith.constant 0 : index
    %117 = vector.load %arg1[%116, %c0_117, %c0_118] : memref<30x1x512xf32, #tpu.memory_space<vmem>>, vector<1x1x512xf32>
    %118 = vector.shape_cast %117 : vector<1x1x512xf32> to vector<1x512xf32>
    %c23 = arith.constant 23 : index
    %c0_119 = arith.constant 0 : index
    %119 = vector.load %arg10[%c23, %c0_119] : memref<32x512xf32, #tpu.memory_space<vmem>>, vector<1x512xf32>
    tpu.vector_store %arg10[%c23, %c0_119], %118 {strides = array<i32>} : memref<32x512xf32, #tpu.memory_space<vmem>>, vector<1x512xf32>,
    %c6_120 = arith.constant 6 : index
    %c0_121 = arith.constant 0 : index
    %120 = memref.load %arg0[%c6_120, %c0_121] : memref<8x4xi32, #tpu.memory_space<smem>>
    %121 = arith.index_cast %120 : i32 to index
    %c0_122 = arith.constant 0 : index
    %c0_123 = arith.constant 0 : index
    %122 = vector.load %arg1[%121, %c0_122, %c0_123] : memref<30x1x512xf32, #tpu.memory_space<vmem>>, vector<1x1x512xf32>
    %123 = vector.shape_cast %122 : vector<1x1x512xf32> to vector<1x512xf32>
    %c24 = arith.constant 24 : index
    %c0_124 = arith.constant 0 : index
    %124 = vector.load %arg10[%c24, %c0_124] : memref<32x512xf32, #tpu.memory_space<vmem>>, vector<1x512xf32>
    tpu.vector_store %arg10[%c24, %c0_124], %123 {strides = array<i32>} : memref<32x512xf32, #tpu.memory_space<vmem>>, vector<1x512xf32>,
    %c6_125 = arith.constant 6 : index
    %c1_126 = arith.constant 1 : index
    %125 = memref.load %arg0[%c6_125, %c1_126] : memref<8x4xi32, #tpu.memory_space<smem>>
    %126 = arith.index_cast %125 : i32 to index
    %c0_127 = arith.constant 0 : index
    %c0_128 = arith.constant 0 : index
    %127 = vector.load %arg1[%126, %c0_127, %c0_128] : memref<30x1x512xf32, #tpu.memory_space<vmem>>, vector<1x1x512xf32>
    %128 = vector.shape_cast %127 : vector<1x1x512xf32> to vector<1x512xf32>
    %c25 = arith.constant 25 : index
    %c0_129 = arith.constant 0 : index
    %129 = vector.load %arg10[%c25, %c0_129] : memref<32x512xf32, #tpu.memory_space<vmem>>, vector<1x512xf32>
    tpu.vector_store %arg10[%c25, %c0_129], %128 {strides = array<i32>} : memref<32x512xf32, #tpu.memory_space<vmem>>, vector<1x512xf32>,
    %c6_130 = arith.constant 6 : index
    %c2_131 = arith.constant 2 : index
    %130 = memref.load %arg0[%c6_130, %c2_131] : memref<8x4xi32, #tpu.memory_space<smem>>
    %131 = arith.index_cast %130 : i32 to index
    %c0_132 = arith.constant 0 : index
    %c0_133 = arith.constant 0 : index
    %132 = vector.load %arg1[%131, %c0_132, %c0_133] : memref<30x1x512xf32, #tpu.memory_space<vmem>>, vector<1x1x512xf32>
    %133 = vector.shape_cast %132 : vector<1x1x512xf32> to vector<1x512xf32>
    %c26 = arith.constant 26 : index
    %c0_134 = arith.constant 0 : index
    %134 = vector.load %arg10[%c26, %c0_134] : memref<32x512xf32, #tpu.memory_space<vmem>>, vector<1x512xf32>
    tpu.vector_store %arg10[%c26, %c0_134], %133 {strides = array<i32>} : memref<32x512xf32, #tpu.memory_space<vmem>>, vector<1x512xf32>,
    %c6_135 = arith.constant 6 : index
    %c3_136 = arith.constant 3 : index
    %135 = memref.load %arg0[%c6_135, %c3_136] : memref<8x4xi32, #tpu.memory_space<smem>>
    %136 = arith.index_cast %135 : i32 to index
    %c0_137 = arith.constant 0 : index
    %c0_138 = arith.constant 0 : index
    %137 = vector.load %arg1[%136, %c0_137, %c0_138] : memref<30x1x512xf32, #tpu.memory_space<vmem>>, vector<1x1x512xf32>
    %138 = vector.shape_cast %137 : vector<1x1x512xf32> to vector<1x512xf32>
    %c27 = arith.constant 27 : index
    %c0_139 = arith.constant 0 : index
    %139 = vector.load %arg10[%c27, %c0_139] : memref<32x512xf32, #tpu.memory_space<vmem>>, vector<1x512xf32>
    tpu.vector_store %arg10[%c27, %c0_139], %138 {strides = array<i32>} : memref<32x512xf32, #tpu.memory_space<vmem>>, vector<1x512xf32>,
    %c7_140 = arith.constant 7 : index
    %c0_141 = arith.constant 0 : index
    %140 = memref.load %arg0[%c7_140, %c0_141] : memref<8x4xi32, #tpu.memory_space<smem>>
    %141 = arith.index_cast %140 : i32 to index
    %c0_142 = arith.constant 0 : index
    %c0_143 = arith.constant 0 : index
    %142 = vector.load %arg1[%141, %c0_142, %c0_143] : memref<30x1x512xf32, #tpu.memory_space<vmem>>, vector<1x1x512xf32>
    %143 = vector.shape_cast %142 : vector<1x1x512xf32> to vector<1x512xf32>
    %c28 = arith.constant 28 : index
    %c0_144 = arith.constant 0 : index
    %144 = vector.load %arg10[%c28, %c0_144] : memref<32x512xf32, #tpu.memory_space<vmem>>, vector<1x512xf32>
    tpu.vector_store %arg10[%c28, %c0_144], %143 {strides = array<i32>} : memref<32x512xf32, #tpu.memory_space<vmem>>, vector<1x512xf32>,
    %c7_145 = arith.constant 7 : index
    %c1_146 = arith.constant 1 : index
    %145 = memref.load %arg0[%c7_145, %c1_146] : memref<8x4xi32, #tpu.memory_space<smem>>
    %146 = arith.index_cast %145 : i32 to index
    %c0_147 = arith.constant 0 : index
    %c0_148 = arith.constant 0 : index
    %147 = vector.load %arg1[%146, %c0_147, %c0_148] : memref<30x1x512xf32, #tpu.memory_space<vmem>>, vector<1x1x512xf32>
    %148 = vector.shape_cast %147 : vector<1x1x512xf32> to vector<1x512xf32>
    %c29 = arith.constant 29 : index
    %c0_149 = arith.constant 0 : index
    %149 = vector.load %arg10[%c29, %c0_149] : memref<32x512xf32, #tpu.memory_space<vmem>>, vector<1x512xf32>
    tpu.vector_store %arg10[%c29, %c0_149], %148 {strides = array<i32>} : memref<32x512xf32, #tpu.memory_space<vmem>>, vector<1x512xf32>,
    %c7_150 = arith.constant 7 : index
    %c2_151 = arith.constant 2 : index
    %150 = memref.load %arg0[%c7_150, %c2_151] : memref<8x4xi32, #tpu.memory_space<smem>>
    %151 = arith.index_cast %150 : i32 to index
    %c0_152 = arith.constant 0 : index
    %c0_153 = arith.constant 0 : index
    %152 = vector.load %arg1[%151, %c0_152, %c0_153] : memref<30x1x512xf32, #tpu.memory_space<vmem>>, vector<1x1x512xf32>
    %153 = vector.shape_cast %152 : vector<1x1x512xf32> to vector<1x512xf32>
    %c30 = arith.constant 30 : index
    %c0_154 = arith.constant 0 : index
    %154 = vector.load %arg10[%c30, %c0_154] : memref<32x512xf32, #tpu.memory_space<vmem>>, vector<1x512xf32>
    tpu.vector_store %arg10[%c30, %c0_154], %153 {strides = array<i32>} : memref<32x512xf32, #tpu.memory_space<vmem>>, vector<1x512xf32>,
    %c7_155 = arith.constant 7 : index
    %c3_156 = arith.constant 3 : index
    %155 = memref.load %arg0[%c7_155, %c3_156] : memref<8x4xi32, #tpu.memory_space<smem>>
    %156 = arith.index_cast %155 : i32 to index
    %c0_157 = arith.constant 0 : index
    %c0_158 = arith.constant 0 : index
    %157 = vector.load %arg1[%156, %c0_157, %c0_158] : memref<30x1x512xf32, #tpu.memory_space<vmem>>, vector<1x1x512xf32>
    %158 = vector.shape_cast %157 : vector<1x1x512xf32> to vector<1x512xf32>
    %c31 = arith.constant 31 : index
    %c0_159 = arith.constant 0 : index
    %159 = vector.load %arg10[%c31, %c0_159] : memref<32x512xf32, #tpu.memory_space<vmem>>, vector<1x512xf32>
    tpu.vector_store %arg10[%c31, %c0_159], %158 {strides = array<i32>} : memref<32x512xf32, #tpu.memory_space<vmem>>, vector<1x512xf32>,
    %c0_160 = arith.constant 0 : index
    %c0_161 = arith.constant 0 : index
    %160 = vector.load %arg5[%c0_160, %c0_161] : memref<4x128xf32, #tpu.memory_space<vmem>>, vector<4x128xf32>
    %c0_162 = arith.constant 0 : index
    %c0_163 = arith.constant 0 : index
    %161 = vector.load %arg6[%c0_162, %c0_163] : memref<4x128xf32, #tpu.memory_space<vmem>>, vector<4x128xf32>
    %c0_164 = arith.constant 0 : index
    %c0_165 = arith.constant 0 : index
    %162 = vector.load %arg10[%c0_164, %c0_165] : memref<32x512xf32, #tpu.memory_space<vmem>>, vector<4x512xf32>
    %163 = arith.truncf %160 : vector<4x128xf32> to vector<4x128xbf16>
    %c0_166 = arith.constant 0 : index
    %c0_167 = arith.constant 0 : index
    %164 = vector.load %arg2[%c0_166, %c0_167] : memref<128x512xbf16, #tpu.memory_space<vmem>>, vector<128x512xbf16>
    %cst = arith.constant dense<0.000000e+00> : vector<4x512xf32>
    %165 = tpu.matmul %163, %164, %cst {dimension_numbers = #tpu.dot_dimension_numbers<[1], [0], [0], [1], [0, 0, 1, 1], [], []>} : vector<4x128xbf16>, vector<128x512xbf16>, vector<4x512xf32> -> vector<4x512xf32>
    %166 = arith.addf %162, %165 : vector<4x512xf32>
    %167 = vector.extract_strided_slice %166 {offsets = [0, 0], sizes = [4, 256], strides = [1, 1]} : vector<4x512xf32> to vector<4x256xf32>
    %168 = arith.negf %167 : vector<4x256xf32>
    %169 = math.exp %168 : vector<4x256xf32>
    %cst_168 = arith.constant 1.000000e+00 : f32
    %170 = vector.broadcast %cst_168 : f32 to vector<4x256xf32>
    %171 = arith.addf %170, %169 : vector<4x256xf32>
    %172 = arith.divf %170, %171 : vector<4x256xf32>
    %173 = vector.extract_strided_slice %172 {offsets = [0, 0], sizes = [4, 128], strides = [1, 1]} : vector<4x256xf32> to vector<4x128xf32>
    %174 = vector.extract_strided_slice %172 {offsets = [0, 128], sizes = [4, 128], strides = [1, 1]} : vector<4x256xf32> to vector<4x128xf32>
    %175 = vector.extract_strided_slice %166 {offsets = [0, 256], sizes = [4, 128], strides = [1, 1]} : vector<4x512xf32> to vector<4x128xf32>
    %176 = math.tanh %175 : vector<4x128xf32>
    %177 = vector.extract_strided_slice %166 {offsets = [0, 384], sizes = [4, 128], strides = [1, 1]} : vector<4x512xf32> to vector<4x128xf32>
    %178 = arith.negf %177 : vector<4x128xf32>
    %179 = math.exp %178 : vector<4x128xf32>
    %cst_169 = arith.constant 1.000000e+00 : f32
    %180 = vector.broadcast %cst_169 : f32 to vector<4x128xf32>
    %181 = arith.addf %180, %179 : vector<4x128xf32>
    %182 = arith.divf %180, %181 : vector<4x128xf32>
    %183 = arith.mulf %174, %161 : vector<4x128xf32>
    %184 = arith.mulf %173, %176 : vector<4x128xf32>
    %185 = arith.addf %183, %184 : vector<4x128xf32>
    %186 = math.tanh %185 : vector<4x128xf32>
    %187 = arith.mulf %182, %186 : vector<4x128xf32>
    %c0_170 = arith.constant 0 : index
    %c0_171 = arith.constant 0 : index
    %188 = vector.load %arg11[%c0_170, %c0_171] : memref<32x128xf32, #tpu.memory_space<vmem>>, vector<4x128xf32>
    tpu.vector_store %arg11[%c0_170, %c0_171], %187 {strides = array<i32>} : memref<32x128xf32, #tpu.memory_space<vmem>>, vector<4x128xf32>,
    %c4_172 = arith.constant 4 : index
    %c0_173 = arith.constant 0 : index
    %189 = vector.load %arg10[%c4_172, %c0_173] : memref<32x512xf32, #tpu.memory_space<vmem>>, vector<4x512xf32>
    %190 = arith.truncf %187 : vector<4x128xf32> to vector<4x128xbf16>
    %c0_174 = arith.constant 0 : index
    %c0_175 = arith.constant 0 : index
    %191 = vector.load %arg2[%c0_174, %c0_175] : memref<128x512xbf16, #tpu.memory_space<vmem>>, vector<128x512xbf16>
    %cst_176 = arith.constant dense<0.000000e+00> : vector<4x512xf32>
    %192 = tpu.matmul %190, %191, %cst_176 {dimension_numbers = #tpu.dot_dimension_numbers<[1], [0], [0], [1], [0, 0, 1, 1], [], []>} : vector<4x128xbf16>, vector<128x512xbf16>, vector<4x512xf32> -> vector<4x512xf32>
    %193 = arith.addf %189, %192 : vector<4x512xf32>
    %194 = vector.extract_strided_slice %193 {offsets = [0, 0], sizes = [4, 256], strides = [1, 1]} : vector<4x512xf32> to vector<4x256xf32>
    %195 = arith.negf %194 : vector<4x256xf32>
    %196 = math.exp %195 : vector<4x256xf32>
    %cst_177 = arith.constant 1.000000e+00 : f32
    %197 = vector.broadcast %cst_177 : f32 to vector<4x256xf32>
    %198 = arith.addf %197, %196 : vector<4x256xf32>
    %199 = arith.divf %197, %198 : vector<4x256xf32>
    %200 = vector.extract_strided_slice %199 {offsets = [0, 0], sizes = [4, 128], strides = [1, 1]} : vector<4x256xf32> to vector<4x128xf32>
    %201 = vector.extract_strided_slice %199 {offsets = [0, 128], sizes = [4, 128], strides = [1, 1]} : vector<4x256xf32> to vector<4x128xf32>
    %202 = vector.extract_strided_slice %193 {offsets = [0, 256], sizes = [4, 128], strides = [1, 1]} : vector<4x512xf32> to vector<4x128xf32>
    %203 = math.tanh %202 : vector<4x128xf32>
    %204 = vector.extract_strided_slice %193 {offsets = [0, 384], sizes = [4, 128], strides = [1, 1]} : vector<4x512xf32> to vector<4x128xf32>
    %205 = arith.negf %204 : vector<4x128xf32>
    %206 = math.exp %205 : vector<4x128xf32>
    %cst_178 = arith.constant 1.000000e+00 : f32
    %207 = vector.broadcast %cst_178 : f32 to vector<4x128xf32>
    %208 = arith.addf %207, %206 : vector<4x128xf32>
    %209 = arith.divf %207, %208 : vector<4x128xf32>
    %210 = arith.mulf %201, %185 : vector<4x128xf32>
    %211 = arith.mulf %200, %203 : vector<4x128xf32>
    %212 = arith.addf %210, %211 : vector<4x128xf32>
    %213 = math.tanh %212 : vector<4x128xf32>
    %214 = arith.mulf %209, %213 : vector<4x128xf32>
    %c4_179 = arith.constant 4 : index
    %c0_180 = arith.constant 0 : index
    %215 = vector.load %arg11[%c4_179, %c0_180] : memref<32x128xf32, #tpu.memory_space<vmem>>, vector<4x128xf32>
    tpu.vector_store %arg11[%c4_179, %c0_180], %214 {strides = array<i32>} : memref<32x128xf32, #tpu.memory_space<vmem>>, vector<4x128xf32>,
    %c8_181 = arith.constant 8 : index
    %c0_182 = arith.constant 0 : index
    %216 = vector.load %arg10[%c8_181, %c0_182] : memref<32x512xf32, #tpu.memory_space<vmem>>, vector<4x512xf32>
    %217 = arith.truncf %214 : vector<4x128xf32> to vector<4x128xbf16>
    %c0_183 = arith.constant 0 : index
    %c0_184 = arith.constant 0 : index
    %218 = vector.load %arg2[%c0_183, %c0_184] : memref<128x512xbf16, #tpu.memory_space<vmem>>, vector<128x512xbf16>
    %cst_185 = arith.constant dense<0.000000e+00> : vector<4x512xf32>
    %219 = tpu.matmul %217, %218, %cst_185 {dimension_numbers = #tpu.dot_dimension_numbers<[1], [0], [0], [1], [0, 0, 1, 1], [], []>} : vector<4x128xbf16>, vector<128x512xbf16>, vector<4x512xf32> -> vector<4x512xf32>
    %220 = arith.addf %216, %219 : vector<4x512xf32>
    %221 = vector.extract_strided_slice %220 {offsets = [0, 0], sizes = [4, 256], strides = [1, 1]} : vector<4x512xf32> to vector<4x256xf32>
    %222 = arith.negf %221 : vector<4x256xf32>
    %223 = math.exp %222 : vector<4x256xf32>
    %cst_186 = arith.constant 1.000000e+00 : f32
    %224 = vector.broadcast %cst_186 : f32 to vector<4x256xf32>
    %225 = arith.addf %224, %223 : vector<4x256xf32>
    %226 = arith.divf %224, %225 : vector<4x256xf32>
    %227 = vector.extract_strided_slice %226 {offsets = [0, 0], sizes = [4, 128], strides = [1, 1]} : vector<4x256xf32> to vector<4x128xf32>
    %228 = vector.extract_strided_slice %226 {offsets = [0, 128], sizes = [4, 128], strides = [1, 1]} : vector<4x256xf32> to vector<4x128xf32>
    %229 = vector.extract_strided_slice %220 {offsets = [0, 256], sizes = [4, 128], strides = [1, 1]} : vector<4x512xf32> to vector<4x128xf32>
    %230 = math.tanh %229 : vector<4x128xf32>
    %231 = vector.extract_strided_slice %220 {offsets = [0, 384], sizes = [4, 128], strides = [1, 1]} : vector<4x512xf32> to vector<4x128xf32>
    %232 = arith.negf %231 : vector<4x128xf32>
    %233 = math.exp %232 : vector<4x128xf32>
    %cst_187 = arith.constant 1.000000e+00 : f32
    %234 = vector.broadcast %cst_187 : f32 to vector<4x128xf32>
    %235 = arith.addf %234, %233 : vector<4x128xf32>
    %236 = arith.divf %234, %235 : vector<4x128xf32>
    %237 = arith.mulf %228, %212 : vector<4x128xf32>
    %238 = arith.mulf %227, %230 : vector<4x128xf32>
    %239 = arith.addf %237, %238 : vector<4x128xf32>
    %240 = math.tanh %239 : vector<4x128xf32>
    %241 = arith.mulf %236, %240 : vector<4x128xf32>
    %c8_188 = arith.constant 8 : index
    %c0_189 = arith.constant 0 : index
    %242 = vector.load %arg11[%c8_188, %c0_189] : memref<32x128xf32, #tpu.memory_space<vmem>>, vector<4x128xf32>
    tpu.vector_store %arg11[%c8_188, %c0_189], %241 {strides = array<i32>} : memref<32x128xf32, #tpu.memory_space<vmem>>, vector<4x128xf32>,
    %c12_190 = arith.constant 12 : index
    %c0_191 = arith.constant 0 : index
    %243 = vector.load %arg10[%c12_190, %c0_191] : memref<32x512xf32, #tpu.memory_space<vmem>>, vector<4x512xf32>
    %244 = arith.truncf %241 : vector<4x128xf32> to vector<4x128xbf16>
    %c0_192 = arith.constant 0 : index
    %c0_193 = arith.constant 0 : index
    %245 = vector.load %arg2[%c0_192, %c0_193] : memref<128x512xbf16, #tpu.memory_space<vmem>>, vector<128x512xbf16>
    %cst_194 = arith.constant dense<0.000000e+00> : vector<4x512xf32>
    %246 = tpu.matmul %244, %245, %cst_194 {dimension_numbers = #tpu.dot_dimension_numbers<[1], [0], [0], [1], [0, 0, 1, 1], [], []>} : vector<4x128xbf16>, vector<128x512xbf16>, vector<4x512xf32> -> vector<4x512xf32>
    %247 = arith.addf %243, %246 : vector<4x512xf32>
    %248 = vector.extract_strided_slice %247 {offsets = [0, 0], sizes = [4, 256], strides = [1, 1]} : vector<4x512xf32> to vector<4x256xf32>
    %249 = arith.negf %248 : vector<4x256xf32>
    %250 = math.exp %249 : vector<4x256xf32>
    %cst_195 = arith.constant 1.000000e+00 : f32
    %251 = vector.broadcast %cst_195 : f32 to vector<4x256xf32>
    %252 = arith.addf %251, %250 : vector<4x256xf32>
    %253 = arith.divf %251, %252 : vector<4x256xf32>
    %254 = vector.extract_strided_slice %253 {offsets = [0, 0], sizes = [4, 128], strides = [1, 1]} : vector<4x256xf32> to vector<4x128xf32>
    %255 = vector.extract_strided_slice %253 {offsets = [0, 128], sizes = [4, 128], strides = [1, 1]} : vector<4x256xf32> to vector<4x128xf32>
    %256 = vector.extract_strided_slice %247 {offsets = [0, 256], sizes = [4, 128], strides = [1, 1]} : vector<4x512xf32> to vector<4x128xf32>
    %257 = math.tanh %256 : vector<4x128xf32>
    %258 = vector.extract_strided_slice %247 {offsets = [0, 384], sizes = [4, 128], strides = [1, 1]} : vector<4x512xf32> to vector<4x128xf32>
    %259 = arith.negf %258 : vector<4x128xf32>
    %260 = math.exp %259 : vector<4x128xf32>
    %cst_196 = arith.constant 1.000000e+00 : f32
    %261 = vector.broadcast %cst_196 : f32 to vector<4x128xf32>
    %262 = arith.addf %261, %260 : vector<4x128xf32>
    %263 = arith.divf %261, %262 : vector<4x128xf32>
    %264 = arith.mulf %255, %239 : vector<4x128xf32>
    %265 = arith.mulf %254, %257 : vector<4x128xf32>
    %266 = arith.addf %264, %265 : vector<4x128xf32>
    %267 = math.tanh %266 : vector<4x128xf32>
    %268 = arith.mulf %263, %267 : vector<4x128xf32>
    %c12_197 = arith.constant 12 : index
    %c0_198 = arith.constant 0 : index
    %269 = vector.load %arg11[%c12_197, %c0_198] : memref<32x128xf32, #tpu.memory_space<vmem>>, vector<4x128xf32>
    tpu.vector_store %arg11[%c12_197, %c0_198], %268 {strides = array<i32>} : memref<32x128xf32, #tpu.memory_space<vmem>>, vector<4x128xf32>,
    %c16_199 = arith.constant 16 : index
    %c0_200 = arith.constant 0 : index
    %270 = vector.load %arg10[%c16_199, %c0_200] : memref<32x512xf32, #tpu.memory_space<vmem>>, vector<4x512xf32>
    %271 = arith.truncf %268 : vector<4x128xf32> to vector<4x128xbf16>
    %c0_201 = arith.constant 0 : index
    %c0_202 = arith.constant 0 : index
    %272 = vector.load %arg2[%c0_201, %c0_202] : memref<128x512xbf16, #tpu.memory_space<vmem>>, vector<128x512xbf16>
    %cst_203 = arith.constant dense<0.000000e+00> : vector<4x512xf32>
    %273 = tpu.matmul %271, %272, %cst_203 {dimension_numbers = #tpu.dot_dimension_numbers<[1], [0], [0], [1], [0, 0, 1, 1], [], []>} : vector<4x128xbf16>, vector<128x512xbf16>, vector<4x512xf32> -> vector<4x512xf32>
    %274 = arith.addf %270, %273 : vector<4x512xf32>
    %275 = vector.extract_strided_slice %274 {offsets = [0, 0], sizes = [4, 256], strides = [1, 1]} : vector<4x512xf32> to vector<4x256xf32>
    %276 = arith.negf %275 : vector<4x256xf32>
    %277 = math.exp %276 : vector<4x256xf32>
    %cst_204 = arith.constant 1.000000e+00 : f32
    %278 = vector.broadcast %cst_204 : f32 to vector<4x256xf32>
    %279 = arith.addf %278, %277 : vector<4x256xf32>
    %280 = arith.divf %278, %279 : vector<4x256xf32>
    %281 = vector.extract_strided_slice %280 {offsets = [0, 0], sizes = [4, 128], strides = [1, 1]} : vector<4x256xf32> to vector<4x128xf32>
    %282 = vector.extract_strided_slice %280 {offsets = [0, 128], sizes = [4, 128], strides = [1, 1]} : vector<4x256xf32> to vector<4x128xf32>
    %283 = vector.extract_strided_slice %274 {offsets = [0, 256], sizes = [4, 128], strides = [1, 1]} : vector<4x512xf32> to vector<4x128xf32>
    %284 = math.tanh %283 : vector<4x128xf32>
    %285 = vector.extract_strided_slice %274 {offsets = [0, 384], sizes = [4, 128], strides = [1, 1]} : vector<4x512xf32> to vector<4x128xf32>
    %286 = arith.negf %285 : vector<4x128xf32>
    %287 = math.exp %286 : vector<4x128xf32>
    %cst_205 = arith.constant 1.000000e+00 : f32
    %288 = vector.broadcast %cst_205 : f32 to vector<4x128xf32>
    %289 = arith.addf %288, %287 : vector<4x128xf32>
    %290 = arith.divf %288, %289 : vector<4x128xf32>
    %291 = arith.mulf %282, %266 : vector<4x128xf32>
    %292 = arith.mulf %281, %284 : vector<4x128xf32>
    %293 = arith.addf %291, %292 : vector<4x128xf32>
    %294 = math.tanh %293 : vector<4x128xf32>
    %295 = arith.mulf %290, %294 : vector<4x128xf32>
    %c16_206 = arith.constant 16 : index
    %c0_207 = arith.constant 0 : index
    %296 = vector.load %arg11[%c16_206, %c0_207] : memref<32x128xf32, #tpu.memory_space<vmem>>, vector<4x128xf32>
    tpu.vector_store %arg11[%c16_206, %c0_207], %295 {strides = array<i32>} : memref<32x128xf32, #tpu.memory_space<vmem>>, vector<4x128xf32>,
    %c20_208 = arith.constant 20 : index
    %c0_209 = arith.constant 0 : index
    %297 = vector.load %arg10[%c20_208, %c0_209] : memref<32x512xf32, #tpu.memory_space<vmem>>, vector<4x512xf32>
    %298 = arith.truncf %295 : vector<4x128xf32> to vector<4x128xbf16>
    %c0_210 = arith.constant 0 : index
    %c0_211 = arith.constant 0 : index
    %299 = vector.load %arg2[%c0_210, %c0_211] : memref<128x512xbf16, #tpu.memory_space<vmem>>, vector<128x512xbf16>
    %cst_212 = arith.constant dense<0.000000e+00> : vector<4x512xf32>
    %300 = tpu.matmul %298, %299, %cst_212 {dimension_numbers = #tpu.dot_dimension_numbers<[1], [0], [0], [1], [0, 0, 1, 1], [], []>} : vector<4x128xbf16>, vector<128x512xbf16>, vector<4x512xf32> -> vector<4x512xf32>
    %301 = arith.addf %297, %300 : vector<4x512xf32>
    %302 = vector.extract_strided_slice %301 {offsets = [0, 0], sizes = [4, 256], strides = [1, 1]} : vector<4x512xf32> to vector<4x256xf32>
    %303 = arith.negf %302 : vector<4x256xf32>
    %304 = math.exp %303 : vector<4x256xf32>
    %cst_213 = arith.constant 1.000000e+00 : f32
    %305 = vector.broadcast %cst_213 : f32 to vector<4x256xf32>
    %306 = arith.addf %305, %304 : vector<4x256xf32>
    %307 = arith.divf %305, %306 : vector<4x256xf32>
    %308 = vector.extract_strided_slice %307 {offsets = [0, 0], sizes = [4, 128], strides = [1, 1]} : vector<4x256xf32> to vector<4x128xf32>
    %309 = vector.extract_strided_slice %307 {offsets = [0, 128], sizes = [4, 128], strides = [1, 1]} : vector<4x256xf32> to vector<4x128xf32>
    %310 = vector.extract_strided_slice %301 {offsets = [0, 256], sizes = [4, 128], strides = [1, 1]} : vector<4x512xf32> to vector<4x128xf32>
    %311 = math.tanh %310 : vector<4x128xf32>
    %312 = vector.extract_strided_slice %301 {offsets = [0, 384], sizes = [4, 128], strides = [1, 1]} : vector<4x512xf32> to vector<4x128xf32>
    %313 = arith.negf %312 : vector<4x128xf32>
    %314 = math.exp %313 : vector<4x128xf32>
    %cst_214 = arith.constant 1.000000e+00 : f32
    %315 = vector.broadcast %cst_214 : f32 to vector<4x128xf32>
    %316 = arith.addf %315, %314 : vector<4x128xf32>
    %317 = arith.divf %315, %316 : vector<4x128xf32>
    %318 = arith.mulf %309, %293 : vector<4x128xf32>
    %319 = arith.mulf %308, %311 : vector<4x128xf32>
    %320 = arith.addf %318, %319 : vector<4x128xf32>
    %321 = math.tanh %320 : vector<4x128xf32>
    %322 = arith.mulf %317, %321 : vector<4x128xf32>
    %c20_215 = arith.constant 20 : index
    %c0_216 = arith.constant 0 : index
    %323 = vector.load %arg11[%c20_215, %c0_216] : memref<32x128xf32, #tpu.memory_space<vmem>>, vector<4x128xf32>
    tpu.vector_store %arg11[%c20_215, %c0_216], %322 {strides = array<i32>} : memref<32x128xf32, #tpu.memory_space<vmem>>, vector<4x128xf32>,
    %c24_217 = arith.constant 24 : index
    %c0_218 = arith.constant 0 : index
    %324 = vector.load %arg10[%c24_217, %c0_218] : memref<32x512xf32, #tpu.memory_space<vmem>>, vector<4x512xf32>
    %325 = arith.truncf %322 : vector<4x128xf32> to vector<4x128xbf16>
    %c0_219 = arith.constant 0 : index
    %c0_220 = arith.constant 0 : index
    %326 = vector.load %arg2[%c0_219, %c0_220] : memref<128x512xbf16, #tpu.memory_space<vmem>>, vector<128x512xbf16>
    %cst_221 = arith.constant dense<0.000000e+00> : vector<4x512xf32>
    %327 = tpu.matmul %325, %326, %cst_221 {dimension_numbers = #tpu.dot_dimension_numbers<[1], [0], [0], [1], [0, 0, 1, 1], [], []>} : vector<4x128xbf16>, vector<128x512xbf16>, vector<4x512xf32> -> vector<4x512xf32>
    %328 = arith.addf %324, %327 : vector<4x512xf32>
    %329 = vector.extract_strided_slice %328 {offsets = [0, 0], sizes = [4, 256], strides = [1, 1]} : vector<4x512xf32> to vector<4x256xf32>
    %330 = arith.negf %329 : vector<4x256xf32>
    %331 = math.exp %330 : vector<4x256xf32>
    %cst_222 = arith.constant 1.000000e+00 : f32
    %332 = vector.broadcast %cst_222 : f32 to vector<4x256xf32>
    %333 = arith.addf %332, %331 : vector<4x256xf32>
    %334 = arith.divf %332, %333 : vector<4x256xf32>
    %335 = vector.extract_strided_slice %334 {offsets = [0, 0], sizes = [4, 128], strides = [1, 1]} : vector<4x256xf32> to vector<4x128xf32>
    %336 = vector.extract_strided_slice %334 {offsets = [0, 128], sizes = [4, 128], strides = [1, 1]} : vector<4x256xf32> to vector<4x128xf32>
    %337 = vector.extract_strided_slice %328 {offsets = [0, 256], sizes = [4, 128], strides = [1, 1]} : vector<4x512xf32> to vector<4x128xf32>
    %338 = math.tanh %337 : vector<4x128xf32>
    %339 = vector.extract_strided_slice %328 {offsets = [0, 384], sizes = [4, 128], strides = [1, 1]} : vector<4x512xf32> to vector<4x128xf32>
    %340 = arith.negf %339 : vector<4x128xf32>
    %341 = math.exp %340 : vector<4x128xf32>
    %cst_223 = arith.constant 1.000000e+00 : f32
    %342 = vector.broadcast %cst_223 : f32 to vector<4x128xf32>
    %343 = arith.addf %342, %341 : vector<4x128xf32>
    %344 = arith.divf %342, %343 : vector<4x128xf32>
    %345 = arith.mulf %336, %320 : vector<4x128xf32>
    %346 = arith.mulf %335, %338 : vector<4x128xf32>
    %347 = arith.addf %345, %346 : vector<4x128xf32>
    %348 = math.tanh %347 : vector<4x128xf32>
    %349 = arith.mulf %344, %348 : vector<4x128xf32>
    %c24_224 = arith.constant 24 : index
    %c0_225 = arith.constant 0 : index
    %350 = vector.load %arg11[%c24_224, %c0_225] : memref<32x128xf32, #tpu.memory_space<vmem>>, vector<4x128xf32>
    tpu.vector_store %arg11[%c24_224, %c0_225], %349 {strides = array<i32>} : memref<32x128xf32, #tpu.memory_space<vmem>>, vector<4x128xf32>,
    %c28_226 = arith.constant 28 : index
    %c0_227 = arith.constant 0 : index
    %351 = vector.load %arg10[%c28_226, %c0_227] : memref<32x512xf32, #tpu.memory_space<vmem>>, vector<4x512xf32>
    %352 = arith.truncf %349 : vector<4x128xf32> to vector<4x128xbf16>
    %c0_228 = arith.constant 0 : index
    %c0_229 = arith.constant 0 : index
    %353 = vector.load %arg2[%c0_228, %c0_229] : memref<128x512xbf16, #tpu.memory_space<vmem>>, vector<128x512xbf16>
    %cst_230 = arith.constant dense<0.000000e+00> : vector<4x512xf32>
    %354 = tpu.matmul %352, %353, %cst_230 {dimension_numbers = #tpu.dot_dimension_numbers<[1], [0], [0], [1], [0, 0, 1, 1], [], []>} : vector<4x128xbf16>, vector<128x512xbf16>, vector<4x512xf32> -> vector<4x512xf32>
    %355 = arith.addf %351, %354 : vector<4x512xf32>
    %356 = vector.extract_strided_slice %355 {offsets = [0, 0], sizes = [4, 256], strides = [1, 1]} : vector<4x512xf32> to vector<4x256xf32>
    %357 = arith.negf %356 : vector<4x256xf32>
    %358 = math.exp %357 : vector<4x256xf32>
    %cst_231 = arith.constant 1.000000e+00 : f32
    %359 = vector.broadcast %cst_231 : f32 to vector<4x256xf32>
    %360 = arith.addf %359, %358 : vector<4x256xf32>
    %361 = arith.divf %359, %360 : vector<4x256xf32>
    %362 = vector.extract_strided_slice %361 {offsets = [0, 0], sizes = [4, 128], strides = [1, 1]} : vector<4x256xf32> to vector<4x128xf32>
    %363 = vector.extract_strided_slice %361 {offsets = [0, 128], sizes = [4, 128], strides = [1, 1]} : vector<4x256xf32> to vector<4x128xf32>
    %364 = vector.extract_strided_slice %355 {offsets = [0, 256], sizes = [4, 128], strides = [1, 1]} : vector<4x512xf32> to vector<4x128xf32>
    %365 = math.tanh %364 : vector<4x128xf32>
    %366 = vector.extract_strided_slice %355 {offsets = [0, 384], sizes = [4, 128], strides = [1, 1]} : vector<4x512xf32> to vector<4x128xf32>
    %367 = arith.negf %366 : vector<4x128xf32>
    %368 = math.exp %367 : vector<4x128xf32>
    %cst_232 = arith.constant 1.000000e+00 : f32
    %369 = vector.broadcast %cst_232 : f32 to vector<4x128xf32>
    %370 = arith.addf %369, %368 : vector<4x128xf32>
    %371 = arith.divf %369, %370 : vector<4x128xf32>
    %372 = arith.mulf %363, %347 : vector<4x128xf32>
    %373 = arith.mulf %362, %365 : vector<4x128xf32>
    %374 = arith.addf %372, %373 : vector<4x128xf32>
    %375 = math.tanh %374 : vector<4x128xf32>
    %376 = arith.mulf %371, %375 : vector<4x128xf32>
    %c28_233 = arith.constant 28 : index
    %c0_234 = arith.constant 0 : index
    %377 = vector.load %arg11[%c28_233, %c0_234] : memref<32x128xf32, #tpu.memory_space<vmem>>, vector<4x128xf32>
    tpu.vector_store %arg11[%c28_233, %c0_234], %376 {strides = array<i32>} : memref<32x128xf32, #tpu.memory_space<vmem>>, vector<4x128xf32>,
    %c0_235 = arith.constant 0 : index
    %c0_236 = arith.constant 0 : index
    %378 = vector.load %arg8[%c0_235, %c0_236] : memref<4x128xf32, #tpu.memory_space<vmem>>, vector<4x128xf32>
    tpu.vector_store %arg8[%c0_235, %c0_236], %376 {strides = array<i32>} : memref<4x128xf32, #tpu.memory_space<vmem>>, vector<4x128xf32>,
    %c0_237 = arith.constant 0 : index
    %c0_238 = arith.constant 0 : index
    %379 = vector.load %arg9[%c0_237, %c0_238] : memref<4x128xf32, #tpu.memory_space<vmem>>, vector<4x128xf32>
    tpu.vector_store %arg9[%c0_237, %c0_238], %374 {strides = array<i32>} : memref<4x128xf32, #tpu.memory_space<vmem>>, vector<4x128xf32>,
    %c0_239 = arith.constant 0 : index
    %c0_240 = arith.constant 0 : index
    %380 = vector.load %arg11[%c0_239, %c0_240] : memref<32x128xf32, #tpu.memory_space<vmem>>, vector<32x128xf32>
    %381 = arith.truncf %380 : vector<32x128xf32> to vector<32x128xbf16>
    %c0_241 = arith.constant 0 : index
    %c0_242 = arith.constant 0 : index
    %382 = vector.load %arg3[%c0_241, %c0_242] : memref<128x128xbf16, #tpu.memory_space<vmem>>, vector<128x128xbf16>
    %cst_243 = arith.constant dense<0.000000e+00> : vector<32x128xf32>
    %383 = tpu.matmul %381, %382, %cst_243 {dimension_numbers = #tpu.dot_dimension_numbers<[1], [0], [0], [1], [0, 0, 1, 1], [], []>} : vector<32x128xbf16>, vector<128x128xbf16>, vector<32x128xf32> -> vector<32x128xf32>
    %c0_244 = arith.constant 0 : index
    %c0_245 = arith.constant 0 : index
    %384 = vector.load %arg4[%c0_244, %c0_245] : memref<1x128xf32, #tpu.memory_space<vmem>>, vector<1x128xf32>
    %385 = vector.broadcast %384 : vector<1x128xf32> to vector<32x128xf32>
    %386 = arith.addf %383, %385 : vector<32x128xf32>
    %c0_246 = arith.constant 0 : index
    %c0_247 = arith.constant 0 : index
    %387 = vector.load %arg7[%c0_246, %c0_247] : memref<32x128xf32, #tpu.memory_space<vmem>>, vector<32x128xf32>
    tpu.vector_store %arg7[%c0_246, %c0_247], %386 {strides = array<i32>} : memref<32x128xf32, #tpu.memory_space<vmem>>, vector<32x128xf32>,
    return
  }
}

</mosaic_0001>

<llo_original>
// kernel: tpu_custom_call.1
$region0: #{tpu_custom_call.1}
  #allocation0 [shape = 'u32[]', space=smem, size = 0x4, offset = 0x4, fixed_abs, tag = 'smem constant byte address 0x4 - core index']
  #allocation1 [shape = 'u32[144,128]{1,0:T(1,128)}', space=vmem, size = 0x12000, scoped, tag = 'internal scratch']
  #allocation2 [shape = 'f32[32,512]{1,0:T(8,128)}', space=vmem, size = 0x10000, scoped, tag = 'scratch operand']
  #allocation3 [shape = 'f32[32,128]{1,0:T(8,128)}', space=vmem, size = 0x4000, scoped, tag = 'scratch operand']
  %s0 = inlined_call_operand.vmem [shape: s32[8,4], index: 0, kind: input, shape index: {}]
  %s1 = inlined_call_operand.hbm [shape: f32[30,1,512], index: 1, kind: input, shape index: {}]
  %s2 = inlined_call_operand.hbm [shape: bf16[128,512], index: 2, kind: input, shape index: {}]
  %s3 = inlined_call_operand.hbm [shape: bf16[128,128], index: 3, kind: input, shape index: {}]
  %s4 = inlined_call_operand.vmem [shape: f32[1,128], index: 4, kind: input, shape index: {}]
  %s5 = inlined_call_operand.vmem [shape: f32[4,128], index: 5, kind: input, shape index: {}]
  %s6 = inlined_call_operand.vmem [shape: f32[4,128], index: 6, kind: input, shape index: {}]
  %s7 = inlined_call_operand.hbm [shape: f32[32,128], index: 7, kind: output, shape index: {0}]
  %s8 = inlined_call_operand.hbm [shape: f32[4,128], index: 8, kind: output, shape index: {1}]
  %s9 = inlined_call_operand.hbm [shape: f32[4,128], index: 9, kind: output, shape index: {2}]
  %10 = xla_tuple %s7, %s8, %s9
  %s11 = sld [smem:[#allocation0]]
  $region70: #{tpu_custom_call.1} parent=0
    _
  %s13 = ssub.s32 1, %s11
  %s14 = scalar_select 0, %s13, %s11
  $region1: #{tpu_custom_call.1} parent=0
    #allocation4 [shape = 'u8[4096]{0}', space=smem, size = 0x1000, scoped, tag = 'input window, operand 0, single buffered']
    #allocation5 [shape = 's32[1]{0}', space=sflag, size = 0x4, scoped, tag = 'scoped memory for tpu_custom_call.1']
    #allocation6 [shape = 's32[1]{0}', space=sflag, size = 0x4, scoped, tag = 'scoped memory for tpu_custom_call.1']
    #allocation7 [shape = 's32[1]{0}', space=sflag, size = 0x4, scoped, tag = 'scoped memory for tpu_custom_call.1']
    #allocation8 [shape = 'u8[61440]{0}', space=vmem, size = 0xf000, scoped, tag = 'input window, operand 1, single buffered']
    #allocation9 [shape = 'u8[131072]{0}', space=vmem, size = 0x20000, scoped, tag = 'input window, operand 2, single buffered']
    #allocation10 [shape = 's32[1]{0}', space=sflag, size = 0x4, scoped, tag = 'scoped memory for tpu_custom_call.1']
    #allocation11 [shape = 'u8[32768]{0}', space=vmem, size = 0x8000, scoped, tag = 'input window, operand 3, single buffered']
    #allocation12 [shape = 'u8[16384]{0}', space=vmem, size = 0x4000, scoped, tag = 'output window, operand 0, single buffered']
    #allocation13 [shape = 'u8[2048]{0}', space=vmem, size = 0x800, scoped, tag = 'output window, operand 1, single buffered']
    #allocation14 [shape = 's32[1]{0}', space=sflag, size = 0x4, scoped, tag = 'scoped memory for tpu_custom_call.1']
    #allocation15 [shape = 'u8[2048]{0}', space=vmem, size = 0x800, scoped, tag = 'output window, operand 2, single buffered']
    %15 = vsyncpa [#allocation7], 0
    %16 = vsyncpa [#allocation5], 0
    %17 = vsyncpa [#allocation10], 0
    %18 = vsyncpa [#allocation6], 0
    %19 = vsyncpa [#allocation14], 0
    // Predicated region
    $region2: #{tpu_custom_call.1} parent=1 // pred_check
      _
    $region3: #{tpu_custom_call.1} parent=1 // pred_check_branch
      %21 = sbr.rel (0) target = $region5
    $region4: #{tpu_custom_call.1} parent=1 // pred_region
      %s23 = ssub.s32 128, 128
      %24 = vsyncadd [#allocation7], %s23
      %s26 = sshll.u32 %s0, 4
      %s27 = int_to_ptr.vmem [resolvable:$true] %s26
      %29 = dma.vmem_to_smem %s27, 128, [#allocation4], [#allocation7]
    $region5: #{tpu_custom_call.1} parent=1 // pred_fallthru
      _
    // Predicated region
    $region6: #{tpu_custom_call.1} parent=1 // pred_check
      _
    $region7: #{tpu_custom_call.1} parent=1 // pred_check_branch
      %31 = sbr.rel (0) target = $region9
    $region8: #{tpu_custom_call.1} parent=1 // pred_region
      %s33 = ssub.s32 1920, 1920
      %34 = vsyncadd [#allocation5], %s33
      %s35 = sshll.u32 [#allocation8], 4
      %s36 = int_to_ptr.vmem [resolvable:$true] %s35
      %41 = dma.hbm_to_vmem [thread:$0]  %s1, 1920, %s36, [#allocation5], 64, 64, 4
    $region9: #{tpu_custom_call.1} parent=1 // pred_fallthru
      _
    // Predicated region
    $region10: #{tpu_custom_call.1} parent=1 // pred_check
      _
    $region11: #{tpu_custom_call.1} parent=1 // pred_check_branch
      %43 = sbr.rel (0) target = $region13
    $region12: #{tpu_custom_call.1} parent=1 // pred_region
      %s45 = ssub.s32 4096, 4096
      %46 = vsyncadd [#allocation10], %s45
      %s47 = sshll.u32 [#allocation9], 4
      %s48 = int_to_ptr.vmem [resolvable:$true] %s47
      %53 = dma.hbm_to_vmem [thread:$0]  %s2, 4096, %s48, [#allocation10], 256, 256, 16
    $region13: #{tpu_custom_call.1} parent=1 // pred_fallthru
      _
    // Predicated region
    $region14: #{tpu_custom_call.1} parent=1 // pred_check
      _
    $region15: #{tpu_custom_call.1} parent=1 // pred_check_branch
      %55 = sbr.rel (0) target = $region17
    $region16: #{tpu_custom_call.1} parent=1 // pred_region
      %s57 = ssub.s32 1024, 1024
      %58 = vsyncadd [#allocation10], %s57
      %s59 = sshll.u32 [#allocation11], 4
      %s60 = int_to_ptr.vmem [resolvable:$true] %s59
      %65 = dma.hbm_to_vmem [thread:$0]  %s3, 1024, %s60, [#allocation10], 64, 64, 4
    $region17: #{tpu_custom_call.1} parent=1 // pred_fallthru
      _
    // Predicated region
    $region18: #{tpu_custom_call.1} parent=1 // pred_check
      _
    $region19: #{tpu_custom_call.1} parent=1 // pred_check_branch
      %67 = sbr.rel (0) target = $region21
    $region20: #{tpu_custom_call.1} parent=1 // pred_region
      _
    $region21: #{tpu_custom_call.1} parent=1 // pred_fallthru
      _
    // Predicated region
    $region22: #{tpu_custom_call.1} parent=1 // pred_check
      _
    $region23: #{tpu_custom_call.1} parent=1 // pred_check_branch
      %69 = sbr.rel (0) target = $region25
    $region24: #{tpu_custom_call.1} parent=1 // pred_region
      _
    $region25: #{tpu_custom_call.1} parent=1 // pred_fallthru
      _
    // Predicated region
    $region26: #{tpu_custom_call.1} parent=1 // pred_check
      _
    $region27: #{tpu_custom_call.1} parent=1 // pred_check_branch
      %71 = sbr.rel (0) target = $region29
    $region28: #{tpu_custom_call.1} parent=1 // pred_region
      _
    $region29: #{tpu_custom_call.1} parent=1 // pred_fallthru
      _
    // Predicated region
    $region30: #{tpu_custom_call.1} parent=1 // pred_check
      _
    $region31: #{tpu_custom_call.1} parent=1 // pred_check_branch
      %73 = sbr.rel (0) target = $region33
    $region32: #{tpu_custom_call.1} parent=1 // pred_region
      %74 = dma.done [#allocation7], 128
    $region33: #{tpu_custom_call.1} parent=1 // pred_fallthru
      _
    // Predicated region
    $region34: #{tpu_custom_call.1} parent=1 // pred_check
      _
    $region35: #{tpu_custom_call.1} parent=1 // pred_check_branch
      %76 = sbr.rel (0) target = $region37
    $region36: #{tpu_custom_call.1} parent=1 // pred_region
      %77 = dma.done [#allocation5], 1920
    $region37: #{tpu_custom_call.1} parent=1 // pred_fallthru
      _
    // Predicated region
    $region38: #{tpu_custom_call.1} parent=1 // pred_check
      _
    $region39: #{tpu_custom_call.1} parent=1 // pred_check_branch
      %79 = sbr.rel (0) target = $region41
    $region40: #{tpu_custom_call.1} parent=1 // pred_region
      %80 = dma.done [#allocation10], 4096
    $region41: #{tpu_custom_call.1} parent=1 // pred_fallthru
      _
    // Predicated region
    $region42: #{tpu_custom_call.1} parent=1 // pred_check
      _
    $region43: #{tpu_custom_call.1} parent=1 // pred_check_branch
      %82 = sbr.rel (0) target = $region45
    $region44: #{tpu_custom_call.1} parent=1 // pred_region
      %83 = dma.done [#allocation10], 1024
    $region45: #{tpu_custom_call.1} parent=1 // pred_fallthru
      _
    %84 = sfence
    %s86 = sld [smem:[#allocation4]]
    %s87 = smul.u32 %s86, 4
    %s88 = scalar_lea.vmem [#allocation8], %s87
    %v89 = vld [vmem:[%s88] sm:$0xf]
    %v90 = vlaneseq
    %vm91 = vcmp.ge.s32.totalorder %v90, 0
    %vm92 = vcmp.lt.s32.totalorder %v90, 512
    %vm93 = vmand %vm91, %vm92
    %94 = vst.msk [vmem:[#allocation2] ss:$8 sm:$0xf] %vm93, %v89
    %95 = vst.msk [vmem:[#allocation2] ss:$8 sm:$0x0] %vm93, %v89
    %s96 = sld [smem:[#allocation4 + $0x1]]
    %s97 = smul.u32 %s96, 4
    %s98 = scalar_lea.vmem [#allocation8], %s97
    %v99 = vld [vmem:[%s98] sm:$0xf]
    %s100 = scalar_lea.vmem [#allocation2], 1
    %101 = vst.msk [vmem:[%s100] ss:$8 sm:$0xf] %vm93, %v99
    %102 = vst.msk [vmem:[%s100] ss:$8 sm:$0x0] %vm93, %v99
    %s103 = sld [smem:[#allocation4 + $0x2]]
    %s104 = smul.u32 %s103, 4
    %s105 = scalar_lea.vmem [#allocation8], %s104
    %v106 = vld [vmem:[%s105] sm:$0xf]
    %s107 = scalar_lea.vmem [#allocation2], 2
    %108 = vst.msk [vmem:[%s107] ss:$8 sm:$0xf] %vm93, %v106
    %109 = vst.msk [vmem:[%s107] ss:$8 sm:$0x0] %vm93, %v106
    %s110 = sld [smem:[#allocation4 + $0x3]]
    %s111 = smul.u32 %s110, 4
    %s112 = scalar_lea.vmem [#allocation8], %s111
    %v113 = vld [vmem:[%s112] sm:$0xf]
    %s114 = scalar_lea.vmem [#allocation2], 3
    %115 = vst.msk [vmem:[%s114] ss:$8 sm:$0xf] %vm93, %v113
    %116 = vst.msk [vmem:[%s114] ss:$8 sm:$0x0] %vm93, %v113
    %s117 = sld [smem:[#allocation4 + $0x80]]
    %s118 = smul.u32 %s117, 4
    %s119 = scalar_lea.vmem [#allocation8], %s118
    %v120 = vld [vmem:[%s119] sm:$0xf]
    %s121 = scalar_lea.vmem [#allocation2], 4
    %122 = vst.msk [vmem:[%s121] ss:$8 sm:$0xf] %vm93, %v120
    %123 = vst.msk [vmem:[%s121] ss:$8 sm:$0x0] %vm93, %v120
    %s124 = sld [smem:[#allocation4 + $0x81]]
    %s125 = smul.u32 %s124, 4
    %s126 = scalar_lea.vmem [#allocation8], %s125
    %v127 = vld [vmem:[%s126] sm:$0xf]
    %s128 = scalar_lea.vmem [#allocation2], 5
    %129 = vst.msk [vmem:[%s128] ss:$8 sm:$0xf] %vm93, %v127
    %130 = vst.msk [vmem:[%s128] ss:$8 sm:$0x0] %vm93, %v127
    %s131 = sld [smem:[#allocation4 + $0x82]]
    %s132 = smul.u32 %s131, 4
    %s133 = scalar_lea.vmem [#allocation8], %s132
    %v134 = vld [vmem:[%s133] sm:$0xf]
    %s135 = scalar_lea.vmem [#allocation2], 6
    %136 = vst.msk [vmem:[%s135] ss:$8 sm:$0xf] %vm93, %v134
    %137 = vst.msk [vmem:[%s135] ss:$8 sm:$0x0] %vm93, %v134
    %s138 = sld [smem:[#allocation4 + $0x83]]
    %s139 = smul.u32 %s138, 4
    %s140 = scalar_lea.vmem [#allocation8], %s139
    %v141 = vld [vmem:[%s140] sm:$0xf]
    %s142 = scalar_lea.vmem [#allocation2], 7
    %143 = vst.msk [vmem:[%s142] ss:$8 sm:$0xf] %vm93, %v141
    %144 = vst.msk [vmem:[%s142] ss:$8 sm:$0x0] %vm93, %v141
    %s145 = sld [smem:[#allocation4 + $0x100]]
    %s146 = smul.u32 %s145, 4
    %s147 = scalar_lea.vmem [#allocation8], %s146
    %v148 = vld [vmem:[%s147] sm:$0xf]
    %s149 = scalar_lea.vmem [#allocation2], 32
    %150 = vst.msk [vmem:[%s149] ss:$8 sm:$0xf] %vm93, %v148
    %151 = vst.msk [vmem:[%s149] ss:$8 sm:$0x0] %vm93, %v148
    %s152 = sld [smem:[#allocation4 + $0x101]]
    %s153 = smul.u32 %s152, 4
    %s154 = scalar_lea.vmem [#allocation8], %s153
    %v155 = vld [vmem:[%s154] sm:$0xf]
    %s156 = scalar_lea.vmem [#allocation2], 33
    %157 = vst.msk [vmem:[%s156] ss:$8 sm:$0xf] %vm93, %v155
    %158 = vst.msk [vmem:[%s156] ss:$8 sm:$0x0] %vm93, %v155
    %s159 = sld [smem:[#allocation4 + $0x102]]
    %s160 = smul.u32 %s159, 4
    %s161 = scalar_lea.vmem [#allocation8], %s160
    %v162 = vld [vmem:[%s161] sm:$0xf]
    %s163 = scalar_lea.vmem [#allocation2], 34
    %164 = vst.msk [vmem:[%s163] ss:$8 sm:$0xf] %vm93, %v162
    %165 = vst.msk [vmem:[%s163] ss:$8 sm:$0x0] %vm93, %v162
    %s166 = sld [smem:[#allocation4 + $0x103]]
    %s167 = smul.u32 %s166, 4
    %s168 = scalar_lea.vmem [#allocation8], %s167
    %v169 = vld [vmem:[%s168] sm:$0xf]
    %s170 = scalar_lea.vmem [#allocation2], 35
    %171 = vst.msk [vmem:[%s170] ss:$8 sm:$0xf] %vm93, %v169
    %172 = vst.msk [vmem:[%s170] ss:$8 sm:$0x0] %vm93, %v169
    %s173 = sld [smem:[#allocation4 + $0x180]]
    %s174 = smul.u32 %s173, 4
    %s175 = scalar_lea.vmem [#allocation8], %s174
    %v176 = vld [vmem:[%s175] sm:$0xf]
    %s177 = scalar_lea.vmem [#allocation2], 36
    %178 = vst.msk [vmem:[%s177] ss:$8 sm:$0xf] %vm93, %v176
    %179 = vst.msk [vmem:[%s177] ss:$8 sm:$0x0] %vm93, %v176
    %s180 = sld [smem:[#allocation4 + $0x181]]
    %s181 = smul.u32 %s180, 4
    %s182 = scalar_lea.vmem [#allocation8], %s181
    %v183 = vld [vmem:[%s182] sm:$0xf]
    %s184 = scalar_lea.vmem [#allocation2], 37
    %185 = vst.msk [vmem:[%s184] ss:$8 sm:$0xf] %vm93, %v183
    %186 = vst.msk [vmem:[%s184] ss:$8 sm:$0x0] %vm93, %v183
    %s187 = sld [smem:[#allocation4 + $0x182]]
    %s188 = smul.u32 %s187, 4
    %s189 = scalar_lea.vmem [#allocation8], %s188
    %v190 = vld [vmem:[%s189] sm:$0xf]
    %s191 = scalar_lea.vmem [#allocation2], 38
    %192 = vst.msk [vmem:[%s191] ss:$8 sm:$0xf] %vm93, %v190
    %193 = vst.msk [vmem:[%s191] ss:$8 sm:$0x0] %vm93, %v190
    %s194 = sld [smem:[#allocation4 + $0x183]]
    %s195 = smul.u32 %s194, 4
    %s196 = scalar_lea.vmem [#allocation8], %s195
    %v197 = vld [vmem:[%s196] sm:$0xf]
    %s198 = scalar_lea.vmem [#allocation2], 39
    %199 = vst.msk [vmem:[%s198] ss:$8 sm:$0xf] %vm93, %v197
    %200 = vst.msk [vmem:[%s198] ss:$8 sm:$0x0] %vm93, %v197
    %s201 = sld [smem:[#allocation4 + $0x200]]
    %s202 = smul.u32 %s201, 4
    %s203 = scalar_lea.vmem [#allocation8], %s202
    %v204 = vld [vmem:[%s203] sm:$0xf]
    %s205 = scalar_lea.vmem [#allocation2], 64
    %206 = vst.msk [vmem:[%s205] ss:$8 sm:$0xf] %vm93, %v204
    %207 = vst.msk [vmem:[%s205] ss:$8 sm:$0x0] %vm93, %v204
    %s208 = sld [smem:[#allocation4 + $0x201]]
    %s209 = smul.u32 %s208, 4
    %s210 = scalar_lea.vmem [#allocation8], %s209
    %v211 = vld [vmem:[%s210] sm:$0xf]
    %s212 = scalar_lea.vmem [#allocation2], 65
    %213 = vst.msk [vmem:[%s212] ss:$8 sm:$0xf] %vm93, %v211
    %214 = vst.msk [vmem:[%s212] ss:$8 sm:$0x0] %vm93, %v211
    %s215 = sld [smem:[#allocation4 + $0x202]]
    %s216 = smul.u32 %s215, 4
    %s217 = scalar_lea.vmem [#allocation8], %s216
    %v218 = vld [vmem:[%s217] sm:$0xf]
    %s219 = scalar_lea.vmem [#allocation2], 66
    %220 = vst.msk [vmem:[%s219] ss:$8 sm:$0xf] %vm93, %v218
    %221 = vst.msk [vmem:[%s219] ss:$8 sm:$0x0] %vm93, %v218
    %s222 = sld [smem:[#allocation4 + $0x203]]
    %s223 = smul.u32 %s222, 4
    %s224 = scalar_lea.vmem [#allocation8], %s223
    %v225 = vld [vmem:[%s224] sm:$0xf]
    %s226 = scalar_lea.vmem [#allocation2], 67
    %227 = vst.msk [vmem:[%s226] ss:$8 sm:$0xf] %vm93, %v225
    %228 = vst.msk [vmem:[%s226] ss:$8 sm:$0x0] %vm93, %v225
    %s229 = sld [smem:[#allocation4 + $0x280]]
    %s230 = smul.u32 %s229, 4
    %s231 = scalar_lea.vmem [#allocation8], %s230
    %v232 = vld [vmem:[%s231] sm:$0xf]
    %s233 = scalar_lea.vmem [#allocation2], 68
    %234 = vst.msk [vmem:[%s233] ss:$8 sm:$0xf] %vm93, %v232
    %235 = vst.msk [vmem:[%s233] ss:$8 sm:$0x0] %vm93, %v232
    %s236 = sld [smem:[#allocation4 + $0x281]]
    %s237 = smul.u32 %s236, 4
    %s238 = scalar_lea.vmem [#allocation8], %s237
    %v239 = vld [vmem:[%s238] sm:$0xf]
    %s240 = scalar_lea.vmem [#allocation2], 69
    %241 = vst.msk [vmem:[%s240] ss:$8 sm:$0xf] %vm93, %v239
    %242 = vst.msk [vmem:[%s240] ss:$8 sm:$0x0] %vm93, %v239
    %s243 = sld [smem:[#allocation4 + $0x282]]
    %s244 = smul.u32 %s243, 4
    %s245 = scalar_lea.vmem [#allocation8], %s244
    %v246 = vld [vmem:[%s245] sm:$0xf]
    %s247 = scalar_lea.vmem [#allocation2], 70
    %248 = vst.msk [vmem:[%s247] ss:$8 sm:$0xf] %vm93, %v246
    %249 = vst.msk [vmem:[%s247] ss:$8 sm:$0x0] %vm93, %v246
    %s250 = sld [smem:[#allocation4 + $0x283]]
    %s251 = smul.u32 %s250, 4
    %s252 = scalar_lea.vmem [#allocation8], %s251
    %v253 = vld [vmem:[%s252] sm:$0xf]
    %s254 = scalar_lea.vmem [#allocation2], 71
    %255 = vst.msk [vmem:[%s254] ss:$8 sm:$0xf] %vm93, %v253
    %256 = vst.msk [vmem:[%s254] ss:$8 sm:$0x0] %vm93, %v253
    %s257 = sld [smem:[#allocation4 + $0x300]]
    %s258 = smul.u32 %s257, 4
    %s259 = scalar_lea.vmem [#allocation8], %s258
    %v260 = vld [vmem:[%s259] sm:$0xf]
    %s261 = scalar_lea.vmem [#allocation2], 96
    %262 = vst.msk [vmem:[%s261] ss:$8 sm:$0xf] %vm93, %v260
    %263 = vst.msk [vmem:[%s261] ss:$8 sm:$0x0] %vm93, %v260
    %s264 = sld [smem:[#allocation4 + $0x301]]
    %s265 = smul.u32 %s264, 4
    %s266 = scalar_lea.vmem [#allocation8], %s265
    %v267 = vld [vmem:[%s266] sm:$0xf]
    %s268 = scalar_lea.vmem [#allocation2], 97
    %269 = vst.msk [vmem:[%s268] ss:$8 sm:$0xf] %vm93, %v267
    %270 = vst.msk [vmem:[%s268] ss:$8 sm:$0x0] %vm93, %v267
    %s271 = sld [smem:[#allocation4 + $0x302]]
    %s272 = smul.u32 %s271, 4
    %s273 = scalar_lea.vmem [#allocation8], %s272
    %v274 = vld [vmem:[%s273] sm:$0xf]
    %s275 = scalar_lea.vmem [#allocation2], 98
    %276 = vst.msk [vmem:[%s275] ss:$8 sm:$0xf] %vm93, %v274
    %277 = vst.msk [vmem:[%s275] ss:$8 sm:$0x0] %vm93, %v274
    %s278 = sld [smem:[#allocation4 + $0x303]]
    %s279 = smul.u32 %s278, 4
    %s280 = scalar_lea.vmem [#allocation8], %s279
    %v281 = vld [vmem:[%s280] sm:$0xf]
    %s282 = scalar_lea.vmem [#allocation2], 99
    %283 = vst.msk [vmem:[%s282] ss:$8 sm:$0xf] %vm93, %v281
    %284 = vst.msk [vmem:[%s282] ss:$8 sm:$0x0] %vm93, %v281
    %s285 = sld [smem:[#allocation4 + $0x380]]
    %s286 = smul.u32 %s285, 4
    %s287 = scalar_lea.vmem [#allocation8], %s286
    %v288 = vld [vmem:[%s287] sm:$0xf]
    %s289 = scalar_lea.vmem [#allocation2], 100
    %290 = vst.msk [vmem:[%s289] ss:$8 sm:$0xf] %vm93, %v288
    %291 = vst.msk [vmem:[%s289] ss:$8 sm:$0x0] %vm93, %v288
    %s292 = sld [smem:[#allocation4 + $0x381]]
    %s293 = smul.u32 %s292, 4
    %s294 = scalar_lea.vmem [#allocation8], %s293
    %v295 = vld [vmem:[%s294] sm:$0xf]
    %s296 = scalar_lea.vmem [#allocation2], 101
    %297 = vst.msk [vmem:[%s296] ss:$8 sm:$0xf] %vm93, %v295
    %298 = vst.msk [vmem:[%s296] ss:$8 sm:$0x0] %vm93, %v295
    %s299 = sld [smem:[#allocation4 + $0x382]]
    %s300 = smul.u32 %s299, 4
    %s301 = scalar_lea.vmem [#allocation8], %s300
    %v302 = vld [vmem:[%s301] sm:$0xf]
    %s303 = scalar_lea.vmem [#allocation2], 102
    %304 = vst.msk [vmem:[%s303] ss:$8 sm:$0xf] %vm93, %v302
    %305 = vst.msk [vmem:[%s303] ss:$8 sm:$0x0] %vm93, %v302
    %s306 = sld [smem:[#allocation4 + $0x383]]
    %s307 = smul.u32 %s306, 4
    %s308 = scalar_lea.vmem [#allocation8], %s307
    %v309 = vld [vmem:[%s308] sm:$0xf]
    %s310 = scalar_lea.vmem [#allocation2], 103
    %311 = vst.msk [vmem:[%s310] ss:$8 sm:$0xf] %vm93, %v309
    %312 = vst.msk [vmem:[%s310] ss:$8 sm:$0x0] %vm93, %v309
    %v313 = vld [vmem:[%s5] sm:$0xf]
    %v314 = vld [vmem:[%s6] sm:$0xf]
    %v315 = vld [vmem:[#allocation2] sm:$0xf]
    %v316 = vld [vmem:[#allocation2 + $0x8] sm:$0xf]
    %v317 = vld [vmem:[#allocation2 + $0x10] sm:$0xf]
    %v318 = vld [vmem:[#allocation2 + $0x18] sm:$0xf]
    %v319 = vpack.c.bf16 %v313, %v313
    %v320 = vld [vmem:[#allocation9] sm:$0xff]
    %v321 = vld [vmem:[#allocation9 + $0x8] sm:$0xff]
    %v322 = vld [vmem:[#allocation9 + $0x10] sm:$0xff]
    %v323 = vld [vmem:[#allocation9 + $0x18] sm:$0xff]
    %v324 = vld [vmem:[#allocation9 + $0x20] sm:$0xff]
    %v325 = vld [vmem:[#allocation9 + $0x28] sm:$0xff]
    %v326 = vld [vmem:[#allocation9 + $0x30] sm:$0xff]
    %v327 = vld [vmem:[#allocation9 + $0x38] sm:$0xff]
    %v328 = vld [vmem:[#allocation9 + $0x40] sm:$0xff]
    %v329 = vld [vmem:[#allocation9 + $0x48] sm:$0xff]
    %v330 = vld [vmem:[#allocation9 + $0x50] sm:$0xff]
    %v331 = vld [vmem:[#allocation9 + $0x58] sm:$0xff]
    %v332 = vld [vmem:[#allocation9 + $0x60] sm:$0xff]
    %v333 = vld [vmem:[#allocation9 + $0x68] sm:$0xff]
    %v334 = vld [vmem:[#allocation9 + $0x70] sm:$0xff]
    %v335 = vld [vmem:[#allocation9 + $0x78] sm:$0xff]
    %v336 = vld [vmem:[#allocation9 + $0x80] sm:$0xff]
    %v337 = vld [vmem:[#allocation9 + $0x88] sm:$0xff]
    %v338 = vld [vmem:[#allocation9 + $0x90] sm:$0xff]
    %v339 = vld [vmem:[#allocation9 + $0x98] sm:$0xff]
    %v340 = vld [vmem:[#allocation9 + $0xa0] sm:$0xff]
    %v341 = vld [vmem:[#allocation9 + $0xa8] sm:$0xff]
    %v342 = vld [vmem:[#allocation9 + $0xb0] sm:$0xff]
    %v343 = vld [vmem:[#allocation9 + $0xb8] sm:$0xff]
    %v344 = vld [vmem:[#allocation9 + $0xc0] sm:$0xff]
    %v345 = vld [vmem:[#allocation9 + $0xc8] sm:$0xff]
    %v346 = vld [vmem:[#allocation9 + $0xd0] sm:$0xff]
    %v347 = vld [vmem:[#allocation9 + $0xd8] sm:$0xff]
    %v348 = vld [vmem:[#allocation9 + $0xe0] sm:$0xff]
    %v349 = vld [vmem:[#allocation9 + $0xe8] sm:$0xff]
    %v350 = vld [vmem:[#allocation9 + $0xf0] sm:$0xff]
    %v351 = vld [vmem:[#allocation9 + $0xf8] sm:$0xff]
    %v384 = vunpack.c.l.b16 %v320
    %v385 = vunpack.c.h.b16 %v320
    %v386 = vunpack.c.l.b16 %v321
    %v387 = vunpack.c.h.b16 %v321
    %v388 = vunpack.c.l.b16 %v322
    %v389 = vunpack.c.h.b16 %v322
    %v390 = vunpack.c.l.b16 %v323
    %v391 = vunpack.c.h.b16 %v323
    %v392 = vunpack.c.l.b16 %v324
    %v393 = vunpack.c.h.b16 %v324
    %v394 = vunpack.c.l.b16 %v325
    %v395 = vunpack.c.h.b16 %v325
    %v396 = vunpack.c.l.b16 %v326
    %v397 = vunpack.c.h.b16 %v326
    %v398 = vunpack.c.l.b16 %v327
    %v399 = vunpack.c.h.b16 %v327
    %v400 = vunpack.c.l.b16 %v328
    %v401 = vunpack.c.h.b16 %v328
    %v402 = vunpack.c.l.b16 %v329
    %v403 = vunpack.c.h.b16 %v329
    %v404 = vunpack.c.l.b16 %v330
    %v405 = vunpack.c.h.b16 %v330
    %v406 = vunpack.c.l.b16 %v331
    %v407 = vunpack.c.h.b16 %v331
    %v408 = vunpack.c.l.b16 %v332
    %v409 = vunpack.c.h.b16 %v332
    %v410 = vunpack.c.l.b16 %v333
    %v411 = vunpack.c.h.b16 %v333
    %v412 = vunpack.c.l.b16 %v334
    %v413 = vunpack.c.h.b16 %v334
    %v414 = vunpack.c.l.b16 %v335
    %v415 = vunpack.c.h.b16 %v335
    %v416 = vunpack.c.l.b16 %v336
    %v417 = vunpack.c.h.b16 %v336
    %v418 = vunpack.c.l.b16 %v337
    %v419 = vunpack.c.h.b16 %v337
    %v420 = vunpack.c.l.b16 %v338
    %v421 = vunpack.c.h.b16 %v338
    %v422 = vunpack.c.l.b16 %v339
    %v423 = vunpack.c.h.b16 %v339
    %v424 = vunpack.c.l.b16 %v340
    %v425 = vunpack.c.h.b16 %v340
    %v426 = vunpack.c.l.b16 %v341
    %v427 = vunpack.c.h.b16 %v341
    %v428 = vunpack.c.l.b16 %v342
    %v429 = vunpack.c.h.b16 %v342
    %v430 = vunpack.c.l.b16 %v343
    %v431 = vunpack.c.h.b16 %v343
    %v432 = vunpack.c.l.b16 %v344
    %v433 = vunpack.c.h.b16 %v344
    %v434 = vunpack.c.l.b16 %v345
    %v435 = vunpack.c.h.b16 %v345
    %v436 = vunpack.c.l.b16 %v346
    %v437 = vunpack.c.h.b16 %v346
    %v438 = vunpack.c.l.b16 %v347
    %v439 = vunpack.c.h.b16 %v347
    %v440 = vunpack.c.l.b16 %v348
    %v441 = vunpack.c.h.b16 %v348
    %v442 = vunpack.c.l.b16 %v349
    %v443 = vunpack.c.h.b16 %v349
    %v444 = vunpack.c.l.b16 %v350
    %v445 = vunpack.c.h.b16 %v350
    %v446 = vunpack.c.l.b16 %v351
    %v447 = vunpack.c.h.b16 %v351
    %v448 = vpack.c.b16 %v388, %v384
    %v449 = vpack.c.b16 %v389, %v385
    %v450 = vpack.c.b16 %v390, %v386
    %v451 = vpack.c.b16 %v391, %v387
    %v452 = vpack.c.b16 %v396, %v392
    %v453 = vpack.c.b16 %v397, %v393
    %v454 = vpack.c.b16 %v398, %v394
    %v455 = vpack.c.b16 %v399, %v395
    %v456 = vpack.c.b16 %v404, %v400
    %v457 = vpack.c.b16 %v405, %v401
    %v458 = vpack.c.b16 %v406, %v402
    %v459 = vpack.c.b16 %v407, %v403
    %v460 = vpack.c.b16 %v412, %v408
    %v461 = vpack.c.b16 %v413, %v409
    %v462 = vpack.c.b16 %v414, %v410
    %v463 = vpack.c.b16 %v415, %v411
    %v464 = vpack.c.b16 %v420, %v416
    %v465 = vpack.c.b16 %v421, %v417
    %v466 = vpack.c.b16 %v422, %v418
    %v467 = vpack.c.b16 %v423, %v419
    %v468 = vpack.c.b16 %v428, %v424
    %v469 = vpack.c.b16 %v429, %v425
    %v470 = vpack.c.b16 %v430, %v426
    %v471 = vpack.c.b16 %v431, %v427
    %v472 = vpack.c.b16 %v436, %v432
    %v473 = vpack.c.b16 %v437, %v433
    %v474 = vpack.c.b16 %v438, %v434
    %v475 = vpack.c.b16 %v439, %v435
    %v476 = vpack.c.b16 %v444, %v440
    %v477 = vpack.c.b16 %v445, %v441
    %v478 = vpack.c.b16 %v446, %v442
    %v479 = vpack.c.b16 %v447, %v443
    %512 = vmatprep.subr.bf16.mxu0 %v449
    %513 = vmatpush1.bf16.msra.mxu0 %v448
    %514 = vmatprep.subr.bf16.mxu0 %v453
    %515 = vmatpush1.bf16.msra.mxu0 %v452
    %516 = vmatprep.subr.bf16.mxu0 %v457
    %517 = vmatpush1.bf16.msra.mxu0 %v456
    %518 = vmatprep.subr.bf16.mxu0 %v461
    %519 = vmatpush1.bf16.msra.mxu0 %v460
    %520 = vmatprep.subr.bf16.mxu0 %v465
    %521 = vmatpush1.bf16.msra.mxu0 %v464
    %522 = vmatprep.subr.bf16.mxu0 %v469
    %523 = vmatpush1.bf16.msra.mxu0 %v468
    %524 = vmatprep.subr.bf16.mxu0 %v473
    %525 = vmatpush1.bf16.msra.mxu0 %v472
    %526 = vmatprep.subr.bf16.mxu0 %v477
    %527 = vmatpush1.bf16.msra.mxu0 %v476
    %528 = vmatprep.subr.bf16.mxu0 0
    %529 = vmatpush1.bf16.msra.mxu0 0
    %530 = vmatprep.subr.bf16.mxu0 0
    %531 = vmatpush1.bf16.msra.mxu0 0
    %532 = vmatprep.subr.bf16.mxu0 0
    %533 = vmatpush1.bf16.msra.mxu0 0
    %534 = vmatprep.subr.bf16.mxu0 0
    %535 = vmatpush1.bf16.msra.mxu0 0
    %536 = vmatprep.subr.bf16.mxu0 0
    %537 = vmatpush1.bf16.msra.mxu0 0
    %538 = vmatprep.subr.bf16.mxu0 0
    %539 = vmatpush1.bf16.msra.mxu0 0
    %540 = vmatprep.subr.bf16.mxu0 0
    %541 = vmatpush1.bf16.msra.mxu0 0
    %542 = vmatprep.subr.bf16.mxu0 0
    %543 = vmatpush1.bf16.msra.mxu0 0
    %544 = vmatprep.mubr.bf16.mxu0 0
    %545 = vmatmul.mubr.bf16.gmra.mrb[0].mxu0 %v319
    %v546 = vpop.f32.mrb[0].mxu0
    %v547 = vadd.f32 0.0, %v546
    %v548 = vpop.f32.mrb[0].mxu0
    %v549 = vadd.f32 0.0, %v548
    %v550 = vpop.f32.mrb[0].mxu0
    %v551 = vpop.f32.mrb[0].mxu0
    %552 = vdwg.mxu0
    %553 = vmatprep.subr.bf16.mxu0 %v451
    %554 = vmatpush1.bf16.msra.mxu0 %v450
    %555 = vmatprep.subr.bf16.mxu0 %v455
    %556 = vmatpush1.bf16.msra.mxu0 %v454
    %557 = vmatprep.subr.bf16.mxu0 %v459
    %558 = vmatpush1.bf16.msra.mxu0 %v458
    %559 = vmatprep.subr.bf16.mxu0 %v463
    %560 = vmatpush1.bf16.msra.mxu0 %v462
    %561 = vmatprep.subr.bf16.mxu0 %v467
    %562 = vmatpush1.bf16.msra.mxu0 %v466
    %563 = vmatprep.subr.bf16.mxu0 %v471
    %564 = vmatpush1.bf16.msra.mxu0 %v470
    %565 = vmatprep.subr.bf16.mxu0 %v475
    %566 = vmatpush1.bf16.msra.mxu0 %v474
    %567 = vmatprep.subr.bf16.mxu0 %v479
    %568 = vmatpush1.bf16.msra.mxu0 %v478
    %569 = vmatprep.subr.bf16.mxu0 0
    %570 = vmatpush1.bf16.msra.mxu0 0
    %571 = vmatprep.subr.bf16.mxu0 0
    %572 = vmatpush1.bf16.msra.mxu0 0
    %573 = vmatprep.subr.bf16.mxu0 0
    %574 = vmatpush1.bf16.msra.mxu0 0
    %575 = vmatprep.subr.bf16.mxu0 0
    %576 = vmatpush1.bf16.msra.mxu0 0
    %577 = vmatprep.subr.bf16.mxu0 0
    %578 = vmatpush1.bf16.msra.mxu0 0
    %579 = vmatprep.subr.bf16.mxu0 0
    %580 = vmatpush1.bf16.msra.mxu0 0
    %581 = vmatprep.subr.bf16.mxu0 0
    %582 = vmatpush1.bf16.msra.mxu0 0
    %583 = vmatprep.subr.bf16.mxu0 0
    %584 = vmatpush1.bf16.msra.mxu0 0
    %585 = vmatprep.mubr.bf16.mxu0 0
    %586 = vmatmul.mubr.bf16.gmra.mrb[0].mxu0 %v319
    %v587 = vpop.f32.mrb[0].mxu0
    %v588 = vadd.f32 0.0, %v587
    %v589 = vpop.f32.mrb[0].mxu0
    %v590 = vadd.f32 0.0, %v589
    %v591 = vpop.f32.mrb[0].mxu0
    %v592 = vpop.f32.mrb[0].mxu0
    %593 = vdwg.mxu0
    %v594 = vadd.f32 %v315, %v547
    %v595 = vadd.f32 %v316, %v549
    %v596 = vadd.f32 %v317, %v588
    %v597 = vadd.f32 %v318, %v590
    %v598 = vxor.u32 %v594, 2147483648
    %v599 = vxor.u32 %v595, 2147483648
    %v600 = vmul.f32 %v598, 1.442695
    %v601 = vpow.pop %v600
    %v602 = vmul.f32 %v599, 1.442695
    %v603 = vpow.pop %v602
    %v604 = vadd.f32 %v601, 1.0
    %v605 = vadd.f32 %v603, 1.0
    %v606 = vrcp.pop %v604
    %v607 = vmul.f32 1.0, %v606
    %v608 = vrcp.pop %v605
    %v609 = vmul.f32 1.0, %v608
    %v610 = vtanh.pop %v596
    %v611 = vxor.u32 %v597, 2147483648
    %v612 = vmul.f32 %v611, 1.442695
    %v613 = vpow.pop %v612
    %v614 = vadd.f32 %v613, 1.0
    %v615 = vrcp.pop %v614
    %v616 = vmul.f32 1.0, %v615
    %v617 = vmul.f32 %v609, %v314
    %v618 = vmul.f32 %v607, %v610
    %v619 = vadd.f32 %v617, %v618
    %v620 = vtanh.pop %v619
    %v621 = vmul.f32 %v616, %v620
    %622 = vst [vmem:[#allocation3] sm:$0xf] %v621
    %v623 = vld [vmem:[#allocation2] sm:$0xf0]
    %v624 = vld [vmem:[#allocation2 + $0x8] sm:$0xf0]
    %v625 = vld [vmem:[#allocation2 + $0x10] sm:$0xf0]
    %v626 = vld [vmem:[#allocation2 + $0x18] sm:$0xf0]
    %v627 = vpack.c.bf16 %v621, %v621
    %v628 = vld [vmem:[#allocation9] sm:$0xff]
    %v629 = vld [vmem:[#allocation9 + $0x8] sm:$0xff]
    %v630 = vld [vmem:[#allocation9 + $0x10] sm:$0xff]
    %v631 = vld [vmem:[#allocation9 + $0x18] sm:$0xff]
    %v632 = vld [vmem:[#allocation9 + $0x20] sm:$0xff]
    %v633 = vld [vmem:[#allocation9 + $0x28] sm:$0xff]
    %v634 = vld [vmem:[#allocation9 + $0x30] sm:$0xff]
    %v635 = vld [vmem:[#allocation9 + $0x38] sm:$0xff]
    %v636 = vld [vmem:[#allocation9 + $0x40] sm:$0xff]
    %v637 = vld [vmem:[#allocation9 + $0x48] sm:$0xff]
    %v638 = vld [vmem:[#allocation9 + $0x50] sm:$0xff]
    %v639 = vld [vmem:[#allocation9 + $0x58] sm:$0xff]
    %v640 = vld [vmem:[#allocation9 + $0x60] sm:$0xff]
    %v641 = vld [vmem:[#allocation9 + $0x68] sm:$0xff]
    %v642 = vld [vmem:[#allocation9 + $0x70] sm:$0xff]
    %v643 = vld [vmem:[#allocation9 + $0x78] sm:$0xff]
    %v644 = vld [vmem:[#allocation9 + $0x80] sm:$0xff]
    %v645 = vld [vmem:[#allocation9 + $0x88] sm:$0xff]
    %v646 = vld [vmem:[#allocation9 + $0x90] sm:$0xff]
    %v647 = vld [vmem:[#allocation9 + $0x98] sm:$0xff]
    %v648 = vld [vmem:[#allocation9 + $0xa0] sm:$0xff]
    %v649 = vld [vmem:[#allocation9 + $0xa8] sm:$0xff]
    %v650 = vld [vmem:[#allocation9 + $0xb0] sm:$0xff]
    %v651 = vld [vmem:[#allocation9 + $0xb8] sm:$0xff]
    %v652 = vld [vmem:[#allocation9 + $0xc0] sm:$0xff]
    %v653 = vld [vmem:[#allocation9 + $0xc8] sm:$0xff]
    %v654 = vld [vmem:[#allocation9 + $0xd0] sm:$0xff]
    %v655 = vld [vmem:[#allocation9 + $0xd8] sm:$0xff]
    %v656 = vld [vmem:[#allocation9 + $0xe0] sm:$0xff]
    %v657 = vld [vmem:[#allocation9 + $0xe8] sm:$0xff]
    %v658 = vld [vmem:[#allocation9 + $0xf0] sm:$0xff]
    %v659 = vld [vmem:[#allocation9 + $0xf8] sm:$0xff]
    %v692 = vunpack.c.l.b16 %v628
    %v693 = vunpack.c.h.b16 %v628
    %v694 = vunpack.c.l.b16 %v629
    %v695 = vunpack.c.h.b16 %v629
    %v696 = vunpack.c.l.b16 %v630
    %v697 = vunpack.c.h.b16 %v630
    %v698 = vunpack.c.l.b16 %v631
    %v699 = vunpack.c.h.b16 %v631
    %v700 = vunpack.c.l.b16 %v632
    %v701 = vunpack.c.h.b16 %v632
    %v702 = vunpack.c.l.b16 %v633
    %v703 = vunpack.c.h.b16 %v633
    %v704 = vunpack.c.l.b16 %v634
    %v705 = vunpack.c.h.b16 %v634
    %v706 = vunpack.c.l.b16 %v635
    %v707 = vunpack.c.h.b16 %v635
    %v708 = vunpack.c.l.b16 %v636
    %v709 = vunpack.c.h.b16 %v636
    %v710 = vunpack.c.l.b16 %v637
    %v711 = vunpack.c.h.b16 %v637
    %v712 = vunpack.c.l.b16 %v638
    %v713 = vunpack.c.h.b16 %v638
    %v714 = vunpack.c.l.b16 %v639
    %v715 = vunpack.c.h.b16 %v639
    %v716 = vunpack.c.l.b16 %v640
    %v717 = vunpack.c.h.b16 %v640
    %v718 = vunpack.c.l.b16 %v641
    %v719 = vunpack.c.h.b16 %v641
    %v720 = vunpack.c.l.b16 %v642
    %v721 = vunpack.c.h.b16 %v642
    %v722 = vunpack.c.l.b16 %v643
    %v723 = vunpack.c.h.b16 %v643
    %v724 = vunpack.c.l.b16 %v644
    %v725 = vunpack.c.h.b16 %v644
    %v726 = vunpack.c.l.b16 %v645
    %v727 = vunpack.c.h.b16 %v645
    %v728 = vunpack.c.l.b16 %v646
    %v729 = vunpack.c.h.b16 %v646
    %v730 = vunpack.c.l.b16 %v647
    %v731 = vunpack.c.h.b16 %v647
    %v732 = vunpack.c.l.b16 %v648
    %v733 = vunpack.c.h.b16 %v648
    %v734 = vunpack.c.l.b16 %v649
    %v735 = vunpack.c.h.b16 %v649
    %v736 = vunpack.c.l.b16 %v650
    %v737 = vunpack.c.h.b16 %v650
    %v738 = vunpack.c.l.b16 %v651
    %v739 = vunpack.c.h.b16 %v651
    %v740 = vunpack.c.l.b16 %v652
    %v741 = vunpack.c.h.b16 %v652
    %v742 = vunpack.c.l.b16 %v653
    %v743 = vunpack.c.h.b16 %v653
    %v744 = vunpack.c.l.b16 %v654
    %v745 = vunpack.c.h.b16 %v654
    %v746 = vunpack.c.l.b16 %v655
    %v747 = vunpack.c.h.b16 %v655
    %v748 = vunpack.c.l.b16 %v656
    %v749 = vunpack.c.h.b16 %v656
    %v750 = vunpack.c.l.b16 %v657
    %v751 = vunpack.c.h.b16 %v657
    %v752 = vunpack.c.l.b16 %v658
    %v753 = vunpack.c.h.b16 %v658
    %v754 = vunpack.c.l.b16 %v659
    %v755 = vunpack.c.h.b16 %v659
    %v756 = vpack.c.b16 %v696, %v692
    %v757 = vpack.c.b16 %v697, %v693
    %v758 = vpack.c.b16 %v698, %v694
    %v759 = vpack.c.b16 %v699, %v695
    %v760 = vpack.c.b16 %v704, %v700
    %v761 = vpack.c.b16 %v705, %v701
    %v762 = vpack.c.b16 %v706, %v702
    %v763 = vpack.c.b16 %v707, %v703
    %v764 = vpack.c.b16 %v712, %v708
    %v765 = vpack.c.b16 %v713, %v709
    %v766 = vpack.c.b16 %v714, %v710
    %v767 = vpack.c.b16 %v715, %v711
    %v768 = vpack.c.b16 %v720, %v716
    %v769 = vpack.c.b16 %v721, %v717
    %v770 = vpack.c.b16 %v722, %v718
    %v771 = vpack.c.b16 %v723, %v719
    %v772 = vpack.c.b16 %v728, %v724
    %v773 = vpack.c.b16 %v729, %v725
    %v774 = vpack.c.b16 %v730, %v726
    %v775 = vpack.c.b16 %v731, %v727
    %v776 = vpack.c.b16 %v736, %v732
    %v777 = vpack.c.b16 %v737, %v733
    %v778 = vpack.c.b16 %v738, %v734
    %v779 = vpack.c.b16 %v739, %v735
    %v780 = vpack.c.b16 %v744, %v740
    %v781 = vpack.c.b16 %v745, %v741
    %v782 = vpack.c.b16 %v746, %v742
    %v783 = vpack.c.b16 %v747, %v743
    %v784 = vpack.c.b16 %v752, %v748
    %v785 = vpack.c.b16 %v753, %v749
    %v786 = vpack.c.b16 %v754, %v750
    %v787 = vpack.c.b16 %v755, %v751
    %820 = vmatprep.subr.bf16.mxu0 %v757
    %821 = vmatpush1.bf16.msra.mxu0 %v756
    %822 = vmatprep.subr.bf16.mxu0 %v761
    %823 = vmatpush1.bf16.msra.mxu0 %v760
    %824 = vmatprep.subr.bf16.mxu0 %v765
    %825 = vmatpush1.bf16.msra.mxu0 %v764
    %826 = vmatprep.subr.bf16.mxu0 %v769
    %827 = vmatpush1.bf16.msra.mxu0 %v768
    %828 = vmatprep.subr.bf16.mxu0 %v773
    %829 = vmatpush1.bf16.msra.mxu0 %v772
    %830 = vmatprep.subr.bf16.mxu0 %v777
    %831 = vmatpush1.bf16.msra.mxu0 %v776
    %832 = vmatprep.subr.bf16.mxu0 %v781
    %833 = vmatpush1.bf16.msra.mxu0 %v780
    %834 = vmatprep.subr.bf16.mxu0 %v785
    %835 = vmatpush1.bf16.msra.mxu0 %v784
    %836 = vmatprep.subr.bf16.mxu0 0
    %837 = vmatpush1.bf16.msra.mxu0 0
    %838 = vmatprep.subr.bf16.mxu0 0
    %839 = vmatpush1.bf16.msra.mxu0 0
    %840 = vmatprep.subr.bf16.mxu0 0
    %841 = vmatpush1.bf16.msra.mxu0 0
    %842 = vmatprep.subr.bf16.mxu0 0
    %843 = vmatpush1.bf16.msra.mxu0 0
    %844 = vmatprep.subr.bf16.mxu0 0
    %845 = vmatpush1.bf16.msra.mxu0 0
    %846 = vmatprep.subr.bf16.mxu0 0
    %847 = vmatpush1.bf16.msra.mxu0 0
    %848 = vmatprep.subr.bf16.mxu0 0
    %849 = vmatpush1.bf16.msra.mxu0 0
    %850 = vmatprep.subr.bf16.mxu0 0
    %851 = vmatpush1.bf16.msra.mxu0 0
    %852 = vmatprep.mubr.bf16.mxu0 0
    %853 = vmatmul.mubr.bf16.gmra.mrb[0].mxu0 %v627
    %v854 = vpop.f32.mrb[0].mxu0
    %v855 = vadd.f32 0.0, %v854
    %v856 = vpop.f32.mrb[0].mxu0
    %v857 = vadd.f32 0.0, %v856
    %v858 = vpop.f32.mrb[0].mxu0
    %v859 = vpop.f32.mrb[0].mxu0
    %860 = vdwg.mxu0
    %861 = vmatprep.subr.bf16.mxu0 %v759
    %862 = vmatpush1.bf16.msra.mxu0 %v758
    %863 = vmatprep.subr.bf16.mxu0 %v763
    %864 = vmatpush1.bf16.msra.mxu0 %v762
    %865 = vmatprep.subr.bf16.mxu0 %v767
    %866 = vmatpush1.bf16.msra.mxu0 %v766
    %867 = vmatprep.subr.bf16.mxu0 %v771
    %868 = vmatpush1.bf16.msra.mxu0 %v770
    %869 = vmatprep.subr.bf16.mxu0 %v775
    %870 = vmatpush1.bf16.msra.mxu0 %v774
    %871 = vmatprep.subr.bf16.mxu0 %v779
    %872 = vmatpush1.bf16.msra.mxu0 %v778
    %873 = vmatprep.subr.bf16.mxu0 %v783
    %874 = vmatpush1.bf16.msra.mxu0 %v782
    %875 = vmatprep.subr.bf16.mxu0 %v787
    %876 = vmatpush1.bf16.msra.mxu0 %v786
    %877 = vmatprep.subr.bf16.mxu0 0
    %878 = vmatpush1.bf16.msra.mxu0 0
    %879 = vmatprep.subr.bf16.mxu0 0
    %880 = vmatpush1.bf16.msra.mxu0 0
    %881 = vmatprep.subr.bf16.mxu0 0
    %882 = vmatpush1.bf16.msra.mxu0 0
    %883 = vmatprep.subr.bf16.mxu0 0
    %884 = vmatpush1.bf16.msra.mxu0 0
    %885 = vmatprep.subr.bf16.mxu0 0
    %886 = vmatpush1.bf16.msra.mxu0 0
    %887 = vmatprep.subr.bf16.mxu0 0
    %888 = vmatpush1.bf16.msra.mxu0 0
    %889 = vmatprep.subr.bf16.mxu0 0
    %890 = vmatpush1.bf16.msra.mxu0 0
    %891 = vmatprep.subr.bf16.mxu0 0
    %892 = vmatpush1.bf16.msra.mxu0 0
    %893 = vmatprep.mubr.bf16.mxu0 0
    %894 = vmatmul.mubr.bf16.gmra.mrb[0].mxu0 %v627
    %v895 = vpop.f32.mrb[0].mxu0
    %v896 = vadd.f32 0.0, %v895
    %v897 = vpop.f32.mrb[0].mxu0
    %v898 = vadd.f32 0.0, %v897
    %v899 = vpop.f32.mrb[0].mxu0
    %v900 = vpop.f32.mrb[0].mxu0
    %901 = vdwg.mxu0
    %v906 = vrot.slane %v855, 4
    %v907 = vrot.slane %v857, 4
    %v908 = vrot.slane %v896, 4
    %v909 = vrot.slane %v898, 4
    %v914 = vadd.f32 %v623, %v906
    %v915 = vadd.f32 %v624, %v907
    %v916 = vadd.f32 %v625, %v908
    %v917 = vadd.f32 %v626, %v909
    %v918 = vxor.u32 %v914, 2147483648
    %v919 = vxor.u32 %v915, 2147483648
    %v920 = vmul.f32 %v918, 1.442695
    %v921 = vpow.pop %v920
    %v922 = vmul.f32 %v919, 1.442695
    %v923 = vpow.pop %v922
    %v924 = vadd.f32 %v921, 1.0
    %v925 = vadd.f32 %v923, 1.0
    %v926 = vrcp.pop %v924
    %v927 = vmul.f32 1.0, %v926
    %v928 = vrcp.pop %v925
    %v929 = vmul.f32 1.0, %v928
    %v930 = vtanh.pop %v916
    %v931 = vxor.u32 %v917, 2147483648
    %v932 = vmul.f32 %v931, 1.442695
    %v933 = vpow.pop %v932
    %v934 = vadd.f32 %v933, 1.0
    %v935 = vrcp.pop %v934
    %v936 = vmul.f32 1.0, %v935
    %v938 = vrot.slane %v619, 4
    %v940 = vmul.f32 %v929, %v938
    %v941 = vmul.f32 %v927, %v930
    %v942 = vadd.f32 %v940, %v941
    %v943 = vtanh.pop %v942
    %v944 = vmul.f32 %v936, %v943
    %945 = vst [vmem:[#allocation3] sm:$0xf0] %v944
    %v946 = vld [vmem:[#allocation2 + $0x20] sm:$0xf]
    %v947 = vld [vmem:[#allocation2 + $0x28] sm:$0xf]
    %v948 = vld [vmem:[#allocation2 + $0x30] sm:$0xf]
    %v949 = vld [vmem:[#allocation2 + $0x38] sm:$0xf]
    %v950 = vpack.c.bf16 %v944, %v944
    %v951 = vld [vmem:[#allocation9] sm:$0xff]
    %v952 = vld [vmem:[#allocation9 + $0x8] sm:$0xff]
    %v953 = vld [vmem:[#allocation9 + $0x10] sm:$0xff]
    %v954 = vld [vmem:[#allocation9 + $0x18] sm:$0xff]
    %v955 = vld [vmem:[#allocation9 + $0x20] sm:$0xff]
    %v956 = vld [vmem:[#allocation9 + $0x28] sm:$0xff]
    %v957 = vld [vmem:[#allocation9 + $0x30] sm:$0xff]
    %v958 = vld [vmem:[#allocation9 + $0x38] sm:$0xff]
    %v959 = vld [vmem:[#allocation9 + $0x40] sm:$0xff]
    %v960 = vld [vmem:[#allocation9 + $0x48] sm:$0xff]
    %v961 = vld [vmem:[#allocation9 + $0x50] sm:$0xff]
    %v962 = vld [vmem:[#allocation9 + $0x58] sm:$0xff]
    %v963 = vld [vmem:[#allocation9 + $0x60] sm:$0xff]
    %v964 = vld [vmem:[#allocation9 + $0x68] sm:$0xff]
    %v965 = vld [vmem:[#allocation9 + $0x70] sm:$0xff]
    %v966 = vld [vmem:[#allocation9 + $0x78] sm:$0xff]
    %v967 = vld [vmem:[#allocation9 + $0x80] sm:$0xff]
    %v968 = vld [vmem:[#allocation9 + $0x88] sm:$0xff]
    %v969 = vld [vmem:[#allocation9 + $0x90] sm:$0xff]
    %v970 = vld [vmem:[#allocation9 + $0x98] sm:$0xff]
    %v971 = vld [vmem:[#allocation9 + $0xa0] sm:$0xff]
    %v972 = vld [vmem:[#allocation9 + $0xa8] sm:$0xff]
    %v973 = vld [vmem:[#allocation9 + $0xb0] sm:$0xff]
    %v974 = vld [vmem:[#allocation9 + $0xb8] sm:$0xff]
    %v975 = vld [vmem:[#allocation9 + $0xc0] sm:$0xff]
    %v976 = vld [vmem:[#allocation9 + $0xc8] sm:$0xff]
    %v977 = vld [vmem:[#allocation9 + $0xd0] sm:$0xff]
    %v978 = vld [vmem:[#allocation9 + $0xd8] sm:$0xff]
    %v979 = vld [vmem:[#allocation9 + $0xe0] sm:$0xff]
    %v980 = vld [vmem:[#allocation9 + $0xe8] sm:$0xff]
    %v981 = vld [vmem:[#allocation9 + $0xf0] sm:$0xff]
    %v982 = vld [vmem:[#allocation9 + $0xf8] sm:$0xff]
    %v984 = vrot.slane %v950, 2
    %v1018 = vunpack.c.l.b16 %v951
    %v1019 = vunpack.c.h.b16 %v951
    %v1020 = vunpack.c.l.b16 %v952
    %v1021 = vunpack.c.h.b16 %v952
    %v1022 = vunpack.c.l.b16 %v953
    %v1023 = vunpack.c.h.b16 %v953
    %v1024 = vunpack.c.l.b16 %v954
    %v1025 = vunpack.c.h.b16 %v954
    %v1026 = vunpack.c.l.b16 %v955
    %v1027 = vunpack.c.h.b16 %v955
    %v1028 = vunpack.c.l.b16 %v956
    %v1029 = vunpack.c.h.b16 %v956
    %v1030 = vunpack.c.l.b16 %v957
    %v1031 = vunpack.c.h.b16 %v957
    %v1032 = vunpack.c.l.b16 %v958
    %v1033 = vunpack.c.h.b16 %v958
    %v1034 = vunpack.c.l.b16 %v959
    %v1035 = vunpack.c.h.b16 %v959
    %v1036 = vunpack.c.l.b16 %v960
    %v1037 = vunpack.c.h.b16 %v960
    %v1038 = vunpack.c.l.b16 %v961
    %v1039 = vunpack.c.h.b16 %v961
    %v1040 = vunpack.c.l.b16 %v962
    %v1041 = vunpack.c.h.b16 %v962
    %v1042 = vunpack.c.l.b16 %v963
    %v1043 = vunpack.c.h.b16 %v963
    %v1044 = vunpack.c.l.b16 %v964
    %v1045 = vunpack.c.h.b16 %v964
    %v1046 = vunpack.c.l.b16 %v965
    %v1047 = vunpack.c.h.b16 %v965
    %v1048 = vunpack.c.l.b16 %v966
    %v1049 = vunpack.c.h.b16 %v966
    %v1050 = vunpack.c.l.b16 %v967
    %v1051 = vunpack.c.h.b16 %v967
    %v1052 = vunpack.c.l.b16 %v968
    %v1053 = vunpack.c.h.b16 %v968
    %v1054 = vunpack.c.l.b16 %v969
    %v1055 = vunpack.c.h.b16 %v969
    %v1056 = vunpack.c.l.b16 %v970
    %v1057 = vunpack.c.h.b16 %v970
    %v1058 = vunpack.c.l.b16 %v971
    %v1059 = vunpack.c.h.b16 %v971
    %v1060 = vunpack.c.l.b16 %v972
    %v1061 = vunpack.c.h.b16 %v972
    %v1062 = vunpack.c.l.b16 %v973
    %v1063 = vunpack.c.h.b16 %v973
    %v1064 = vunpack.c.l.b16 %v974
    %v1065 = vunpack.c.h.b16 %v974
    %v1066 = vunpack.c.l.b16 %v975
    %v1067 = vunpack.c.h.b16 %v975
    %v1068 = vunpack.c.l.b16 %v976
    %v1069 = vunpack.c.h.b16 %v976
    %v1070 = vunpack.c.l.b16 %v977
    %v1071 = vunpack.c.h.b16 %v977
    %v1072 = vunpack.c.l.b16 %v978
    %v1073 = vunpack.c.h.b16 %v978
    %v1074 = vunpack.c.l.b16 %v979
    %v1075 = vunpack.c.h.b16 %v979
    %v1076 = vunpack.c.l.b16 %v980
    %v1077 = vunpack.c.h.b16 %v980
    %v1078 = vunpack.c.l.b16 %v981
    %v1079 = vunpack.c.h.b16 %v981
    %v1080 = vunpack.c.l.b16 %v982
    %v1081 = vunpack.c.h.b16 %v982
    %v1082 = vpack.c.b16 %v1022, %v1018
    %v1083 = vpack.c.b16 %v1023, %v1019
    %v1084 = vpack.c.b16 %v1024, %v1020
    %v1085 = vpack.c.b16 %v1025, %v1021
    %v1086 = vpack.c.b16 %v1030, %v1026
    %v1087 = vpack.c.b16 %v1031, %v1027
    %v1088 = vpack.c.b16 %v1032, %v1028
    %v1089 = vpack.c.b16 %v1033, %v1029
    %v1090 = vpack.c.b16 %v1038, %v1034
    %v1091 = vpack.c.b16 %v1039, %v1035
    %v1092 = vpack.c.b16 %v1040, %v1036
    %v1093 = vpack.c.b16 %v1041, %v1037
    %v1094 = vpack.c.b16 %v1046, %v1042
    %v1095 = vpack.c.b16 %v1047, %v1043
    %v1096 = vpack.c.b16 %v1048, %v1044
    %v1097 = vpack.c.b16 %v1049, %v1045
    %v1098 = vpack.c.b16 %v1054, %v1050
    %v1099 = vpack.c.b16 %v1055, %v1051
    %v1100 = vpack.c.b16 %v1056, %v1052
    %v1101 = vpack.c.b16 %v1057, %v1053
    %v1102 = vpack.c.b16 %v1062, %v1058
    %v1103 = vpack.c.b16 %v1063, %v1059
    %v1104 = vpack.c.b16 %v1064, %v1060
    %v1105 = vpack.c.b16 %v1065, %v1061
    %v1106 = vpack.c.b16 %v1070, %v1066
    %v1107 = vpack.c.b16 %v1071, %v1067
    %v1108 = vpack.c.b16 %v1072, %v1068
    %v1109 = vpack.c.b16 %v1073, %v1069
    %v1110 = vpack.c.b16 %v1078, %v1074
    %v1111 = vpack.c.b16 %v1079, %v1075
    %v1112 = vpack.c.b16 %v1080, %v1076
    %v1113 = vpack.c.b16 %v1081, %v1077
    %1146 = vmatprep.subr.bf16.mxu0 %v1083
    %1147 = vmatpush1.bf16.msra.mxu0 %v1082
    %1148 = vmatprep.subr.bf16.mxu0 %v1087
    %1149 = vmatpush1.bf16.msra.mxu0 %v1086
    %1150 = vmatprep.subr.bf16.mxu0 %v1091
    %1151 = vmatpush1.bf16.msra.mxu0 %v1090
    %1152 = vmatprep.subr.bf16.mxu0 %v1095
    %1153 = vmatpush1.bf16.msra.mxu0 %v1094
    %1154 = vmatprep.subr.bf16.mxu0 %v1099
    %1155 = vmatpush1.bf16.msra.mxu0 %v1098
    %1156 = vmatprep.subr.bf16.mxu0 %v1103
    %1157 = vmatpush1.bf16.msra.mxu0 %v1102
    %1158 = vmatprep.subr.bf16.mxu0 %v1107
    %1159 = vmatpush1.bf16.msra.mxu0 %v1106
    %1160 = vmatprep.subr.bf16.mxu0 %v1111
    %1161 = vmatpush1.bf16.msra.mxu0 %v1110
    %1162 = vmatprep.subr.bf16.mxu0 0
    %1163 = vmatpush1.bf16.msra.mxu0 0
    %1164 = vmatprep.subr.bf16.mxu0 0
    %1165 = vmatpush1.bf16.msra.mxu0 0
    %1166 = vmatprep.subr.bf16.mxu0 0
    %1167 = vmatpush1.bf16.msra.mxu0 0
    %1168 = vmatprep.subr.bf16.mxu0 0
    %1169 = vmatpush1.bf16.msra.mxu0 0
    %1170 = vmatprep.subr.bf16.mxu0 0
    %1171 = vmatpush1.bf16.msra.mxu0 0
    %1172 = vmatprep.subr.bf16.mxu0 0
    %1173 = vmatpush1.bf16.msra.mxu0 0
    %1174 = vmatprep.subr.bf16.mxu0 0
    %1175 = vmatpush1.bf16.msra.mxu0 0
    %1176 = vmatprep.subr.bf16.mxu0 0
    %1177 = vmatpush1.bf16.msra.mxu0 0
    %1178 = vmatprep.mubr.bf16.mxu0 0
    %1179 = vmatmul.mubr.bf16.gmra.mrb[0].mxu0 %v984
    %v1180 = vpop.f32.mrb[0].mxu0
    %v1181 = vadd.f32 0.0, %v1180
    %v1182 = vpop.f32.mrb[0].mxu0
    %v1183 = vadd.f32 0.0, %v1182
    %v1184 = vpop.f32.mrb[0].mxu0
    %v1185 = vpop.f32.mrb[0].mxu0
    %1186 = vdwg.mxu0
    %1187 = vmatprep.subr.bf16.mxu0 %v1085
    %1188 = vmatpush1.bf16.msra.mxu0 %v1084
    %1189 = vmatprep.subr.bf16.mxu0 %v1089
    %1190 = vmatpush1.bf16.msra.mxu0 %v1088
    %1191 = vmatprep.subr.bf16.mxu0 %v1093
    %1192 = vmatpush1.bf16.msra.mxu0 %v1092
    %1193 = vmatprep.subr.bf16.mxu0 %v1097
    %1194 = vmatpush1.bf16.msra.mxu0 %v1096
    %1195 = vmatprep.subr.bf16.mxu0 %v1101
    %1196 = vmatpush1.bf16.msra.mxu0 %v1100
    %1197 = vmatprep.subr.bf16.mxu0 %v1105
    %1198 = vmatpush1.bf16.msra.mxu0 %v1104
    %1199 = vmatprep.subr.bf16.mxu0 %v1109
    %1200 = vmatpush1.bf16.msra.mxu0 %v1108
    %1201 = vmatprep.subr.bf16.mxu0 %v1113
    %1202 = vmatpush1.bf16.msra.mxu0 %v1112
    %1203 = vmatprep.subr.bf16.mxu0 0
    %1204 = vmatpush1.bf16.msra.mxu0 0
    %1205 = vmatprep.subr.bf16.mxu0 0
    %1206 = vmatpush1.bf16.msra.mxu0 0
    %1207 = vmatprep.subr.bf16.mxu0 0
    %1208 = vmatpush1.bf16.msra.mxu0 0
    %1209 = vmatprep.subr.bf16.mxu0 0
    %1210 = vmatpush1.bf16.msra.mxu0 0
    %1211 = vmatprep.subr.bf16.mxu0 0
    %1212 = vmatpush1.bf16.msra.mxu0 0
    %1213 = vmatprep.subr.bf16.mxu0 0
    %1214 = vmatpush1.bf16.msra.mxu0 0
    %1215 = vmatprep.subr.bf16.mxu0 0
    %1216 = vmatpush1.bf16.msra.mxu0 0
    %1217 = vmatprep.subr.bf16.mxu0 0
    %1218 = vmatpush1.bf16.msra.mxu0 0
    %1219 = vmatprep.mubr.bf16.mxu0 0
    %1220 = vmatmul.mubr.bf16.gmra.mrb[0].mxu0 %v984
    %v1221 = vpop.f32.mrb[0].mxu0
    %v1222 = vadd.f32 0.0, %v1221
    %v1223 = vpop.f32.mrb[0].mxu0
    %v1224 = vadd.f32 0.0, %v1223
    %v1225 = vpop.f32.mrb[0].mxu0
    %v1226 = vpop.f32.mrb[0].mxu0
    %1227 = vdwg.mxu0
    %v1228 = vadd.f32 %v946, %v1181
    %v1229 = vadd.f32 %v947, %v1183
    %v1230 = vadd.f32 %v948, %v1222
    %v1231 = vadd.f32 %v949, %v1224
    %v1232 = vxor.u32 %v1228, 2147483648
    %v1233 = vxor.u32 %v1229, 2147483648
    %v1234 = vmul.f32 %v1232, 1.442695
    %v1235 = vpow.pop %v1234
    %v1236 = vmul.f32 %v1233, 1.442695
    %v1237 = vpow.pop %v1236
    %v1238 = vadd.f32 %v1235, 1.0
    %v1239 = vadd.f32 %v1237, 1.0
    %v1240 = vrcp.pop %v1238
    %v1241 = vmul.f32 1.0, %v1240
    %v1242 = vrcp.pop %v1239
    %v1243 = vmul.f32 1.0, %v1242
    %v1244 = vtanh.pop %v1230
    %v1245 = vxor.u32 %v1231, 2147483648
    %v1246 = vmul.f32 %v1245, 1.442695
    %v1247 = vpow.pop %v1246
    %v1248 = vadd.f32 %v1247, 1.0
    %v1249 = vrcp.pop %v1248
    %v1250 = vmul.f32 1.0, %v1249
    %v1252 = vrot.slane %v942, 4
    %v1254 = vmul.f32 %v1243, %v1252
    %v1255 = vmul.f32 %v1241, %v1244
    %v1256 = vadd.f32 %v1254, %v1255
    %v1257 = vtanh.pop %v1256
    %v1258 = vmul.f32 %v1250, %v1257
    %1259 = vst [vmem:[#allocation3 + $0x8] sm:$0xf] %v1258
    %v1260 = vld [vmem:[#allocation2 + $0x20] sm:$0xf0]
    %v1261 = vld [vmem:[#allocation2 + $0x28] sm:$0xf0]
    %v1262 = vld [vmem:[#allocation2 + $0x30] sm:$0xf0]
    %v1263 = vld [vmem:[#allocation2 + $0x38] sm:$0xf0]
    %v1264 = vpack.c.bf16 %v1258, %v1258
    %v1265 = vld [vmem:[#allocation9] sm:$0xff]
    %v1266 = vld [vmem:[#allocation9 + $0x8] sm:$0xff]
    %v1267 = vld [vmem:[#allocation9 + $0x10] sm:$0xff]
    %v1268 = vld [vmem:[#allocation9 + $0x18] sm:$0xff]
    %v1269 = vld [vmem:[#allocation9 + $0x20] sm:$0xff]
    %v1270 = vld [vmem:[#allocation9 + $0x28] sm:$0xff]
    %v1271 = vld [vmem:[#allocation9 + $0x30] sm:$0xff]
    %v1272 = vld [vmem:[#allocation9 + $0x38] sm:$0xff]
    %v1273 = vld [vmem:[#allocation9 + $0x40] sm:$0xff]
    %v1274 = vld [vmem:[#allocation9 + $0x48] sm:$0xff]
    %v1275 = vld [vmem:[#allocation9 + $0x50] sm:$0xff]
    %v1276 = vld [vmem:[#allocation9 + $0x58] sm:$0xff]
    %v1277 = vld [vmem:[#allocation9 + $0x60] sm:$0xff]
    %v1278 = vld [vmem:[#allocation9 + $0x68] sm:$0xff]
    %v1279 = vld [vmem:[#allocation9 + $0x70] sm:$0xff]
    %v1280 = vld [vmem:[#allocation9 + $0x78] sm:$0xff]
    %v1281 = vld [vmem:[#allocation9 + $0x80] sm:$0xff]
    %v1282 = vld [vmem:[#allocation9 + $0x88] sm:$0xff]
    %v1283 = vld [vmem:[#allocation9 + $0x90] sm:$0xff]
    %v1284 = vld [vmem:[#allocation9 + $0x98] sm:$0xff]
    %v1285 = vld [vmem:[#allocation9 + $0xa0] sm:$0xff]
    %v1286 = vld [vmem:[#allocation9 + $0xa8] sm:$0xff]
    %v1287 = vld [vmem:[#allocation9 + $0xb0] sm:$0xff]
    %v1288 = vld [vmem:[#allocation9 + $0xb8] sm:$0xff]
    %v1289 = vld [vmem:[#allocation9 + $0xc0] sm:$0xff]
    %v1290 = vld [vmem:[#allocation9 + $0xc8] sm:$0xff]
    %v1291 = vld [vmem:[#allocation9 + $0xd0] sm:$0xff]
    %v1292 = vld [vmem:[#allocation9 + $0xd8] sm:$0xff]
    %v1293 = vld [vmem:[#allocation9 + $0xe0] sm:$0xff]
    %v1294 = vld [vmem:[#allocation9 + $0xe8] sm:$0xff]
    %v1295 = vld [vmem:[#allocation9 + $0xf0] sm:$0xff]
    %v1296 = vld [vmem:[#allocation9 + $0xf8] sm:$0xff]
    %v1329 = vunpack.c.l.b16 %v1265
    %v1330 = vunpack.c.h.b16 %v1265
    %v1331 = vunpack.c.l.b16 %v1266
    %v1332 = vunpack.c.h.b16 %v1266
    %v1333 = vunpack.c.l.b16 %v1267
    %v1334 = vunpack.c.h.b16 %v1267
    %v1335 = vunpack.c.l.b16 %v1268
    %v1336 = vunpack.c.h.b16 %v1268
    %v1337 = vunpack.c.l.b16 %v1269
    %v1338 = vunpack.c.h.b16 %v1269
    %v1339 = vunpack.c.l.b16 %v1270
    %v1340 = vunpack.c.h.b16 %v1270
    %v1341 = vunpack.c.l.b16 %v1271
    %v1342 = vunpack.c.h.b16 %v1271
    %v1343 = vunpack.c.l.b16 %v1272
    %v1344 = vunpack.c.h.b16 %v1272
    %v1345 = vunpack.c.l.b16 %v1273
    %v1346 = vunpack.c.h.b16 %v1273
    %v1347 = vunpack.c.l.b16 %v1274
    %v1348 = vunpack.c.h.b16 %v1274
    %v1349 = vunpack.c.l.b16 %v1275
    %v1350 = vunpack.c.h.b16 %v1275
    %v1351 = vunpack.c.l.b16 %v1276
    %v1352 = vunpack.c.h.b16 %v1276
    %v1353 = vunpack.c.l.b16 %v1277
    %v1354 = vunpack.c.h.b16 %v1277
    %v1355 = vunpack.c.l.b16 %v1278
    %v1356 = vunpack.c.h.b16 %v1278
    %v1357 = vunpack.c.l.b16 %v1279
    %v1358 = vunpack.c.h.b16 %v1279
    %v1359 = vunpack.c.l.b16 %v1280
    %v1360 = vunpack.c.h.b16 %v1280
    %v1361 = vunpack.c.l.b16 %v1281
    %v1362 = vunpack.c.h.b16 %v1281
    %v1363 = vunpack.c.l.b16 %v1282
    %v1364 = vunpack.c.h.b16 %v1282
    %v1365 = vunpack.c.l.b16 %v1283
    %v1366 = vunpack.c.h.b16 %v1283
    %v1367 = vunpack.c.l.b16 %v1284
    %v1368 = vunpack.c.h.b16 %v1284
    %v1369 = vunpack.c.l.b16 %v1285
    %v1370 = vunpack.c.h.b16 %v1285
    %v1371 = vunpack.c.l.b16 %v1286
    %v1372 = vunpack.c.h.b16 %v1286
    %v1373 = vunpack.c.l.b16 %v1287
    %v1374 = vunpack.c.h.b16 %v1287
    %v1375 = vunpack.c.l.b16 %v1288
    %v1376 = vunpack.c.h.b16 %v1288
    %v1377 = vunpack.c.l.b16 %v1289
    %v1378 = vunpack.c.h.b16 %v1289
    %v1379 = vunpack.c.l.b16 %v1290
    %v1380 = vunpack.c.h.b16 %v1290
    %v1381 = vunpack.c.l.b16 %v1291
    %v1382 = vunpack.c.h.b16 %v1291
    %v1383 = vunpack.c.l.b16 %v1292
    %v1384 = vunpack.c.h.b16 %v1292
    %v1385 = vunpack.c.l.b16 %v1293
    %v1386 = vunpack.c.h.b16 %v1293
    %v1387 = vunpack.c.l.b16 %v1294
    %v1388 = vunpack.c.h.b16 %v1294
    %v1389 = vunpack.c.l.b16 %v1295
    %v1390 = vunpack.c.h.b16 %v1295
    %v1391 = vunpack.c.l.b16 %v1296
    %v1392 = vunpack.c.h.b16 %v1296
    %v1393 = vpack.c.b16 %v1333, %v1329
    %v1394 = vpack.c.b16 %v1334, %v1330
    %v1395 = vpack.c.b16 %v1335, %v1331
    %v1396 = vpack.c.b16 %v1336, %v1332
    %v1397 = vpack.c.b16 %v1341, %v1337
    %v1398 = vpack.c.b16 %v1342, %v1338
    %v1399 = vpack.c.b16 %v1343, %v1339
    %v1400 = vpack.c.b16 %v1344, %v1340
    %v1401 = vpack.c.b16 %v1349, %v1345
    %v1402 = vpack.c.b16 %v1350, %v1346
    %v1403 = vpack.c.b16 %v1351, %v1347
    %v1404 = vpack.c.b16 %v1352, %v1348
    %v1405 = vpack.c.b16 %v1357, %v1353
    %v1406 = vpack.c.b16 %v1358, %v1354
    %v1407 = vpack.c.b16 %v1359, %v1355
    %v1408 = vpack.c.b16 %v1360, %v1356
    %v1409 = vpack.c.b16 %v1365, %v1361
    %v1410 = vpack.c.b16 %v1366, %v1362
    %v1411 = vpack.c.b16 %v1367, %v1363
    %v1412 = vpack.c.b16 %v1368, %v1364
    %v1413 = vpack.c.b16 %v1373, %v1369
    %v1414 = vpack.c.b16 %v1374, %v1370
    %v1415 = vpack.c.b16 %v1375, %v1371
    %v1416 = vpack.c.b16 %v1376, %v1372
    %v1417 = vpack.c.b16 %v1381, %v1377
    %v1418 = vpack.c.b16 %v1382, %v1378
    %v1419 = vpack.c.b16 %v1383, %v1379
    %v1420 = vpack.c.b16 %v1384, %v1380
    %v1421 = vpack.c.b16 %v1389, %v1385
    %v1422 = vpack.c.b16 %v1390, %v1386
    %v1423 = vpack.c.b16 %v1391, %v1387
    %v1424 = vpack.c.b16 %v1392, %v1388
    %1457 = vmatprep.subr.bf16.mxu0 %v1394
    %1458 = vmatpush1.bf16.msra.mxu0 %v1393
    %1459 = vmatprep.subr.bf16.mxu0 %v1398
    %1460 = vmatpush1.bf16.msra.mxu0 %v1397
    %1461 = vmatprep.subr.bf16.mxu0 %v1402
    %1462 = vmatpush1.bf16.msra.mxu0 %v1401
    %1463 = vmatprep.subr.bf16.mxu0 %v1406
    %1464 = vmatpush1.bf16.msra.mxu0 %v1405
    %1465 = vmatprep.subr.bf16.mxu0 %v1410
    %1466 = vmatpush1.bf16.msra.mxu0 %v1409
    %1467 = vmatprep.subr.bf16.mxu0 %v1414
    %1468 = vmatpush1.bf16.msra.mxu0 %v1413
    %1469 = vmatprep.subr.bf16.mxu0 %v1418
    %1470 = vmatpush1.bf16.msra.mxu0 %v1417
    %1471 = vmatprep.subr.bf16.mxu0 %v1422
    %1472 = vmatpush1.bf16.msra.mxu0 %v1421
    %1473 = vmatprep.subr.bf16.mxu0 0
    %1474 = vmatpush1.bf16.msra.mxu0 0
    %1475 = vmatprep.subr.bf16.mxu0 0
    %1476 = vmatpush1.bf16.msra.mxu0 0
    %1477 = vmatprep.subr.bf16.mxu0 0
    %1478 = vmatpush1.bf16.msra.mxu0 0
    %1479 = vmatprep.subr.bf16.mxu0 0
    %1480 = vmatpush1.bf16.msra.mxu0 0
    %1481 = vmatprep.subr.bf16.mxu0 0
    %1482 = vmatpush1.bf16.msra.mxu0 0
    %1483 = vmatprep.subr.bf16.mxu0 0
    %1484 = vmatpush1.bf16.msra.mxu0 0
    %1485 = vmatprep.subr.bf16.mxu0 0
    %1486 = vmatpush1.bf16.msra.mxu0 0
    %1487 = vmatprep.subr.bf16.mxu0 0
    %1488 = vmatpush1.bf16.msra.mxu0 0
    %1489 = vmatprep.mubr.bf16.mxu0 0
    %1490 = vmatmul.mubr.bf16.gmra.mrb[0].mxu0 %v1264
    %v1491 = vpop.f32.mrb[0].mxu0
    %v1492 = vadd.f32 0.0, %v1491
    %v1493 = vpop.f32.mrb[0].mxu0
    %v1494 = vadd.f32 0.0, %v1493
    %v1495 = vpop.f32.mrb[0].mxu0
    %v1496 = vpop.f32.mrb[0].mxu0
    %1497 = vdwg.mxu0
    %1498 = vmatprep.subr.bf16.mxu0 %v1396
    %1499 = vmatpush1.bf16.msra.mxu0 %v1395
    %1500 = vmatprep.subr.bf16.mxu0 %v1400
    %1501 = vmatpush1.bf16.msra.mxu0 %v1399
    %1502 = vmatprep.subr.bf16.mxu0 %v1404
    %1503 = vmatpush1.bf16.msra.mxu0 %v1403
    %1504 = vmatprep.subr.bf16.mxu0 %v1408
    %1505 = vmatpush1.bf16.msra.mxu0 %v1407
    %1506 = vmatprep.subr.bf16.mxu0 %v1412
    %1507 = vmatpush1.bf16.msra.mxu0 %v1411
    %1508 = vmatprep.subr.bf16.mxu0 %v1416
    %1509 = vmatpush1.bf16.msra.mxu0 %v1415
    %1510 = vmatprep.subr.bf16.mxu0 %v1420
    %1511 = vmatpush1.bf16.msra.mxu0 %v1419
    %1512 = vmatprep.subr.bf16.mxu0 %v1424
    %1513 = vmatpush1.bf16.msra.mxu0 %v1423
    %1514 = vmatprep.subr.bf16.mxu0 0
    %1515 = vmatpush1.bf16.msra.mxu0 0
    %1516 = vmatprep.subr.bf16.mxu0 0
    %1517 = vmatpush1.bf16.msra.mxu0 0
    %1518 = vmatprep.subr.bf16.mxu0 0
    %1519 = vmatpush1.bf16.msra.mxu0 0
    %1520 = vmatprep.subr.bf16.mxu0 0
    %1521 = vmatpush1.bf16.msra.mxu0 0
    %1522 = vmatprep.subr.bf16.mxu0 0
    %1523 = vmatpush1.bf16.msra.mxu0 0
    %1524 = vmatprep.subr.bf16.mxu0 0
    %1525 = vmatpush1.bf16.msra.mxu0 0
    %1526 = vmatprep.subr.bf16.mxu0 0
    %1527 = vmatpush1.bf16.msra.mxu0 0
    %1528 = vmatprep.subr.bf16.mxu0 0
    %1529 = vmatpush1.bf16.msra.mxu0 0
    %1530 = vmatprep.mubr.bf16.mxu0 0
    %1531 = vmatmul.mubr.bf16.gmra.mrb[0].mxu0 %v1264
    %v1532 = vpop.f32.mrb[0].mxu0
    %v1533 = vadd.f32 0.0, %v1532
    %v1534 = vpop.f32.mrb[0].mxu0
    %v1535 = vadd.f32 0.0, %v1534
    %v1536 = vpop.f32.mrb[0].mxu0
    %v1537 = vpop.f32.mrb[0].mxu0
    %1538 = vdwg.mxu0
    %v1543 = vrot.slane %v1492, 4
    %v1544 = vrot.slane %v1494, 4
    %v1545 = vrot.slane %v1533, 4
    %v1546 = vrot.slane %v1535, 4
    %v1551 = vadd.f32 %v1260, %v1543
    %v1552 = vadd.f32 %v1261, %v1544
    %v1553 = vadd.f32 %v1262, %v1545
    %v1554 = vadd.f32 %v1263, %v1546
    %v1555 = vxor.u32 %v1551, 2147483648
    %v1556 = vxor.u32 %v1552, 2147483648
    %v1557 = vmul.f32 %v1555, 1.442695
    %v1558 = vpow.pop %v1557
    %v1559 = vmul.f32 %v1556, 1.442695
    %v1560 = vpow.pop %v1559
    %v1561 = vadd.f32 %v1558, 1.0
    %v1562 = vadd.f32 %v1560, 1.0
    %v1563 = vrcp.pop %v1561
    %v1564 = vmul.f32 1.0, %v1563
    %v1565 = vrcp.pop %v1562
    %v1566 = vmul.f32 1.0, %v1565
    %v1567 = vtanh.pop %v1553
    %v1568 = vxor.u32 %v1554, 2147483648
    %v1569 = vmul.f32 %v1568, 1.442695
    %v1570 = vpow.pop %v1569
    %v1571 = vadd.f32 %v1570, 1.0
    %v1572 = vrcp.pop %v1571
    %v1573 = vmul.f32 1.0, %v1572
    %v1575 = vrot.slane %v1256, 4
    %v1577 = vmul.f32 %v1566, %v1575
    %v1578 = vmul.f32 %v1564, %v1567
    %v1579 = vadd.f32 %v1577, %v1578
    %v1580 = vtanh.pop %v1579
    %v1581 = vmul.f32 %v1573, %v1580
    %1582 = vst [vmem:[#allocation3 + $0x8] sm:$0xf0] %v1581
    %v1583 = vld [vmem:[#allocation2 + $0x40] sm:$0xf]
    %v1584 = vld [vmem:[#allocation2 + $0x48] sm:$0xf]
    %v1585 = vld [vmem:[#allocation2 + $0x50] sm:$0xf]
    %v1586 = vld [vmem:[#allocation2 + $0x58] sm:$0xf]
    %v1587 = vpack.c.bf16 %v1581, %v1581
    %v1588 = vld [vmem:[#allocation9] sm:$0xff]
    %v1589 = vld [vmem:[#allocation9 + $0x8] sm:$0xff]
    %v1590 = vld [vmem:[#allocation9 + $0x10] sm:$0xff]
    %v1591 = vld [vmem:[#allocation9 + $0x18] sm:$0xff]
    %v1592 = vld [vmem:[#allocation9 + $0x20] sm:$0xff]
    %v1593 = vld [vmem:[#allocation9 + $0x28] sm:$0xff]
    %v1594 = vld [vmem:[#allocation9 + $0x30] sm:$0xff]
    %v1595 = vld [vmem:[#allocation9 + $0x38] sm:$0xff]
    %v1596 = vld [vmem:[#allocation9 + $0x40] sm:$0xff]
    %v1597 = vld [vmem:[#allocation9 + $0x48] sm:$0xff]
    %v1598 = vld [vmem:[#allocation9 + $0x50] sm:$0xff]
    %v1599 = vld [vmem:[#allocation9 + $0x58] sm:$0xff]
    %v1600 = vld [vmem:[#allocation9 + $0x60] sm:$0xff]
    %v1601 = vld [vmem:[#allocation9 + $0x68] sm:$0xff]
    %v1602 = vld [vmem:[#allocation9 + $0x70] sm:$0xff]
    %v1603 = vld [vmem:[#allocation9 + $0x78] sm:$0xff]
    %v1604 = vld [vmem:[#allocation9 + $0x80] sm:$0xff]
    %v1605 = vld [vmem:[#allocation9 + $0x88] sm:$0xff]
    %v1606 = vld [vmem:[#allocation9 + $0x90] sm:$0xff]
    %v1607 = vld [vmem:[#allocation9 + $0x98] sm:$0xff]
    %v1608 = vld [vmem:[#allocation9 + $0xa0] sm:$0xff]
    %v1609 = vld [vmem:[#allocation9 + $0xa8] sm:$0xff]
    %v1610 = vld [vmem:[#allocation9 + $0xb0] sm:$0xff]
    %v1611 = vld [vmem:[#allocation9 + $0xb8] sm:$0xff]
    %v1612 = vld [vmem:[#allocation9 + $0xc0] sm:$0xff]
    %v1613 = vld [vmem:[#allocation9 + $0xc8] sm:$0xff]
    %v1614 = vld [vmem:[#allocation9 + $0xd0] sm:$0xff]
    %v1615 = vld [vmem:[#allocation9 + $0xd8] sm:$0xff]
    %v1616 = vld [vmem:[#allocation9 + $0xe0] sm:$0xff]
    %v1617 = vld [vmem:[#allocation9 + $0xe8] sm:$0xff]
    %v1618 = vld [vmem:[#allocation9 + $0xf0] sm:$0xff]
    %v1619 = vld [vmem:[#allocation9 + $0xf8] sm:$0xff]
    %v1621 = vrot.slane %v1587, 2
    %v1655 = vunpack.c.l.b16 %v1588
    %v1656 = vunpack.c.h.b16 %v1588
    %v1657 = vunpack.c.l.b16 %v1589
    %v1658 = vunpack.c.h.b16 %v1589
    %v1659 = vunpack.c.l.b16 %v1590
    %v1660 = vunpack.c.h.b16 %v1590
    %v1661 = vunpack.c.l.b16 %v1591
    %v1662 = vunpack.c.h.b16 %v1591
    %v1663 = vunpack.c.l.b16 %v1592
    %v1664 = vunpack.c.h.b16 %v1592
    %v1665 = vunpack.c.l.b16 %v1593
    %v1666 = vunpack.c.h.b16 %v1593
    %v1667 = vunpack.c.l.b16 %v1594
    %v1668 = vunpack.c.h.b16 %v1594
    %v1669 = vunpack.c.l.b16 %v1595
    %v1670 = vunpack.c.h.b16 %v1595
    %v1671 = vunpack.c.l.b16 %v1596
    %v1672 = vunpack.c.h.b16 %v1596
    %v1673 = vunpack.c.l.b16 %v1597
    %v1674 = vunpack.c.h.b16 %v1597
    %v1675 = vunpack.c.l.b16 %v1598
    %v1676 = vunpack.c.h.b16 %v1598
    %v1677 = vunpack.c.l.b16 %v1599
    %v1678 = vunpack.c.h.b16 %v1599
    %v1679 = vunpack.c.l.b16 %v1600
    %v1680 = vunpack.c.h.b16 %v1600
    %v1681 = vunpack.c.l.b16 %v1601
    %v1682 = vunpack.c.h.b16 %v1601
    %v1683 = vunpack.c.l.b16 %v1602
    %v1684 = vunpack.c.h.b16 %v1602
    %v1685 = vunpack.c.l.b16 %v1603
    %v1686 = vunpack.c.h.b16 %v1603
    %v1687 = vunpack.c.l.b16 %v1604
    %v1688 = vunpack.c.h.b16 %v1604
    %v1689 = vunpack.c.l.b16 %v1605
    %v1690 = vunpack.c.h.b16 %v1605
    %v1691 = vunpack.c.l.b16 %v1606
    %v1692 = vunpack.c.h.b16 %v1606
    %v1693 = vunpack.c.l.b16 %v1607
    %v1694 = vunpack.c.h.b16 %v1607
    %v1695 = vunpack.c.l.b16 %v1608
    %v1696 = vunpack.c.h.b16 %v1608
    %v1697 = vunpack.c.l.b16 %v1609
    %v1698 = vunpack.c.h.b16 %v1609
    %v1699 = vunpack.c.l.b16 %v1610
    %v1700 = vunpack.c.h.b16 %v1610
    %v1701 = vunpack.c.l.b16 %v1611
    %v1702 = vunpack.c.h.b16 %v1611
    %v1703 = vunpack.c.l.b16 %v1612
    %v1704 = vunpack.c.h.b16 %v1612
    %v1705 = vunpack.c.l.b16 %v1613
    %v1706 = vunpack.c.h.b16 %v1613
    %v1707 = vunpack.c.l.b16 %v1614
    %v1708 = vunpack.c.h.b16 %v1614
    %v1709 = vunpack.c.l.b16 %v1615
    %v1710 = vunpack.c.h.b16 %v1615
    %v1711 = vunpack.c.l.b16 %v1616
    %v1712 = vunpack.c.h.b16 %v1616
    %v1713 = vunpack.c.l.b16 %v1617
    %v1714 = vunpack.c.h.b16 %v1617
    %v1715 = vunpack.c.l.b16 %v1618
    %v1716 = vunpack.c.h.b16 %v1618
    %v1717 = vunpack.c.l.b16 %v1619
    %v1718 = vunpack.c.h.b16 %v1619
    %v1719 = vpack.c.b16 %v1659, %v1655
    %v1720 = vpack.c.b16 %v1660, %v1656
    %v1721 = vpack.c.b16 %v1661, %v1657
    %v1722 = vpack.c.b16 %v1662, %v1658
    %v1723 = vpack.c.b16 %v1667, %v1663
    %v1724 = vpack.c.b16 %v1668, %v1664
    %v1725 = vpack.c.b16 %v1669, %v1665
    %v1726 = vpack.c.b16 %v1670, %v1666
    %v1727 = vpack.c.b16 %v1675, %v1671
    %v1728 = vpack.c.b16 %v1676, %v1672
    %v1729 = vpack.c.b16 %v1677, %v1673
    %v1730 = vpack.c.b16 %v1678, %v1674
    %v1731 = vpack.c.b16 %v1683, %v1679
    %v1732 = vpack.c.b16 %v1684, %v1680
    %v1733 = vpack.c.b16 %v1685, %v1681
    %v1734 = vpack.c.b16 %v1686, %v1682
    %v1735 = vpack.c.b16 %v1691, %v1687
    %v1736 = vpack.c.b16 %v1692, %v1688
    %v1737 = vpack.c.b16 %v1693, %v1689
    %v1738 = vpack.c.b16 %v1694, %v1690
    %v1739 = vpack.c.b16 %v1699, %v1695
    %v1740 = vpack.c.b16 %v1700, %v1696
    %v1741 = vpack.c.b16 %v1701, %v1697
    %v1742 = vpack.c.b16 %v1702, %v1698
    %v1743 = vpack.c.b16 %v1707, %v1703
    %v1744 = vpack.c.b16 %v1708, %v1704
    %v1745 = vpack.c.b16 %v1709, %v1705
    %v1746 = vpack.c.b16 %v1710, %v1706
    %v1747 = vpack.c.b16 %v1715, %v1711
    %v1748 = vpack.c.b16 %v1716, %v1712
    %v1749 = vpack.c.b16 %v1717, %v1713
    %v1750 = vpack.c.b16 %v1718, %v1714
    %1783 = vmatprep.subr.bf16.mxu0 %v1720
    %1784 = vmatpush1.bf16.msra.mxu0 %v1719
    %1785 = vmatprep.subr.bf16.mxu0 %v1724
    %1786 = vmatpush1.bf16.msra.mxu0 %v1723
    %1787 = vmatprep.subr.bf16.mxu0 %v1728
    %1788 = vmatpush1.bf16.msra.mxu0 %v1727
    %1789 = vmatprep.subr.bf16.mxu0 %v1732
    %1790 = vmatpush1.bf16.msra.mxu0 %v1731
    %1791 = vmatprep.subr.bf16.mxu0 %v1736
    %1792 = vmatpush1.bf16.msra.mxu0 %v1735
    %1793 = vmatprep.subr.bf16.mxu0 %v1740
    %1794 = vmatpush1.bf16.msra.mxu0 %v1739
    %1795 = vmatprep.subr.bf16.mxu0 %v1744
    %1796 = vmatpush1.bf16.msra.mxu0 %v1743
    %1797 = vmatprep.subr.bf16.mxu0 %v1748
    %1798 = vmatpush1.bf16.msra.mxu0 %v1747
    %1799 = vmatprep.subr.bf16.mxu0 0
    %1800 = vmatpush1.bf16.msra.mxu0 0
    %1801 = vmatprep.subr.bf16.mxu0 0
    %1802 = vmatpush1.bf16.msra.mxu0 0
    %1803 = vmatprep.subr.bf16.mxu0 0
    %1804 = vmatpush1.bf16.msra.mxu0 0
    %1805 = vmatprep.subr.bf16.mxu0 0
    %1806 = vmatpush1.bf16.msra.mxu0 0
    %1807 = vmatprep.subr.bf16.mxu0 0
    %1808 = vmatpush1.bf16.msra.mxu0 0
    %1809 = vmatprep.subr.bf16.mxu0 0
    %1810 = vmatpush1.bf16.msra.mxu0 0
    %1811 = vmatprep.subr.bf16.mxu0 0
    %1812 = vmatpush1.bf16.msra.mxu0 0
    %1813 = vmatprep.subr.bf16.mxu0 0
    %1814 = vmatpush1.bf16.msra.mxu0 0
    %1815 = vmatprep.mubr.bf16.mxu0 0
    %1816 = vmatmul.mubr.bf16.gmra.mrb[0].mxu0 %v1621
    %v1817 = vpop.f32.mrb[0].mxu0
    %v1818 = vadd.f32 0.0, %v1817
    %v1819 = vpop.f32.mrb[0].mxu0
    %v1820 = vadd.f32 0.0, %v1819
    %v1821 = vpop.f32.mrb[0].mxu0
    %v1822 = vpop.f32.mrb[0].mxu0
    %1823 = vdwg.mxu0
    %1824 = vmatprep.subr.bf16.mxu0 %v1722
    %1825 = vmatpush1.bf16.msra.mxu0 %v1721
    %1826 = vmatprep.subr.bf16.mxu0 %v1726
    %1827 = vmatpush1.bf16.msra.mxu0 %v1725
    %1828 = vmatprep.subr.bf16.mxu0 %v1730
    %1829 = vmatpush1.bf16.msra.mxu0 %v1729
    %1830 = vmatprep.subr.bf16.mxu0 %v1734
    %1831 = vmatpush1.bf16.msra.mxu0 %v1733
    %1832 = vmatprep.subr.bf16.mxu0 %v1738
    %1833 = vmatpush1.bf16.msra.mxu0 %v1737
    %1834 = vmatprep.subr.bf16.mxu0 %v1742
    %1835 = vmatpush1.bf16.msra.mxu0 %v1741
    %1836 = vmatprep.subr.bf16.mxu0 %v1746
    %1837 = vmatpush1.bf16.msra.mxu0 %v1745
    %1838 = vmatprep.subr.bf16.mxu0 %v1750
    %1839 = vmatpush1.bf16.msra.mxu0 %v1749
    %1840 = vmatprep.subr.bf16.mxu0 0
    %1841 = vmatpush1.bf16.msra.mxu0 0
    %1842 = vmatprep.subr.bf16.mxu0 0
    %1843 = vmatpush1.bf16.msra.mxu0 0
    %1844 = vmatprep.subr.bf16.mxu0 0
    %1845 = vmatpush1.bf16.msra.mxu0 0
    %1846 = vmatprep.subr.bf16.mxu0 0
    %1847 = vmatpush1.bf16.msra.mxu0 0
    %1848 = vmatprep.subr.bf16.mxu0 0
    %1849 = vmatpush1.bf16.msra.mxu0 0
    %1850 = vmatprep.subr.bf16.mxu0 0
    %1851 = vmatpush1.bf16.msra.mxu0 0
    %1852 = vmatprep.subr.bf16.mxu0 0
    %1853 = vmatpush1.bf16.msra.mxu0 0
    %1854 = vmatprep.subr.bf16.mxu0 0
    %1855 = vmatpush1.bf16.msra.mxu0 0
    %1856 = vmatprep.mubr.bf16.mxu0 0
    %1857 = vmatmul.mubr.bf16.gmra.mrb[0].mxu0 %v1621
    %v1858 = vpop.f32.mrb[0].mxu0
    %v1859 = vadd.f32 0.0, %v1858
    %v1860 = vpop.f32.mrb[0].mxu0
    %v1861 = vadd.f32 0.0, %v1860
    %v1862 = vpop.f32.mrb[0].mxu0
    %v1863 = vpop.f32.mrb[0].mxu0
    %1864 = vdwg.mxu0
    %v1865 = vadd.f32 %v1583, %v1818
    %v1866 = vadd.f32 %v1584, %v1820
    %v1867 = vadd.f32 %v1585, %v1859
    %v1868 = vadd.f32 %v1586, %v1861
    %v1869 = vxor.u32 %v1865, 2147483648
    %v1870 = vxor.u32 %v1866, 2147483648
    %v1871 = vmul.f32 %v1869, 1.442695
    %v1872 = vpow.pop %v1871
    %v1873 = vmul.f32 %v1870, 1.442695
    %v1874 = vpow.pop %v1873
    %v1875 = vadd.f32 %v1872, 1.0
    %v1876 = vadd.f32 %v1874, 1.0
    %v1877 = vrcp.pop %v1875
    %v1878 = vmul.f32 1.0, %v1877
    %v1879 = vrcp.pop %v1876
    %v1880 = vmul.f32 1.0, %v1879
    %v1881 = vtanh.pop %v1867
    %v1882 = vxor.u32 %v1868, 2147483648
    %v1883 = vmul.f32 %v1882, 1.442695
    %v1884 = vpow.pop %v1883
    %v1885 = vadd.f32 %v1884, 1.0
    %v1886 = vrcp.pop %v1885
    %v1887 = vmul.f32 1.0, %v1886
    %v1889 = vrot.slane %v1579, 4
    %v1891 = vmul.f32 %v1880, %v1889
    %v1892 = vmul.f32 %v1878, %v1881
    %v1893 = vadd.f32 %v1891, %v1892
    %v1894 = vtanh.pop %v1893
    %v1895 = vmul.f32 %v1887, %v1894
    %1896 = vst [vmem:[#allocation3 + $0x10] sm:$0xf] %v1895
    %v1897 = vld [vmem:[#allocation2 + $0x40] sm:$0xf0]
    %v1898 = vld [vmem:[#allocation2 + $0x48] sm:$0xf0]
    %v1899 = vld [vmem:[#allocation2 + $0x50] sm:$0xf0]
    %v1900 = vld [vmem:[#allocation2 + $0x58] sm:$0xf0]
    %v1901 = vpack.c.bf16 %v1895, %v1895
    %v1902 = vld [vmem:[#allocation9] sm:$0xff]
    %v1903 = vld [vmem:[#allocation9 + $0x8] sm:$0xff]
    %v1904 = vld [vmem:[#allocation9 + $0x10] sm:$0xff]
    %v1905 = vld [vmem:[#allocation9 + $0x18] sm:$0xff]
    %v1906 = vld [vmem:[#allocation9 + $0x20] sm:$0xff]
    %v1907 = vld [vmem:[#allocation9 + $0x28] sm:$0xff]
    %v1908 = vld [vmem:[#allocation9 + $0x30] sm:$0xff]
    %v1909 = vld [vmem:[#allocation9 + $0x38] sm:$0xff]
    %v1910 = vld [vmem:[#allocation9 + $0x40] sm:$0xff]
    %v1911 = vld [vmem:[#allocation9 + $0x48] sm:$0xff]
    %v1912 = vld [vmem:[#allocation9 + $0x50] sm:$0xff]
    %v1913 = vld [vmem:[#allocation9 + $0x58] sm:$0xff]
    %v1914 = vld [vmem:[#allocation9 + $0x60] sm:$0xff]
    %v1915 = vld [vmem:[#allocation9 + $0x68] sm:$0xff]
    %v1916 = vld [vmem:[#allocation9 + $0x70] sm:$0xff]
    %v1917 = vld [vmem:[#allocation9 + $0x78] sm:$0xff]
    %v1918 = vld [vmem:[#allocation9 + $0x80] sm:$0xff]
    %v1919 = vld [vmem:[#allocation9 + $0x88] sm:$0xff]
    %v1920 = vld [vmem:[#allocation9 + $0x90] sm:$0xff]
    %v1921 = vld [vmem:[#allocation9 + $0x98] sm:$0xff]
    %v1922 = vld [vmem:[#allocation9 + $0xa0] sm:$0xff]
    %v1923 = vld [vmem:[#allocation9 + $0xa8] sm:$0xff]
    %v1924 = vld [vmem:[#allocation9 + $0xb0] sm:$0xff]
    %v1925 = vld [vmem:[#allocation9 + $0xb8] sm:$0xff]
    %v1926 = vld [vmem:[#allocation9 + $0xc0] sm:$0xff]
    %v1927 = vld [vmem:[#allocation9 + $0xc8] sm:$0xff]
    %v1928 = vld [vmem:[#allocation9 + $0xd0] sm:$0xff]
    %v1929 = vld [vmem:[#allocation9 + $0xd8] sm:$0xff]
    %v1930 = vld [vmem:[#allocation9 + $0xe0] sm:$0xff]
    %v1931 = vld [vmem:[#allocation9 + $0xe8] sm:$0xff]
    %v1932 = vld [vmem:[#allocation9 + $0xf0] sm:$0xff]
    %v1933 = vld [vmem:[#allocation9 + $0xf8] sm:$0xff]
    %v1966 = vunpack.c.l.b16 %v1902
    %v1967 = vunpack.c.h.b16 %v1902
    %v1968 = vunpack.c.l.b16 %v1903
    %v1969 = vunpack.c.h.b16 %v1903
    %v1970 = vunpack.c.l.b16 %v1904
    %v1971 = vunpack.c.h.b16 %v1904
    %v1972 = vunpack.c.l.b16 %v1905
    %v1973 = vunpack.c.h.b16 %v1905
    %v1974 = vunpack.c.l.b16 %v1906
    %v1975 = vunpack.c.h.b16 %v1906
    %v1976 = vunpack.c.l.b16 %v1907
    %v1977 = vunpack.c.h.b16 %v1907
    %v1978 = vunpack.c.l.b16 %v1908
    %v1979 = vunpack.c.h.b16 %v1908
    %v1980 = vunpack.c.l.b16 %v1909
    %v1981 = vunpack.c.h.b16 %v1909
    %v1982 = vunpack.c.l.b16 %v1910
    %v1983 = vunpack.c.h.b16 %v1910
    %v1984 = vunpack.c.l.b16 %v1911
    %v1985 = vunpack.c.h.b16 %v1911
    %v1986 = vunpack.c.l.b16 %v1912
    %v1987 = vunpack.c.h.b16 %v1912
    %v1988 = vunpack.c.l.b16 %v1913
    %v1989 = vunpack.c.h.b16 %v1913
    %v1990 = vunpack.c.l.b16 %v1914
    %v1991 = vunpack.c.h.b16 %v1914
    %v1992 = vunpack.c.l.b16 %v1915
    %v1993 = vunpack.c.h.b16 %v1915
    %v1994 = vunpack.c.l.b16 %v1916
    %v1995 = vunpack.c.h.b16 %v1916
    %v1996 = vunpack.c.l.b16 %v1917
    %v1997 = vunpack.c.h.b16 %v1917
    %v1998 = vunpack.c.l.b16 %v1918
    %v1999 = vunpack.c.h.b16 %v1918
    %v2000 = vunpack.c.l.b16 %v1919
    %v2001 = vunpack.c.h.b16 %v1919
    %v2002 = vunpack.c.l.b16 %v1920
    %v2003 = vunpack.c.h.b16 %v1920
    %v2004 = vunpack.c.l.b16 %v1921
    %v2005 = vunpack.c.h.b16 %v1921
    %v2006 = vunpack.c.l.b16 %v1922
    %v2007 = vunpack.c.h.b16 %v1922
    %v2008 = vunpack.c.l.b16 %v1923
    %v2009 = vunpack.c.h.b16 %v1923
    %v2010 = vunpack.c.l.b16 %v1924
    %v2011 = vunpack.c.h.b16 %v1924
    %v2012 = vunpack.c.l.b16 %v1925
    %v2013 = vunpack.c.h.b16 %v1925
    %v2014 = vunpack.c.l.b16 %v1926
    %v2015 = vunpack.c.h.b16 %v1926
    %v2016 = vunpack.c.l.b16 %v1927
    %v2017 = vunpack.c.h.b16 %v1927
    %v2018 = vunpack.c.l.b16 %v1928
    %v2019 = vunpack.c.h.b16 %v1928
    %v2020 = vunpack.c.l.b16 %v1929
    %v2021 = vunpack.c.h.b16 %v1929
    %v2022 = vunpack.c.l.b16 %v1930
    %v2023 = vunpack.c.h.b16 %v1930
    %v2024 = vunpack.c.l.b16 %v1931
    %v2025 = vunpack.c.h.b16 %v1931
    %v2026 = vunpack.c.l.b16 %v1932
    %v2027 = vunpack.c.h.b16 %v1932
    %v2028 = vunpack.c.l.b16 %v1933
    %v2029 = vunpack.c.h.b16 %v1933
    %v2030 = vpack.c.b16 %v1970, %v1966
    %v2031 = vpack.c.b16 %v1971, %v1967
    %v2032 = vpack.c.b16 %v1972, %v1968
    %v2033 = vpack.c.b16 %v1973, %v1969
    %v2034 = vpack.c.b16 %v1978, %v1974
    %v2035 = vpack.c.b16 %v1979, %v1975
    %v2036 = vpack.c.b16 %v1980, %v1976
    %v2037 = vpack.c.b16 %v1981, %v1977
    %v2038 = vpack.c.b16 %v1986, %v1982
    %v2039 = vpack.c.b16 %v1987, %v1983
    %v2040 = vpack.c.b16 %v1988, %v1984
    %v2041 = vpack.c.b16 %v1989, %v1985
    %v2042 = vpack.c.b16 %v1994, %v1990
    %v2043 = vpack.c.b16 %v1995, %v1991
    %v2044 = vpack.c.b16 %v1996, %v1992
    %v2045 = vpack.c.b16 %v1997, %v1993
    %v2046 = vpack.c.b16 %v2002, %v1998
    %v2047 = vpack.c.b16 %v2003, %v1999
    %v2048 = vpack.c.b16 %v2004, %v2000
    %v2049 = vpack.c.b16 %v2005, %v2001
    %v2050 = vpack.c.b16 %v2010, %v2006
    %v2051 = vpack.c.b16 %v2011, %v2007
    %v2052 = vpack.c.b16 %v2012, %v2008
    %v2053 = vpack.c.b16 %v2013, %v2009
    %v2054 = vpack.c.b16 %v2018, %v2014
    %v2055 = vpack.c.b16 %v2019, %v2015
    %v2056 = vpack.c.b16 %v2020, %v2016
    %v2057 = vpack.c.b16 %v2021, %v2017
    %v2058 = vpack.c.b16 %v2026, %v2022
    %v2059 = vpack.c.b16 %v2027, %v2023
    %v2060 = vpack.c.b16 %v2028, %v2024
    %v2061 = vpack.c.b16 %v2029, %v2025
    %2094 = vmatprep.subr.bf16.mxu0 %v2031
    %2095 = vmatpush1.bf16.msra.mxu0 %v2030
    %2096 = vmatprep.subr.bf16.mxu0 %v2035
    %2097 = vmatpush1.bf16.msra.mxu0 %v2034
    %2098 = vmatprep.subr.bf16.mxu0 %v2039
    %2099 = vmatpush1.bf16.msra.mxu0 %v2038
    %2100 = vmatprep.subr.bf16.mxu0 %v2043
    %2101 = vmatpush1.bf16.msra.mxu0 %v2042
    %2102 = vmatprep.subr.bf16.mxu0 %v2047
    %2103 = vmatpush1.bf16.msra.mxu0 %v2046
    %2104 = vmatprep.subr.bf16.mxu0 %v2051
    %2105 = vmatpush1.bf16.msra.mxu0 %v2050
    %2106 = vmatprep.subr.bf16.mxu0 %v2055
    %2107 = vmatpush1.bf16.msra.mxu0 %v2054
    %2108 = vmatprep.subr.bf16.mxu0 %v2059
    %2109 = vmatpush1.bf16.msra.mxu0 %v2058
    %2110 = vmatprep.subr.bf16.mxu0 0
    %2111 = vmatpush1.bf16.msra.mxu0 0
    %2112 = vmatprep.subr.bf16.mxu0 0
    %2113 = vmatpush1.bf16.msra.mxu0 0
    %2114 = vmatprep.subr.bf16.mxu0 0
    %2115 = vmatpush1.bf16.msra.mxu0 0
    %2116 = vmatprep.subr.bf16.mxu0 0
    %2117 = vmatpush1.bf16.msra.mxu0 0
    %2118 = vmatprep.subr.bf16.mxu0 0
    %2119 = vmatpush1.bf16.msra.mxu0 0
    %2120 = vmatprep.subr.bf16.mxu0 0
    %2121 = vmatpush1.bf16.msra.mxu0 0
    %2122 = vmatprep.subr.bf16.mxu0 0
    %2123 = vmatpush1.bf16.msra.mxu0 0
    %2124 = vmatprep.subr.bf16.mxu0 0
    %2125 = vmatpush1.bf16.msra.mxu0 0
    %2126 = vmatprep.mubr.bf16.mxu0 0
    %2127 = vmatmul.mubr.bf16.gmra.mrb[0].mxu0 %v1901
    %v2128 = vpop.f32.mrb[0].mxu0
    %v2129 = vadd.f32 0.0, %v2128
    %v2130 = vpop.f32.mrb[0].mxu0
    %v2131 = vadd.f32 0.0, %v2130
    %v2132 = vpop.f32.mrb[0].mxu0
    %v2133 = vpop.f32.mrb[0].mxu0
    %2134 = vdwg.mxu0
    %2135 = vmatprep.subr.bf16.mxu0 %v2033
    %2136 = vmatpush1.bf16.msra.mxu0 %v2032
    %2137 = vmatprep.subr.bf16.mxu0 %v2037
    %2138 = vmatpush1.bf16.msra.mxu0 %v2036
    %2139 = vmatprep.subr.bf16.mxu0 %v2041
    %2140 = vmatpush1.bf16.msra.mxu0 %v2040
    %2141 = vmatprep.subr.bf16.mxu0 %v2045
    %2142 = vmatpush1.bf16.msra.mxu0 %v2044
    %2143 = vmatprep.subr.bf16.mxu0 %v2049
    %2144 = vmatpush1.bf16.msra.mxu0 %v2048
    %2145 = vmatprep.subr.bf16.mxu0 %v2053
    %2146 = vmatpush1.bf16.msra.mxu0 %v2052
    %2147 = vmatprep.subr.bf16.mxu0 %v2057
    %2148 = vmatpush1.bf16.msra.mxu0 %v2056
    %2149 = vmatprep.subr.bf16.mxu0 %v2061
    %2150 = vmatpush1.bf16.msra.mxu0 %v2060
    %2151 = vmatprep.subr.bf16.mxu0 0
    %2152 = vmatpush1.bf16.msra.mxu0 0
    %2153 = vmatprep.subr.bf16.mxu0 0
    %2154 = vmatpush1.bf16.msra.mxu0 0
    %2155 = vmatprep.subr.bf16.mxu0 0
    %2156 = vmatpush1.bf16.msra.mxu0 0
    %2157 = vmatprep.subr.bf16.mxu0 0
    %2158 = vmatpush1.bf16.msra.mxu0 0
    %2159 = vmatprep.subr.bf16.mxu0 0
    %2160 = vmatpush1.bf16.msra.mxu0 0
    %2161 = vmatprep.subr.bf16.mxu0 0
    %2162 = vmatpush1.bf16.msra.mxu0 0
    %2163 = vmatprep.subr.bf16.mxu0 0
    %2164 = vmatpush1.bf16.msra.mxu0 0
    %2165 = vmatprep.subr.bf16.mxu0 0
    %2166 = vmatpush1.bf16.msra.mxu0 0
    %2167 = vmatprep.mubr.bf16.mxu0 0
    %2168 = vmatmul.mubr.bf16.gmra.mrb[0].mxu0 %v1901
    %v2169 = vpop.f32.mrb[0].mxu0
    %v2170 = vadd.f32 0.0, %v2169
    %v2171 = vpop.f32.mrb[0].mxu0
    %v2172 = vadd.f32 0.0, %v2171
    %v2173 = vpop.f32.mrb[0].mxu0
    %v2174 = vpop.f32.mrb[0].mxu0
    %2175 = vdwg.mxu0
    %v2180 = vrot.slane %v2129, 4
    %v2181 = vrot.slane %v2131, 4
    %v2182 = vrot.slane %v2170, 4
    %v2183 = vrot.slane %v2172, 4
    %v2188 = vadd.f32 %v1897, %v2180
    %v2189 = vadd.f32 %v1898, %v2181
    %v2190 = vadd.f32 %v1899, %v2182
    %v2191 = vadd.f32 %v1900, %v2183
    %v2192 = vxor.u32 %v2188, 2147483648
    %v2193 = vxor.u32 %v2189, 2147483648
    %v2194 = vmul.f32 %v2192, 1.442695
    %v2195 = vpow.pop %v2194
    %v2196 = vmul.f32 %v2193, 1.442695
    %v2197 = vpow.pop %v2196
    %v2198 = vadd.f32 %v2195, 1.0
    %v2199 = vadd.f32 %v2197, 1.0
    %v2200 = vrcp.pop %v2198
    %v2201 = vmul.f32 1.0, %v2200
    %v2202 = vrcp.pop %v2199
    %v2203 = vmul.f32 1.0, %v2202
    %v2204 = vtanh.pop %v2190
    %v2205 = vxor.u32 %v2191, 2147483648
    %v2206 = vmul.f32 %v2205, 1.442695
    %v2207 = vpow.pop %v2206
    %v2208 = vadd.f32 %v2207, 1.0
    %v2209 = vrcp.pop %v2208
    %v2210 = vmul.f32 1.0, %v2209
    %v2212 = vrot.slane %v1893, 4
    %v2214 = vmul.f32 %v2203, %v2212
    %v2215 = vmul.f32 %v2201, %v2204
    %v2216 = vadd.f32 %v2214, %v2215
    %v2217 = vtanh.pop %v2216
    %v2218 = vmul.f32 %v2210, %v2217
    %2219 = vst [vmem:[#allocation3 + $0x10] sm:$0xf0] %v2218
    %v2220 = vld [vmem:[#allocation2 + $0x60] sm:$0xf]
    %v2221 = vld [vmem:[#allocation2 + $0x68] sm:$0xf]
    %v2222 = vld [vmem:[#allocation2 + $0x70] sm:$0xf]
    %v2223 = vld [vmem:[#allocation2 + $0x78] sm:$0xf]
    %v2224 = vpack.c.bf16 %v2218, %v2218
    %v2225 = vld [vmem:[#allocation9] sm:$0xff]
    %v2226 = vld [vmem:[#allocation9 + $0x8] sm:$0xff]
    %v2227 = vld [vmem:[#allocation9 + $0x10] sm:$0xff]
    %v2228 = vld [vmem:[#allocation9 + $0x18] sm:$0xff]
    %v2229 = vld [vmem:[#allocation9 + $0x20] sm:$0xff]
    %v2230 = vld [vmem:[#allocation9 + $0x28] sm:$0xff]
    %v2231 = vld [vmem:[#allocation9 + $0x30] sm:$0xff]
    %v2232 = vld [vmem:[#allocation9 + $0x38] sm:$0xff]
    %v2233 = vld [vmem:[#allocation9 + $0x40] sm:$0xff]
    %v2234 = vld [vmem:[#allocation9 + $0x48] sm:$0xff]
    %v2235 = vld [vmem:[#allocation9 + $0x50] sm:$0xff]
    %v2236 = vld [vmem:[#allocation9 + $0x58] sm:$0xff]
    %v2237 = vld [vmem:[#allocation9 + $0x60] sm:$0xff]
    %v2238 = vld [vmem:[#allocation9 + $0x68] sm:$0xff]
    %v2239 = vld [vmem:[#allocation9 + $0x70] sm:$0xff]
    %v2240 = vld [vmem:[#allocation9 + $0x78] sm:$0xff]
    %v2241 = vld [vmem:[#allocation9 + $0x80] sm:$0xff]
    %v2242 = vld [vmem:[#allocation9 + $0x88] sm:$0xff]
    %v2243 = vld [vmem:[#allocation9 + $0x90] sm:$0xff]
    %v2244 = vld [vmem:[#allocation9 + $0x98] sm:$0xff]
    %v2245 = vld [vmem:[#allocation9 + $0xa0] sm:$0xff]
    %v2246 = vld [vmem:[#allocation9 + $0xa8] sm:$0xff]
    %v2247 = vld [vmem:[#allocation9 + $0xb0] sm:$0xff]
    %v2248 = vld [vmem:[#allocation9 + $0xb8] sm:$0xff]
    %v2249 = vld [vmem:[#allocation9 + $0xc0] sm:$0xff]
    %v2250 = vld [vmem:[#allocation9 + $0xc8] sm:$0xff]
    %v2251 = vld [vmem:[#allocation9 + $0xd0] sm:$0xff]
    %v2252 = vld [vmem:[#allocation9 + $0xd8] sm:$0xff]
    %v2253 = vld [vmem:[#allocation9 + $0xe0] sm:$0xff]
    %v2254 = vld [vmem:[#allocation9 + $0xe8] sm:$0xff]
    %v2255 = vld [vmem:[#allocation9 + $0xf0] sm:$0xff]
    %v2256 = vld [vmem:[#allocation9 + $0xf8] sm:$0xff]
    %v2258 = vrot.slane %v2224, 2
    %v2292 = vunpack.c.l.b16 %v2225
    %v2293 = vunpack.c.h.b16 %v2225
    %v2294 = vunpack.c.l.b16 %v2226
    %v2295 = vunpack.c.h.b16 %v2226
    %v2296 = vunpack.c.l.b16 %v2227
    %v2297 = vunpack.c.h.b16 %v2227
    %v2298 = vunpack.c.l.b16 %v2228
    %v2299 = vunpack.c.h.b16 %v2228
    %v2300 = vunpack.c.l.b16 %v2229
    %v2301 = vunpack.c.h.b16 %v2229
    %v2302 = vunpack.c.l.b16 %v2230
    %v2303 = vunpack.c.h.b16 %v2230
    %v2304 = vunpack.c.l.b16 %v2231
    %v2305 = vunpack.c.h.b16 %v2231
    %v2306 = vunpack.c.l.b16 %v2232
    %v2307 = vunpack.c.h.b16 %v2232
    %v2308 = vunpack.c.l.b16 %v2233
    %v2309 = vunpack.c.h.b16 %v2233
    %v2310 = vunpack.c.l.b16 %v2234
    %v2311 = vunpack.c.h.b16 %v2234
    %v2312 = vunpack.c.l.b16 %v2235
    %v2313 = vunpack.c.h.b16 %v2235
    %v2314 = vunpack.c.l.b16 %v2236
    %v2315 = vunpack.c.h.b16 %v2236
    %v2316 = vunpack.c.l.b16 %v2237
    %v2317 = vunpack.c.h.b16 %v2237
    %v2318 = vunpack.c.l.b16 %v2238
    %v2319 = vunpack.c.h.b16 %v2238
    %v2320 = vunpack.c.l.b16 %v2239
    %v2321 = vunpack.c.h.b16 %v2239
    %v2322 = vunpack.c.l.b16 %v2240
    %v2323 = vunpack.c.h.b16 %v2240
    %v2324 = vunpack.c.l.b16 %v2241
    %v2325 = vunpack.c.h.b16 %v2241
    %v2326 = vunpack.c.l.b16 %v2242
    %v2327 = vunpack.c.h.b16 %v2242
    %v2328 = vunpack.c.l.b16 %v2243
    %v2329 = vunpack.c.h.b16 %v2243
    %v2330 = vunpack.c.l.b16 %v2244
    %v2331 = vunpack.c.h.b16 %v2244
    %v2332 = vunpack.c.l.b16 %v2245
    %v2333 = vunpack.c.h.b16 %v2245
    %v2334 = vunpack.c.l.b16 %v2246
    %v2335 = vunpack.c.h.b16 %v2246
    %v2336 = vunpack.c.l.b16 %v2247
    %v2337 = vunpack.c.h.b16 %v2247
    %v2338 = vunpack.c.l.b16 %v2248
    %v2339 = vunpack.c.h.b16 %v2248
    %v2340 = vunpack.c.l.b16 %v2249
    %v2341 = vunpack.c.h.b16 %v2249
    %v2342 = vunpack.c.l.b16 %v2250
    %v2343 = vunpack.c.h.b16 %v2250
    %v2344 = vunpack.c.l.b16 %v2251
    %v2345 = vunpack.c.h.b16 %v2251
    %v2346 = vunpack.c.l.b16 %v2252
    %v2347 = vunpack.c.h.b16 %v2252
    %v2348 = vunpack.c.l.b16 %v2253
    %v2349 = vunpack.c.h.b16 %v2253
    %v2350 = vunpack.c.l.b16 %v2254
    %v2351 = vunpack.c.h.b16 %v2254
    %v2352 = vunpack.c.l.b16 %v2255
    %v2353 = vunpack.c.h.b16 %v2255
    %v2354 = vunpack.c.l.b16 %v2256
    %v2355 = vunpack.c.h.b16 %v2256
    %v2356 = vpack.c.b16 %v2296, %v2292
    %v2357 = vpack.c.b16 %v2297, %v2293
    %v2358 = vpack.c.b16 %v2298, %v2294
    %v2359 = vpack.c.b16 %v2299, %v2295
    %v2360 = vpack.c.b16 %v2304, %v2300
    %v2361 = vpack.c.b16 %v2305, %v2301
    %v2362 = vpack.c.b16 %v2306, %v2302
    %v2363 = vpack.c.b16 %v2307, %v2303
    %v2364 = vpack.c.b16 %v2312, %v2308
    %v2365 = vpack.c.b16 %v2313, %v2309
    %v2366 = vpack.c.b16 %v2314, %v2310
    %v2367 = vpack.c.b16 %v2315, %v2311
    %v2368 = vpack.c.b16 %v2320, %v2316
    %v2369 = vpack.c.b16 %v2321, %v2317
    %v2370 = vpack.c.b16 %v2322, %v2318
    %v2371 = vpack.c.b16 %v2323, %v2319
    %v2372 = vpack.c.b16 %v2328, %v2324
    %v2373 = vpack.c.b16 %v2329, %v2325
    %v2374 = vpack.c.b16 %v2330, %v2326
    %v2375 = vpack.c.b16 %v2331, %v2327
    %v2376 = vpack.c.b16 %v2336, %v2332
    %v2377 = vpack.c.b16 %v2337, %v2333
    %v2378 = vpack.c.b16 %v2338, %v2334
    %v2379 = vpack.c.b16 %v2339, %v2335
    %v2380 = vpack.c.b16 %v2344, %v2340
    %v2381 = vpack.c.b16 %v2345, %v2341
    %v2382 = vpack.c.b16 %v2346, %v2342
    %v2383 = vpack.c.b16 %v2347, %v2343
    %v2384 = vpack.c.b16 %v2352, %v2348
    %v2385 = vpack.c.b16 %v2353, %v2349
    %v2386 = vpack.c.b16 %v2354, %v2350
    %v2387 = vpack.c.b16 %v2355, %v2351
    %2420 = vmatprep.subr.bf16.mxu0 %v2357
    %2421 = vmatpush1.bf16.msra.mxu0 %v2356
    %2422 = vmatprep.subr.bf16.mxu0 %v2361
    %2423 = vmatpush1.bf16.msra.mxu0 %v2360
    %2424 = vmatprep.subr.bf16.mxu0 %v2365
    %2425 = vmatpush1.bf16.msra.mxu0 %v2364
    %2426 = vmatprep.subr.bf16.mxu0 %v2369
    %2427 = vmatpush1.bf16.msra.mxu0 %v2368
    %2428 = vmatprep.subr.bf16.mxu0 %v2373
    %2429 = vmatpush1.bf16.msra.mxu0 %v2372
    %2430 = vmatprep.subr.bf16.mxu0 %v2377
    %2431 = vmatpush1.bf16.msra.mxu0 %v2376
    %2432 = vmatprep.subr.bf16.mxu0 %v2381
    %2433 = vmatpush1.bf16.msra.mxu0 %v2380
    %2434 = vmatprep.subr.bf16.mxu0 %v2385
    %2435 = vmatpush1.bf16.msra.mxu0 %v2384
    %2436 = vmatprep.subr.bf16.mxu0 0
    %2437 = vmatpush1.bf16.msra.mxu0 0
    %2438 = vmatprep.subr.bf16.mxu0 0
    %2439 = vmatpush1.bf16.msra.mxu0 0
    %2440 = vmatprep.subr.bf16.mxu0 0
    %2441 = vmatpush1.bf16.msra.mxu0 0
    %2442 = vmatprep.subr.bf16.mxu0 0
    %2443 = vmatpush1.bf16.msra.mxu0 0
    %2444 = vmatprep.subr.bf16.mxu0 0
    %2445 = vmatpush1.bf16.msra.mxu0 0
    %2446 = vmatprep.subr.bf16.mxu0 0
    %2447 = vmatpush1.bf16.msra.mxu0 0
    %2448 = vmatprep.subr.bf16.mxu0 0
    %2449 = vmatpush1.bf16.msra.mxu0 0
    %2450 = vmatprep.subr.bf16.mxu0 0
    %2451 = vmatpush1.bf16.msra.mxu0 0
    %2452 = vmatprep.mubr.bf16.mxu0 0
    %2453 = vmatmul.mubr.bf16.gmra.mrb[0].mxu0 %v2258
    %v2454 = vpop.f32.mrb[0].mxu0
    %v2455 = vadd.f32 0.0, %v2454
    %v2456 = vpop.f32.mrb[0].mxu0
    %v2457 = vadd.f32 0.0, %v2456
    %v2458 = vpop.f32.mrb[0].mxu0
    %v2459 = vpop.f32.mrb[0].mxu0
    %2460 = vdwg.mxu0
    %2461 = vmatprep.subr.bf16.mxu0 %v2359
    %2462 = vmatpush1.bf16.msra.mxu0 %v2358
    %2463 = vmatprep.subr.bf16.mxu0 %v2363
    %2464 = vmatpush1.bf16.msra.mxu0 %v2362
    %2465 = vmatprep.subr.bf16.mxu0 %v2367
    %2466 = vmatpush1.bf16.msra.mxu0 %v2366
    %2467 = vmatprep.subr.bf16.mxu0 %v2371
    %2468 = vmatpush1.bf16.msra.mxu0 %v2370
    %2469 = vmatprep.subr.bf16.mxu0 %v2375
    %2470 = vmatpush1.bf16.msra.mxu0 %v2374
    %2471 = vmatprep.subr.bf16.mxu0 %v2379
    %2472 = vmatpush1.bf16.msra.mxu0 %v2378
    %2473 = vmatprep.subr.bf16.mxu0 %v2383
    %2474 = vmatpush1.bf16.msra.mxu0 %v2382
    %2475 = vmatprep.subr.bf16.mxu0 %v2387
    %2476 = vmatpush1.bf16.msra.mxu0 %v2386
    %2477 = vmatprep.subr.bf16.mxu0 0
    %2478 = vmatpush1.bf16.msra.mxu0 0
    %2479 = vmatprep.subr.bf16.mxu0 0
    %2480 = vmatpush1.bf16.msra.mxu0 0
    %2481 = vmatprep.subr.bf16.mxu0 0
    %2482 = vmatpush1.bf16.msra.mxu0 0
    %2483 = vmatprep.subr.bf16.mxu0 0
    %2484 = vmatpush1.bf16.msra.mxu0 0
    %2485 = vmatprep.subr.bf16.mxu0 0
    %2486 = vmatpush1.bf16.msra.mxu0 0
    %2487 = vmatprep.subr.bf16.mxu0 0
    %2488 = vmatpush1.bf16.msra.mxu0 0
    %2489 = vmatprep.subr.bf16.mxu0 0
    %2490 = vmatpush1.bf16.msra.mxu0 0
    %2491 = vmatprep.subr.bf16.mxu0 0
    %2492 = vmatpush1.bf16.msra.mxu0 0
    %2493 = vmatprep.mubr.bf16.mxu0 0
    %2494 = vmatmul.mubr.bf16.gmra.mrb[0].mxu0 %v2258
    %v2495 = vpop.f32.mrb[0].mxu0
    %v2496 = vadd.f32 0.0, %v2495
    %v2497 = vpop.f32.mrb[0].mxu0
    %v2498 = vadd.f32 0.0, %v2497
    %v2499 = vpop.f32.mrb[0].mxu0
    %v2500 = vpop.f32.mrb[0].mxu0
    %2501 = vdwg.mxu0
    %v2502 = vadd.f32 %v2220, %v2455
    %v2503 = vadd.f32 %v2221, %v2457
    %v2504 = vadd.f32 %v2222, %v2496
    %v2505 = vadd.f32 %v2223, %v2498
    %v2506 = vxor.u32 %v2502, 2147483648
    %v2507 = vxor.u32 %v2503, 2147483648
    %v2508 = vmul.f32 %v2506, 1.442695
    %v2509 = vpow.pop %v2508
    %v2510 = vmul.f32 %v2507, 1.442695
    %v2511 = vpow.pop %v2510
    %v2512 = vadd.f32 %v2509, 1.0
    %v2513 = vadd.f32 %v2511, 1.0
    %v2514 = vrcp.pop %v2512
    %v2515 = vmul.f32 1.0, %v2514
    %v2516 = vrcp.pop %v2513
    %v2517 = vmul.f32 1.0, %v2516
    %v2518 = vtanh.pop %v2504
    %v2519 = vxor.u32 %v2505, 2147483648
    %v2520 = vmul.f32 %v2519, 1.442695
    %v2521 = vpow.pop %v2520
    %v2522 = vadd.f32 %v2521, 1.0
    %v2523 = vrcp.pop %v2522
    %v2524 = vmul.f32 1.0, %v2523
    %v2526 = vrot.slane %v2216, 4
    %v2528 = vmul.f32 %v2517, %v2526
    %v2529 = vmul.f32 %v2515, %v2518
    %v2530 = vadd.f32 %v2528, %v2529
    %v2531 = vtanh.pop %v2530
    %v2532 = vmul.f32 %v2524, %v2531
    %2533 = vst [vmem:[#allocation3 + $0x18] sm:$0xf] %v2532
    %v2534 = vld [vmem:[#allocation2 + $0x60] sm:$0xf0]
    %v2535 = vld [vmem:[#allocation2 + $0x68] sm:$0xf0]
    %v2536 = vld [vmem:[#allocation2 + $0x70] sm:$0xf0]
    %v2537 = vld [vmem:[#allocation2 + $0x78] sm:$0xf0]
    %v2538 = vpack.c.bf16 %v2532, %v2532
    %v2539 = vld [vmem:[#allocation9] sm:$0xff]
    %v2540 = vld [vmem:[#allocation9 + $0x8] sm:$0xff]
    %v2541 = vld [vmem:[#allocation9 + $0x10] sm:$0xff]
    %v2542 = vld [vmem:[#allocation9 + $0x18] sm:$0xff]
    %v2543 = vld [vmem:[#allocation9 + $0x20] sm:$0xff]
    %v2544 = vld [vmem:[#allocation9 + $0x28] sm:$0xff]
    %v2545 = vld [vmem:[#allocation9 + $0x30] sm:$0xff]
    %v2546 = vld [vmem:[#allocation9 + $0x38] sm:$0xff]
    %v2547 = vld [vmem:[#allocation9 + $0x40] sm:$0xff]
    %v2548 = vld [vmem:[#allocation9 + $0x48] sm:$0xff]
    %v2549 = vld [vmem:[#allocation9 + $0x50] sm:$0xff]
    %v2550 = vld [vmem:[#allocation9 + $0x58] sm:$0xff]
    %v2551 = vld [vmem:[#allocation9 + $0x60] sm:$0xff]
    %v2552 = vld [vmem:[#allocation9 + $0x68] sm:$0xff]
    %v2553 = vld [vmem:[#allocation9 + $0x70] sm:$0xff]
    %v2554 = vld [vmem:[#allocation9 + $0x78] sm:$0xff]
    %v2555 = vld [vmem:[#allocation9 + $0x80] sm:$0xff]
    %v2556 = vld [vmem:[#allocation9 + $0x88] sm:$0xff]
    %v2557 = vld [vmem:[#allocation9 + $0x90] sm:$0xff]
    %v2558 = vld [vmem:[#allocation9 + $0x98] sm:$0xff]
    %v2559 = vld [vmem:[#allocation9 + $0xa0] sm:$0xff]
    %v2560 = vld [vmem:[#allocation9 + $0xa8] sm:$0xff]
    %v2561 = vld [vmem:[#allocation9 + $0xb0] sm:$0xff]
    %v2562 = vld [vmem:[#allocation9 + $0xb8] sm:$0xff]
    %v2563 = vld [vmem:[#allocation9 + $0xc0] sm:$0xff]
    %v2564 = vld [vmem:[#allocation9 + $0xc8] sm:$0xff]
    %v2565 = vld [vmem:[#allocation9 + $0xd0] sm:$0xff]
    %v2566 = vld [vmem:[#allocation9 + $0xd8] sm:$0xff]
    %v2567 = vld [vmem:[#allocation9 + $0xe0] sm:$0xff]
    %v2568 = vld [vmem:[#allocation9 + $0xe8] sm:$0xff]
    %v2569 = vld [vmem:[#allocation9 + $0xf0] sm:$0xff]
    %v2570 = vld [vmem:[#allocation9 + $0xf8] sm:$0xff]
    %v2603 = vunpack.c.l.b16 %v2539
    %v2604 = vunpack.c.h.b16 %v2539
    %v2605 = vunpack.c.l.b16 %v2540
    %v2606 = vunpack.c.h.b16 %v2540
    %v2607 = vunpack.c.l.b16 %v2541
    %v2608 = vunpack.c.h.b16 %v2541
    %v2609 = vunpack.c.l.b16 %v2542
    %v2610 = vunpack.c.h.b16 %v2542
    %v2611 = vunpack.c.l.b16 %v2543
    %v2612 = vunpack.c.h.b16 %v2543
    %v2613 = vunpack.c.l.b16 %v2544
    %v2614 = vunpack.c.h.b16 %v2544
    %v2615 = vunpack.c.l.b16 %v2545
    %v2616 = vunpack.c.h.b16 %v2545
    %v2617 = vunpack.c.l.b16 %v2546
    %v2618 = vunpack.c.h.b16 %v2546
    %v2619 = vunpack.c.l.b16 %v2547
    %v2620 = vunpack.c.h.b16 %v2547
    %v2621 = vunpack.c.l.b16 %v2548
    %v2622 = vunpack.c.h.b16 %v2548
    %v2623 = vunpack.c.l.b16 %v2549
    %v2624 = vunpack.c.h.b16 %v2549
    %v2625 = vunpack.c.l.b16 %v2550
    %v2626 = vunpack.c.h.b16 %v2550
    %v2627 = vunpack.c.l.b16 %v2551
    %v2628 = vunpack.c.h.b16 %v2551
    %v2629 = vunpack.c.l.b16 %v2552
    %v2630 = vunpack.c.h.b16 %v2552
    %v2631 = vunpack.c.l.b16 %v2553
    %v2632 = vunpack.c.h.b16 %v2553
    %v2633 = vunpack.c.l.b16 %v2554
    %v2634 = vunpack.c.h.b16 %v2554
    %v2635 = vunpack.c.l.b16 %v2555
    %v2636 = vunpack.c.h.b16 %v2555
    %v2637 = vunpack.c.l.b16 %v2556
    %v2638 = vunpack.c.h.b16 %v2556
    %v2639 = vunpack.c.l.b16 %v2557
    %v2640 = vunpack.c.h.b16 %v2557
    %v2641 = vunpack.c.l.b16 %v2558
    %v2642 = vunpack.c.h.b16 %v2558
    %v2643 = vunpack.c.l.b16 %v2559
    %v2644 = vunpack.c.h.b16 %v2559
    %v2645 = vunpack.c.l.b16 %v2560
    %v2646 = vunpack.c.h.b16 %v2560
    %v2647 = vunpack.c.l.b16 %v2561
    %v2648 = vunpack.c.h.b16 %v2561
    %v2649 = vunpack.c.l.b16 %v2562
    %v2650 = vunpack.c.h.b16 %v2562
    %v2651 = vunpack.c.l.b16 %v2563
    %v2652 = vunpack.c.h.b16 %v2563
    %v2653 = vunpack.c.l.b16 %v2564
    %v2654 = vunpack.c.h.b16 %v2564
    %v2655 = vunpack.c.l.b16 %v2565
    %v2656 = vunpack.c.h.b16 %v2565
    %v2657 = vunpack.c.l.b16 %v2566
    %v2658 = vunpack.c.h.b16 %v2566
    %v2659 = vunpack.c.l.b16 %v2567
    %v2660 = vunpack.c.h.b16 %v2567
    %v2661 = vunpack.c.l.b16 %v2568
    %v2662 = vunpack.c.h.b16 %v2568
    %v2663 = vunpack.c.l.b16 %v2569
    %v2664 = vunpack.c.h.b16 %v2569
    %v2665 = vunpack.c.l.b16 %v2570
    %v2666 = vunpack.c.h.b16 %v2570
    %v2667 = vpack.c.b16 %v2607, %v2603
    %v2668 = vpack.c.b16 %v2608, %v2604
    %v2669 = vpack.c.b16 %v2609, %v2605
    %v2670 = vpack.c.b16 %v2610, %v2606
    %v2671 = vpack.c.b16 %v2615, %v2611
    %v2672 = vpack.c.b16 %v2616, %v2612
    %v2673 = vpack.c.b16 %v2617, %v2613
    %v2674 = vpack.c.b16 %v2618, %v2614
    %v2675 = vpack.c.b16 %v2623, %v2619
    %v2676 = vpack.c.b16 %v2624, %v2620
    %v2677 = vpack.c.b16 %v2625, %v2621
    %v2678 = vpack.c.b16 %v2626, %v2622
    %v2679 = vpack.c.b16 %v2631, %v2627
    %v2680 = vpack.c.b16 %v2632, %v2628
    %v2681 = vpack.c.b16 %v2633, %v2629
    %v2682 = vpack.c.b16 %v2634, %v2630
    %v2683 = vpack.c.b16 %v2639, %v2635
    %v2684 = vpack.c.b16 %v2640, %v2636
    %v2685 = vpack.c.b16 %v2641, %v2637
    %v2686 = vpack.c.b16 %v2642, %v2638
    %v2687 = vpack.c.b16 %v2647, %v2643
    %v2688 = vpack.c.b16 %v2648, %v2644
    %v2689 = vpack.c.b16 %v2649, %v2645
    %v2690 = vpack.c.b16 %v2650, %v2646
    %v2691 = vpack.c.b16 %v2655, %v2651
    %v2692 = vpack.c.b16 %v2656, %v2652
    %v2693 = vpack.c.b16 %v2657, %v2653
    %v2694 = vpack.c.b16 %v2658, %v2654
    %v2695 = vpack.c.b16 %v2663, %v2659
    %v2696 = vpack.c.b16 %v2664, %v2660
    %v2697 = vpack.c.b16 %v2665, %v2661
    %v2698 = vpack.c.b16 %v2666, %v2662
    %2731 = vmatprep.subr.bf16.mxu0 %v2668
    %2732 = vmatpush1.bf16.msra.mxu0 %v2667
    %2733 = vmatprep.subr.bf16.mxu0 %v2672
    %2734 = vmatpush1.bf16.msra.mxu0 %v2671
    %2735 = vmatprep.subr.bf16.mxu0 %v2676
    %2736 = vmatpush1.bf16.msra.mxu0 %v2675
    %2737 = vmatprep.subr.bf16.mxu0 %v2680
    %2738 = vmatpush1.bf16.msra.mxu0 %v2679
    %2739 = vmatprep.subr.bf16.mxu0 %v2684
    %2740 = vmatpush1.bf16.msra.mxu0 %v2683
    %2741 = vmatprep.subr.bf16.mxu0 %v2688
    %2742 = vmatpush1.bf16.msra.mxu0 %v2687
    %2743 = vmatprep.subr.bf16.mxu0 %v2692
    %2744 = vmatpush1.bf16.msra.mxu0 %v2691
    %2745 = vmatprep.subr.bf16.mxu0 %v2696
    %2746 = vmatpush1.bf16.msra.mxu0 %v2695
    %2747 = vmatprep.subr.bf16.mxu0 0
    %2748 = vmatpush1.bf16.msra.mxu0 0
    %2749 = vmatprep.subr.bf16.mxu0 0
    %2750 = vmatpush1.bf16.msra.mxu0 0
    %2751 = vmatprep.subr.bf16.mxu0 0
    %2752 = vmatpush1.bf16.msra.mxu0 0
    %2753 = vmatprep.subr.bf16.mxu0 0
    %2754 = vmatpush1.bf16.msra.mxu0 0
    %2755 = vmatprep.subr.bf16.mxu0 0
    %2756 = vmatpush1.bf16.msra.mxu0 0
    %2757 = vmatprep.subr.bf16.mxu0 0
    %2758 = vmatpush1.bf16.msra.mxu0 0
    %2759 = vmatprep.subr.bf16.mxu0 0
    %2760 = vmatpush1.bf16.msra.mxu0 0
    %2761 = vmatprep.subr.bf16.mxu0 0
    %2762 = vmatpush1.bf16.msra.mxu0 0
    %2763 = vmatprep.mubr.bf16.mxu0 0
    %2764 = vmatmul.mubr.bf16.gmra.mrb[0].mxu0 %v2538
    %v2765 = vpop.f32.mrb[0].mxu0
    %v2766 = vadd.f32 0.0, %v2765
    %v2767 = vpop.f32.mrb[0].mxu0
    %v2768 = vadd.f32 0.0, %v2767
    %v2769 = vpop.f32.mrb[0].mxu0
    %v2770 = vpop.f32.mrb[0].mxu0
    %2771 = vdwg.mxu0
    %2772 = vmatprep.subr.bf16.mxu0 %v2670
    %2773 = vmatpush1.bf16.msra.mxu0 %v2669
    %2774 = vmatprep.subr.bf16.mxu0 %v2674
    %2775 = vmatpush1.bf16.msra.mxu0 %v2673
    %2776 = vmatprep.subr.bf16.mxu0 %v2678
    %2777 = vmatpush1.bf16.msra.mxu0 %v2677
    %2778 = vmatprep.subr.bf16.mxu0 %v2682
    %2779 = vmatpush1.bf16.msra.mxu0 %v2681
    %2780 = vmatprep.subr.bf16.mxu0 %v2686
    %2781 = vmatpush1.bf16.msra.mxu0 %v2685
    %2782 = vmatprep.subr.bf16.mxu0 %v2690
    %2783 = vmatpush1.bf16.msra.mxu0 %v2689
    %2784 = vmatprep.subr.bf16.mxu0 %v2694
    %2785 = vmatpush1.bf16.msra.mxu0 %v2693
    %2786 = vmatprep.subr.bf16.mxu0 %v2698
    %2787 = vmatpush1.bf16.msra.mxu0 %v2697
    %2788 = vmatprep.subr.bf16.mxu0 0
    %2789 = vmatpush1.bf16.msra.mxu0 0
    %2790 = vmatprep.subr.bf16.mxu0 0
    %2791 = vmatpush1.bf16.msra.mxu0 0
    %2792 = vmatprep.subr.bf16.mxu0 0
    %2793 = vmatpush1.bf16.msra.mxu0 0
    %2794 = vmatprep.subr.bf16.mxu0 0
    %2795 = vmatpush1.bf16.msra.mxu0 0
    %2796 = vmatprep.subr.bf16.mxu0 0
    %2797 = vmatpush1.bf16.msra.mxu0 0
    %2798 = vmatprep.subr.bf16.mxu0 0
    %2799 = vmatpush1.bf16.msra.mxu0 0
    %2800 = vmatprep.subr.bf16.mxu0 0
    %2801 = vmatpush1.bf16.msra.mxu0 0
    %2802 = vmatprep.subr.bf16.mxu0 0
    %2803 = vmatpush1.bf16.msra.mxu0 0
    %2804 = vmatprep.mubr.bf16.mxu0 0
    %2805 = vmatmul.mubr.bf16.gmra.mrb[0].mxu0 %v2538
    %v2806 = vpop.f32.mrb[0].mxu0
    %v2807 = vadd.f32 0.0, %v2806
    %v2808 = vpop.f32.mrb[0].mxu0
    %v2809 = vadd.f32 0.0, %v2808
    %v2810 = vpop.f32.mrb[0].mxu0
    %v2811 = vpop.f32.mrb[0].mxu0
    %2812 = vdwg.mxu0
    %v2817 = vrot.slane %v2766, 4
    %v2818 = vrot.slane %v2768, 4
    %v2819 = vrot.slane %v2807, 4
    %v2820 = vrot.slane %v2809, 4
    %v2825 = vadd.f32 %v2534, %v2817
    %v2826 = vadd.f32 %v2535, %v2818
    %v2827 = vadd.f32 %v2536, %v2819
    %v2828 = vadd.f32 %v2537, %v2820
    %v2829 = vxor.u32 %v2825, 2147483648
    %v2830 = vxor.u32 %v2826, 2147483648
    %v2831 = vmul.f32 %v2829, 1.442695
    %v2832 = vpow.pop %v2831
    %v2833 = vmul.f32 %v2830, 1.442695
    %v2834 = vpow.pop %v2833
    %v2835 = vadd.f32 %v2832, 1.0
    %v2836 = vadd.f32 %v2834, 1.0
    %v2837 = vrcp.pop %v2835
    %v2838 = vmul.f32 1.0, %v2837
    %v2839 = vrcp.pop %v2836
    %v2840 = vmul.f32 1.0, %v2839
    %v2841 = vtanh.pop %v2827
    %v2842 = vxor.u32 %v2828, 2147483648
    %v2843 = vmul.f32 %v2842, 1.442695
    %v2844 = vpow.pop %v2843
    %v2845 = vadd.f32 %v2844, 1.0
    %v2846 = vrcp.pop %v2845
    %v2847 = vmul.f32 1.0, %v2846
    %v2849 = vrot.slane %v2530, 4
    %v2851 = vmul.f32 %v2840, %v2849
    %v2852 = vmul.f32 %v2838, %v2841
    %v2853 = vadd.f32 %v2851, %v2852
    %v2854 = vtanh.pop %v2853
    %v2855 = vmul.f32 %v2847, %v2854
    %2856 = vst [vmem:[#allocation3 + $0x18] sm:$0xf0] %v2855
    %2857 = vst [vmem:[#allocation13 - $0x4] sm:$0xf0] %v2855
    %2858 = vst [vmem:[#allocation15 - $0x4] sm:$0xf0] %v2853
    %v2859 = vld [vmem:[#allocation3] sm:$0xff]
    %v2860 = vld [vmem:[#allocation3 + $0x8] sm:$0xff]
    %v2861 = vld [vmem:[#allocation3 + $0x10] sm:$0xff]
    %v2862 = vld [vmem:[#allocation3 + $0x18] sm:$0xff]
    %v2863 = vpack.c.bf16 %v2860, %v2859
    %v2864 = vpack.c.bf16 %v2862, %v2861
    %v2865 = vld [vmem:[#allocation11] sm:$0xf]
    %v2866 = vld [vmem:[#allocation11 + $0x4] sm:$0xf]
    %v2867 = vld [vmem:[#allocation11 + $0x8] sm:$0xf]
    %v2868 = vld [vmem:[#allocation11 + $0xc] sm:$0xf]
    %v2869 = vld [vmem:[#allocation11 + $0x10] sm:$0xf]
    %v2870 = vld [vmem:[#allocation11 + $0x14] sm:$0xf]
    %v2871 = vld [vmem:[#allocation11 + $0x18] sm:$0xf]
    %v2872 = vld [vmem:[#allocation11 + $0x1c] sm:$0xf]
    %v2873 = vld [vmem:[#allocation11 + $0x20] sm:$0xf]
    %v2874 = vld [vmem:[#allocation11 + $0x24] sm:$0xf]
    %v2875 = vld [vmem:[#allocation11 + $0x28] sm:$0xf]
    %v2876 = vld [vmem:[#allocation11 + $0x2c] sm:$0xf]
    %v2877 = vld [vmem:[#allocation11 + $0x30] sm:$0xf]
    %v2878 = vld [vmem:[#allocation11 + $0x34] sm:$0xf]
    %v2879 = vld [vmem:[#allocation11 + $0x38] sm:$0xf]
    %v2880 = vld [vmem:[#allocation11 + $0x3c] sm:$0xf]
    %v2881 = vld [vmem:[%s4] sm:$0x1]
    %v2883 = vlaneseq
    %v2884 = vshrl.u32 %v2883, 7
    %v2885 = vsub.s32 0, %v2884
    %v2886 = vrot.slane %v2881, %v2885
    %v2904 = vunpack.c.l.b16 %v2865
    %v2905 = vunpack.c.l.b16 %v2866
    %v2906 = vunpack.c.l.b16 %v2867
    %v2907 = vunpack.c.l.b16 %v2868
    %v2908 = vunpack.c.l.b16 %v2869
    %v2909 = vunpack.c.l.b16 %v2870
    %v2910 = vunpack.c.l.b16 %v2871
    %v2911 = vunpack.c.l.b16 %v2872
    %v2912 = vunpack.c.l.b16 %v2873
    %v2913 = vunpack.c.l.b16 %v2874
    %v2914 = vunpack.c.l.b16 %v2875
    %v2915 = vunpack.c.l.b16 %v2876
    %v2916 = vunpack.c.l.b16 %v2877
    %v2917 = vunpack.c.l.b16 %v2878
    %v2918 = vunpack.c.l.b16 %v2879
    %v2919 = vunpack.c.l.b16 %v2880
    %v2920 = vpack.c.b16 %v2905, %v2904
    %v2921 = vpack.c.b16 %v2907, %v2906
    %v2922 = vpack.c.b16 %v2909, %v2908
    %v2923 = vpack.c.b16 %v2911, %v2910
    %v2924 = vpack.c.b16 %v2913, %v2912
    %v2925 = vpack.c.b16 %v2915, %v2914
    %v2926 = vpack.c.b16 %v2917, %v2916
    %v2927 = vpack.c.b16 %v2919, %v2918
    %2936 = vmatprep.subr.bf16.mxu0 0
    %2937 = vmatpush1.bf16.msra.mxu0 %v2920
    %2938 = vmatprep.subr.bf16.mxu0 0
    %2939 = vmatpush1.bf16.msra.mxu0 %v2921
    %2940 = vmatprep.subr.bf16.mxu0 0
    %2941 = vmatpush1.bf16.msra.mxu0 %v2922
    %2942 = vmatprep.subr.bf16.mxu0 0
    %2943 = vmatpush1.bf16.msra.mxu0 %v2923
    %2944 = vmatprep.subr.bf16.mxu0 0
    %2945 = vmatpush1.bf16.msra.mxu0 %v2924
    %2946 = vmatprep.subr.bf16.mxu0 0
    %2947 = vmatpush1.bf16.msra.mxu0 %v2925
    %2948 = vmatprep.subr.bf16.mxu0 0
    %2949 = vmatpush1.bf16.msra.mxu0 %v2926
    %2950 = vmatprep.subr.bf16.mxu0 0
    %2951 = vmatpush1.bf16.msra.mxu0 %v2927
    %2952 = vmatprep.subr.bf16.mxu0 0
    %2953 = vmatpush1.bf16.msra.mxu0 0
    %2954 = vmatprep.subr.bf16.mxu0 0
    %2955 = vmatpush1.bf16.msra.mxu0 0
    %2956 = vmatprep.subr.bf16.mxu0 0
    %2957 = vmatpush1.bf16.msra.mxu0 0
    %2958 = vmatprep.subr.bf16.mxu0 0
    %2959 = vmatpush1.bf16.msra.mxu0 0
    %2960 = vmatprep.subr.bf16.mxu0 0
    %2961 = vmatpush1.bf16.msra.mxu0 0
    %2962 = vmatprep.subr.bf16.mxu0 0
    %2963 = vmatpush1.bf16.msra.mxu0 0
    %2964 = vmatprep.subr.bf16.mxu0 0
    %2965 = vmatpush1.bf16.msra.mxu0 0
    %2966 = vmatprep.subr.bf16.mxu0 0
    %2967 = vmatpush1.bf16.msra.mxu0 0
    %2968 = vmatprep.mubr.bf16.mxu0 0
    %2969 = vmatmul.mubr.bf16.gmra.mrb[0].mxu0 %v2863
    %v2970 = vpop.f32.mrb[0].mxu0
    %v2971 = vadd.f32 %v2886, %v2970
    %v2972 = vpop.f32.mrb[0].mxu0
    %v2973 = vpop.f32.mrb[0].mxu0
    %v2974 = vadd.f32 %v2886, %v2973
    %v2975 = vpop.f32.mrb[0].mxu0
    %2976 = vmatprep.mubr.bf16.mxu0 0
    %2977 = vmatmul.mubr.bf16.gmra.mrb[0].mxu0 %v2864
    %v2978 = vpop.f32.mrb[0].mxu0
    %v2979 = vadd.f32 %v2886, %v2978
    %v2980 = vpop.f32.mrb[0].mxu0
    %v2981 = vpop.f32.mrb[0].mxu0
    %v2982 = vadd.f32 %v2886, %v2981
    %v2983 = vpop.f32.mrb[0].mxu0
    %2984 = vdwg.mxu0
    %2985 = vst [vmem:[#allocation12] sm:$0xff] %v2971
    %2986 = vst [vmem:[#allocation12 + $0x8] sm:$0xff] %v2974
    %2987 = vst [vmem:[#allocation12 + $0x10] sm:$0xff] %v2979
    %2988 = vst [vmem:[#allocation12 + $0x18] sm:$0xff] %v2982
    // Predicated region
    $region46: #{tpu_custom_call.1} parent=1 // pred_check
      _
    $region47: #{tpu_custom_call.1} parent=1 // pred_check_branch
      %2990 = sbr.rel (0) target = $region49
    $region48: #{tpu_custom_call.1} parent=1 // pred_region
      %s2992 = ssub.s32 512, 512
      %2993 = vsyncadd [#allocation6], %s2992
      %s2994 = sshll.u32 [#allocation12], 4
      %s2995 = int_to_ptr.vmem [resolvable:$true] %s2994
      %3000 = dma.vmem_to_hbm [thread:$0]  %s2995, 512, %s7, [#allocation6], 128, 128, 8
    $region49: #{tpu_custom_call.1} parent=1 // pred_fallthru
      _
    // Predicated region
    $region50: #{tpu_custom_call.1} parent=1 // pred_check
      _
    $region51: #{tpu_custom_call.1} parent=1 // pred_check_branch
      %3002 = sbr.rel (0) target = $region53
    $region52: #{tpu_custom_call.1} parent=1 // pred_region
      %s3004 = ssub.s32 64, 64
      %3005 = vsyncadd [#allocation14], %s3004
      %s3007 = sshll.u32 [#allocation13], 4
      %s3008 = int_to_ptr.vmem [resolvable:$true] %s3007
      %3010 = dma.vmem_to_hbm [thread:$0]  %s3008, 64, %s8, [#allocation14]
    $region53: #{tpu_custom_call.1} parent=1 // pred_fallthru
      _
    // Predicated region
    $region54: #{tpu_custom_call.1} parent=1 // pred_check
      _
    $region55: #{tpu_custom_call.1} parent=1 // pred_check_branch
      %3012 = sbr.rel (0) target = $region57
    $region56: #{tpu_custom_call.1} parent=1 // pred_region
      %s3014 = ssub.s32 64, 64
      %3015 = vsyncadd [#allocation14], %s3014
      %s3017 = sshll.u32 [#allocation15], 4
      %s3018 = int_to_ptr.vmem [resolvable:$true] %s3017
      %3020 = dma.vmem_to_hbm [thread:$0]  %s3018, 64, %s9, [#allocation14]
    $region57: #{tpu_custom_call.1} parent=1 // pred_fallthru
      _
    // Predicated region
    $region58: #{tpu_custom_call.1} parent=1 // pred_check
      _
    $region59: #{tpu_custom_call.1} parent=1 // pred_check_branch
      %3022 = sbr.rel (0) target = $region61
    $region60: #{tpu_custom_call.1} parent=1 // pred_region
      %3023 = dma.done [#allocation6], 512
    $region61: #{tpu_custom_call.1} parent=1 // pred_fallthru
      _
    // Predicated region
    $region62: #{tpu_custom_call.1} parent=1 // pred_check
      _
    $region63: #{tpu_custom_call.1} parent=1 // pred_check_branch
      %3025 = sbr.rel (0) target = $region65
    $region64: #{tpu_custom_call.1} parent=1 // pred_region
      %3026 = dma.done [#allocation14], 64
    $region65: #{tpu_custom_call.1} parent=1 // pred_fallthru
      _
    // Predicated region
    $region66: #{tpu_custom_call.1} parent=1 // pred_check
      _
    $region67: #{tpu_custom_call.1} parent=1 // pred_check_branch
      %3028 = sbr.rel (0) target = $region69
    $region68: #{tpu_custom_call.1} parent=1 // pred_region
      %3029 = dma.done [#allocation14], 64
    $region69: #{tpu_custom_call.1} parent=1 // pred_fallthru
      _
    %3030 = vsyncpa [#allocation5], 1
    %3031 = vsyncpa [#allocation10], 1
    %3032 = vsyncpa [#allocation6], 1
    %3033 = vsyncpa [#allocation14], 1
    %3034 = vsyncpa [#allocation7], 1

</llo_original>
